<compile_context>
chip_gen: v7x
topology: tpu7x:2x2x1
jax: 0.10.0
libtpu: 0.0.40
codegen_flags: <defaults>
</compile_context>

<pallas_src>
import math

import jax
import jax.numpy as jnp
from jax.experimental import pallas as pl
from jax.experimental.pallas import tpu as pltpu

_BN_EPS = 1e-5
_LANE = 128


def _round_up(x, m):
    return ((x + m - 1) // m) * m


# ------------------------------- XLA glue -----------------------------------

def _im2col_bf16(x_nhwc, k, pad, kkc_pad):
    """bf16 im2col: rows ordered (n, h, w); columns ordered (kh, kw, cin)."""
    x = x_nhwc.astype(jnp.bfloat16)                  # cast BEFORE concat/pad
    n, h, w, cin = x.shape
    xp = jnp.pad(x, ((0, 0), (pad, pad), (pad, pad), (0, 0)))
    cols = [xp[:, kh:kh + h, kw:kw + w, :] for kh in range(k) for kw in range(k)]
    patches = jnp.concatenate(cols, axis=-1).reshape(n * h * w, k * k * cin)
    kkc = k * k * cin
    if kkc_pad > kkc:
        patches = jnp.pad(patches, ((0, 0), (0, kkc_pad - kkc)))
    return patches


def _prep_conv_params(w_mat, gamma, beta, kkc_pad, cpad):
    kkc, cout = w_mat.shape
    w_p = jnp.pad(w_mat, ((0, kkc_pad - kkc), (0, cpad - cout))).astype(jnp.bfloat16)
    g_p = jnp.pad(gamma, (0, cpad - cout)).reshape(1, cpad)
    b_p = jnp.pad(beta, (0, cpad - cout)).reshape(1, cpad)
    return w_p, g_p, b_p


# --------------------------- fused block kernels -----------------------------

def conv_bn_relu_pool_block(x_nhwc, w_mat, gamma, beta, k, pad):
    """Fused: conv -> BN(train) -> ReLU -> {2x2 max pool, global avg pool}."""
    n, h, w, _ = x_nhwc.shape
    kkc, cout = w_mat.shape
    assert h % 2 == 0 and w % 2 == 0, "2x2 max pool needs even spatial dims"
    r = n * h * w
    kkc_pad = _round_up(kkc, _LANE)
    cpad = _round_up(cout, _LANE)

    patches = _im2col_bf16(x_nhwc, k, pad, kkc_pad)          # (r, kkc_pad) bf16
    w_p, g_p, b_p = _prep_conv_params(w_mat, gamma, beta, kkc_pad, cpad)

    def kernel(p_ref, w_ref, g_ref, b_ref, pooled_ref, gp_ref):
        # conv as one lane-dense MXU matmul (bf16 in, f32 accumulate)
        y = jnp.dot(p_ref[...], w_ref[...], preferred_element_type=jnp.float32)
        # training-mode BatchNorm statistics (two-pass, biased var, f32)
        mean = jnp.sum(y, axis=0, keepdims=True) * (1.0 / r)
        yc = y - mean
        var = jnp.sum(yc * yc, axis=0, keepdims=True) * (1.0 / r)
        scale = g_ref[...] * jax.lax.rsqrt(var + _BN_EPS)
        act = jnp.maximum(yc * scale + b_ref[...], 0.0)          # (r, cpad) f32
        # global average pool over the pre-pool activation
        gp_ref[...] = (jnp.sum(act.reshape(n, h * w, cpad), axis=1)
                       * (1.0 / (h * w)))
        # 2x2 max pool: rows are (n, h, w)-ordered -> two pair-wise maxes
        m1 = jnp.max(act.reshape(r // 2, 2, cpad), axis=1)              # w pairs
        m2 = jnp.max(m1.reshape(n * (h // 2), 2, w // 2, cpad), axis=1)  # h pairs
        pooled_ref[...] = m2.reshape(n, h // 2, w // 2, cpad)

    pooled_p, gp_p = pl.pallas_call(
        kernel,
        out_shape=(jax.ShapeDtypeStruct((n, h // 2, w // 2, cpad), jnp.float32),
                   jax.ShapeDtypeStruct((n, cpad), jnp.float32)),
        grid=(1,),
        in_specs=[pl.BlockSpec((r, kkc_pad), lambda i: (0, 0)),
                  pl.BlockSpec((kkc_pad, cpad), lambda i: (0, 0)),
                  pl.BlockSpec((1, cpad), lambda i: (0, 0)),
                  pl.BlockSpec((1, cpad), lambda i: (0, 0))],
        out_specs=(pl.BlockSpec((n, h // 2, w // 2, cpad),
                                lambda i: (0, 0, 0, 0)),
                   pl.BlockSpec((n, cpad), lambda i: (0, 0))),
        compiler_params=pltpu.CompilerParams(
            dimension_semantics=("arbitrary",)),
    )(patches, w_p, g_p, b_p)
    return pooled_p[..., :cout], gp_p[:, :cout]


def conv_bn_relu_gp_classifier(x_nhwc, w_mat, gamma, beta, k, pad, wc, bc):
    """Block 3 fused: conv -> BN -> ReLU -> global avg pool -> Linear.
    The 2x2 max-pool of block 3 is unused by the torch module and skipped."""
    n, h, w, _ = x_nhwc.shape
    kkc, cout = w_mat.shape
    nout = wc.shape[1]
    r = n * h * w
    kkc_pad = _round_up(kkc, _LANE)
    cpad = _round_up(cout, _LANE)
    npad = _round_up(nout, _LANE)

    patches = _im2col_bf16(x_nhwc, k, pad, kkc_pad)
    w_p, g_p, b_p = _prep_conv_params(w_mat, gamma, beta, kkc_pad, cpad)
    wc_p = jnp.pad(wc, ((0, cpad - cout), (0, npad - nout)))     # f32
    bc_p = jnp.pad(bc, ((0, 0), (0, npad - nout)))               # (1, npad) f32

    def kernel(p_ref, w_ref, g_ref, b_ref, wc_ref, bc_ref, gp_ref, out_ref):
        y = jnp.dot(p_ref[...], w_ref[...], preferred_element_type=jnp.float32)
        mean = jnp.sum(y, axis=0, keepdims=True) * (1.0 / r)
        yc = y - mean
        var = jnp.sum(yc * yc, axis=0, keepdims=True) * (1.0 / r)
        scale = g_ref[...] * jax.lax.rsqrt(var + _BN_EPS)
        act = jnp.maximum(yc * scale + b_ref[...], 0.0)          # (r, cpad)
        gp = jnp.sum(act.reshape(n, h * w, cpad), axis=1) * (1.0 / (h * w))
        gp_ref[...] = gp
        # classifier: one batched (n, cpad) x (cpad, npad) dot in f32
        out_ref[...] = (jnp.dot(gp, wc_ref[...],
                                preferred_element_type=jnp.float32)
                        + bc_ref[...])

    gp_p, out_p = pl.pallas_call(
        kernel,
        out_shape=(jax.ShapeDtypeStruct((n, cpad), jnp.float32),
                   jax.ShapeDtypeStruct((n, npad), jnp.float32)),
        grid=(1,),
        in_specs=[pl.BlockSpec((r, kkc_pad), lambda i: (0, 0)),
                  pl.BlockSpec((kkc_pad, cpad), lambda i: (0, 0)),
                  pl.BlockSpec((1, cpad), lambda i: (0, 0)),
                  pl.BlockSpec((1, cpad), lambda i: (0, 0)),
                  pl.BlockSpec((cpad, npad), lambda i: (0, 0)),
                  pl.BlockSpec((1, npad), lambda i: (0, 0))],
        out_specs=(pl.BlockSpec((n, cpad), lambda i: (0, 0)),
                   pl.BlockSpec((n, npad), lambda i: (0, 0))),
        compiler_params=pltpu.CompilerParams(
            dimension_semantics=("arbitrary",)),
    )(patches, w_p, g_p, b_p, wc_p, bc_p)
    return gp_p[:, :cout], out_p[:, :nout]


# --------------------------------- forward ----------------------------------

def gp_lenet_forward(params, x_nchw):
    x = jnp.transpose(x_nchw, (0, 2, 3, 1)).astype(jnp.float32)   # NCHW -> NHWC
    out1, gp1 = conv_bn_relu_pool_block(x, params["w1"], params["g1"],
                                        params["b1"], 5, 2)
    out2, gp2 = conv_bn_relu_pool_block(out1, params["w2"], params["g2"],
                                        params["b2"], 5, 2)
    gp3, out = conv_bn_relu_gp_classifier(out2, params["w3"], params["g3"],
                                          params["b3"], 3, 1,
                                          params["wc"], params["bc"])
    return out, gp1, gp2, gp3


# ------------------------------ parameter init ------------------------------

def init_params(key, in_channels, channels, num_outputs):
    ks = jax.random.split(key, 5)

    def conv_w(k, ksize, cin, cout):
        fan_in = cin * ksize * ksize
        bound = math.sqrt(6.0 / fan_in)          # kaiming_uniform_ (gain sqrt(2))
        w = jax.random.uniform(k, (ksize, ksize, cin, cout), jnp.float32,
                               -bound, bound)
        return w.reshape(ksize * ksize * cin, cout)   # row order (kh, kw, cin)

    c1, c2, c3 = channels, 2 * channels, 4 * channels
    params = {
        "w1": conv_w(ks[0], 5, in_channels, c1),
        "g1": jnp.ones((c1,), jnp.float32), "b1": jnp.zeros((c1,), jnp.float32),
        "w2": conv_w(ks[1], 5, c1, c2),
        "g2": jnp.ones((c2,), jnp.float32), "b2": jnp.zeros((c2,), jnp.float32),
        "w3": conv_w(ks[2], 3, c2, c3),
        "g3": jnp.ones((c3,), jnp.float32), "b3": jnp.zeros((c3,), jnp.float32),
    }
    bw = math.sqrt(6.0 / c3)                     # kaiming_uniform_ on Linear
    params["wc"] = jax.random.uniform(ks[3], (c3, num_outputs), jnp.float32,
                                      -bw, bw)
    bb = 1.0 / math.sqrt(c3)                     # default Linear bias init
    params["bc"] = jax.random.uniform(ks[4], (1, num_outputs), jnp.float32,
                                      -bb, bb)
    return params


# ---------------------------------- main -------------------------------------

if __name__ == "__main__":
    key = jax.random.PRNGKey(0)
    kp, kx = jax.random.split(key)

    batch, in_channels, spatial = 2, 4, 16          # args.channels=8, outputs=10
    channels, num_outputs = 8, 10

    params = init_params(kp, in_channels, channels, num_outputs)
    x = jax.random.normal(kx, (batch, in_channels, spatial, spatial),
                          jnp.float32)              # NCHW

    fwd = jax.jit(gp_lenet_forward)
    out, gp1, gp2, gp3 = fwd(params, x)
    jax.block_until_ready((out, gp1, gp2, gp3))

    assert out.shape == (batch, num_outputs)
    assert gp1.shape == (batch, channels)
    assert gp2.shape == (batch, 2 * channels)
    assert gp3.shape == (batch, 4 * channels)
    assert all(bool(jnp.all(jnp.isfinite(a))) for a in (out, gp1, gp2, gp3))

    print("KERNEL_OK")
</pallas_src>

<mosaic_0001>
module attributes {stable_mosaic.version = 11 : i64} {
  func.func @kernel(%arg0: i32, %arg1: memref<512x128xbf16, #tpu.memory_space<vmem>>, %arg2: memref<128x128xbf16, #tpu.memory_space<vmem>>, %arg3: memref<1x128xf32, #tpu.memory_space<vmem>>, %arg4: memref<1x128xf32, #tpu.memory_space<vmem>>, %arg5: memref<2x8x8x128xf32, #tpu.memory_space<vmem>>, %arg6: memref<2x128xf32, #tpu.memory_space<vmem>>) attributes {dimension_semantics = [#tpu.dimension_semantics<arbitrary>], iteration_bounds = array<i64: 1>, scalar_prefetch = 0 : i64, scratch_operands = 0 : i64, tpu.core_type = #tpu.core_type<tc>, window_params = [{pipeline_mode = #tpu.pipeline_mode<synchronous>, transform_indices = @transform_0, window_bounds = array<i64: 512, 128>}, {pipeline_mode = #tpu.pipeline_mode<synchronous>, transform_indices = @transform_1, window_bounds = array<i64: 128, 128>}, {pipeline_mode = #tpu.pipeline_mode<synchronous>, transform_indices = @transform_2, window_bounds = array<i64: 1, 128>}, {pipeline_mode = #tpu.pipeline_mode<synchronous>, transform_indices = @transform_3, window_bounds = array<i64: 1, 128>}, {pipeline_mode = #tpu.pipeline_mode<synchronous>, transform_indices = @transform_4, window_bounds = array<i64: 2, 8, 8, 128>}, {pipeline_mode = #tpu.pipeline_mode<synchronous>, transform_indices = @transform_5, window_bounds = array<i64: 2, 128>}]} {
    %c0 = arith.constant 0 : index
    %c0_0 = arith.constant 0 : index
    %0 = vector.load %arg1[%c0, %c0_0] : memref<512x128xbf16, #tpu.memory_space<vmem>>, vector<512x128xbf16>
    %c0_1 = arith.constant 0 : index
    %c0_2 = arith.constant 0 : index
    %1 = vector.load %arg2[%c0_1, %c0_2] : memref<128x128xbf16, #tpu.memory_space<vmem>>, vector<128x128xbf16>
    %cst = arith.constant dense<0.000000e+00> : vector<512x128xf32>
    %2 = tpu.matmul %0, %1, %cst {dimension_numbers = #tpu.dot_dimension_numbers<[1], [0], [0], [1], [0, 0, 1, 1], [], []>} : vector<512x128xbf16>, vector<128x128xbf16>, vector<512x128xf32> -> vector<512x128xf32>
    %cst_3 = arith.constant dense<0.000000e+00> : vector<128xf32>
    %3 = vector.multi_reduction <add>, %2, %cst_3 [0] : vector<512x128xf32> to vector<128xf32>
    %4 = vector.shape_cast %3 : vector<128xf32> to vector<1x128xf32>
    %cst_4 = arith.constant 0.001953125 : f32
    %5 = vector.broadcast %cst_4 : f32 to vector<1x128xf32>
    %6 = arith.mulf %4, %5 : vector<1x128xf32>
    %7 = vector.broadcast %6 : vector<1x128xf32> to vector<512x128xf32>
    %8 = arith.subf %2, %7 : vector<512x128xf32>
    %9 = arith.mulf %8, %8 : vector<512x128xf32>
    %cst_5 = arith.constant dense<0.000000e+00> : vector<128xf32>
    %10 = vector.multi_reduction <add>, %9, %cst_5 [0] : vector<512x128xf32> to vector<128xf32>
    %11 = vector.shape_cast %10 : vector<128xf32> to vector<1x128xf32>
    %cst_6 = arith.constant 0.001953125 : f32
    %12 = vector.broadcast %cst_6 : f32 to vector<1x128xf32>
    %13 = arith.mulf %11, %12 : vector<1x128xf32>
    %c0_7 = arith.constant 0 : index
    %c0_8 = arith.constant 0 : index
    %14 = vector.load %arg3[%c0_7, %c0_8] : memref<1x128xf32, #tpu.memory_space<vmem>>, vector<1x128xf32>
    %cst_9 = arith.constant 9.99999974E-6 : f32
    %15 = vector.broadcast %cst_9 : f32 to vector<1x128xf32>
    %16 = arith.addf %13, %15 : vector<1x128xf32>
    %17 = math.rsqrt %16 : vector<1x128xf32>
    %18 = arith.mulf %14, %17 : vector<1x128xf32>
    %19 = vector.broadcast %18 : vector<1x128xf32> to vector<512x128xf32>
    %20 = arith.mulf %8, %19 : vector<512x128xf32>
    %c0_10 = arith.constant 0 : index
    %c0_11 = arith.constant 0 : index
    %21 = vector.load %arg4[%c0_10, %c0_11] : memref<1x128xf32, #tpu.memory_space<vmem>>, vector<1x128xf32>
    %22 = vector.broadcast %21 : vector<1x128xf32> to vector<512x128xf32>
    %23 = arith.addf %20, %22 : vector<512x128xf32>
    %cst_12 = arith.constant 0.000000e+00 : f32
    %24 = vector.broadcast %cst_12 : f32 to vector<512x128xf32>
    %25 = arith.maximumf %23, %24 : vector<512x128xf32>
    %26 = vector.shape_cast %25 : vector<512x128xf32> to vector<2x256x128xf32>
    %cst_13 = arith.constant dense<0.000000e+00> : vector<2x128xf32>
    %27 = vector.multi_reduction <add>, %26, %cst_13 [1] : vector<2x256x128xf32> to vector<2x128xf32>
    %cst_14 = arith.constant 3.906250e-03 : f32
    %28 = vector.broadcast %cst_14 : f32 to vector<2x128xf32>
    %29 = arith.mulf %27, %28 : vector<2x128xf32>
    %c0_15 = arith.constant 0 : index
    %c0_16 = arith.constant 0 : index
    %30 = vector.load %arg6[%c0_15, %c0_16] : memref<2x128xf32, #tpu.memory_space<vmem>>, vector<2x128xf32>
    tpu.vector_store %arg6[%c0_15, %c0_16], %29 {strides = array<i32>} : memref<2x128xf32, #tpu.memory_space<vmem>>, vector<2x128xf32>,
    %31 = vector.shape_cast %25 : vector<512x128xf32> to vector<256x2x128xf32>
    %cst_17 = arith.constant dense<0xFF800000> : vector<256x128xf32>
    %32 = vector.multi_reduction <maximumf>, %31, %cst_17 [1] : vector<256x2x128xf32> to vector<256x128xf32>
    %33 = vector.shape_cast %32 : vector<256x128xf32> to vector<16x2x8x128xf32>
    %cst_18 = arith.constant dense<0xFF800000> : vector<16x8x128xf32>
    %34 = vector.multi_reduction <maximumf>, %33, %cst_18 [1] : vector<16x2x8x128xf32> to vector<16x8x128xf32>
    %35 = vector.shape_cast %34 : vector<16x8x128xf32> to vector<2x8x8x128xf32>
    %c0_19 = arith.constant 0 : index
    %c0_20 = arith.constant 0 : index
    %c0_21 = arith.constant 0 : index
    %c0_22 = arith.constant 0 : index
    %36 = vector.load %arg5[%c0_19, %c0_20, %c0_21, %c0_22] : memref<2x8x8x128xf32, #tpu.memory_space<vmem>>, vector<2x8x8x128xf32>
    tpu.vector_store %arg5[%c0_19, %c0_20, %c0_21, %c0_22], %35 {strides = array<i32>} : memref<2x8x8x128xf32, #tpu.memory_space<vmem>>, vector<2x8x8x128xf32>,
    return
  }
  func.func @transform_0(%arg0: i32) -> (i32, i32) {
    %c0_i32 = arith.constant 0 : i32
    %c0_i32_0 = arith.constant 0 : i32
    %c0_i32_1 = arith.constant 0 : i32
    return %c0_i32, %c0_i32_0 : i32, i32
  }
  func.func @transform_1(%arg0: i32) -> (i32, i32) {
    %c0_i32 = arith.constant 0 : i32
    %c0_i32_0 = arith.constant 0 : i32
    %c0_i32_1 = arith.constant 0 : i32
    return %c0_i32, %c0_i32_0 : i32, i32
  }
  func.func @transform_2(%arg0: i32) -> (i32, i32) {
    %c0_i32 = arith.constant 0 : i32
    %c0_i32_0 = arith.constant 0 : i32
    %c0_i32_1 = arith.constant 0 : i32
    return %c0_i32, %c0_i32_0 : i32, i32
  }
  func.func @transform_3(%arg0: i32) -> (i32, i32) {
    %c0_i32 = arith.constant 0 : i32
    %c0_i32_0 = arith.constant 0 : i32
    %c0_i32_1 = arith.constant 0 : i32
    return %c0_i32, %c0_i32_0 : i32, i32
  }
  func.func @transform_4(%arg0: i32) -> (i32, i32, i32, i32) {
    %c0_i32 = arith.constant 0 : i32
    %c0_i32_0 = arith.constant 0 : i32
    %c0_i32_1 = arith.constant 0 : i32
    %c0_i32_2 = arith.constant 0 : i32
    %c0_i32_3 = arith.constant 0 : i32
    return %c0_i32, %c0_i32_0, %c0_i32_1, %c0_i32_2 : i32, i32, i32, i32
  }
  func.func @transform_5(%arg0: i32) -> (i32, i32) {
    %c0_i32 = arith.constant 0 : i32
    %c0_i32_0 = arith.constant 0 : i32
    %c0_i32_1 = arith.constant 0 : i32
    return %c0_i32, %c0_i32_0 : i32, i32
  }
}

module attributes {stable_mosaic.version = 11 : i64} {
  func.func @kernel(%arg0: i32, %arg1: memref<128x256xbf16, #tpu.memory_space<vmem>>, %arg2: memref<256x128xbf16, #tpu.memory_space<vmem>>, %arg3: memref<1x128xf32, #tpu.memory_space<vmem>>, %arg4: memref<1x128xf32, #tpu.memory_space<vmem>>, %arg5: memref<2x4x4x128xf32, #tpu.memory_space<vmem>>, %arg6: memref<2x128xf32, #tpu.memory_space<vmem>>) attributes {dimension_semantics = [#tpu.dimension_semantics<arbitrary>], iteration_bounds = array<i64: 1>, scalar_prefetch = 0 : i64, scratch_operands = 0 : i64, tpu.core_type = #tpu.core_type<tc>, window_params = [{pipeline_mode = #tpu.pipeline_mode<synchronous>, transform_indices = @transform_0, window_bounds = array<i64: 128, 256>}, {pipeline_mode = #tpu.pipeline_mode<synchronous>, transform_indices = @transform_1, window_bounds = array<i64: 256, 128>}, {pipeline_mode = #tpu.pipeline_mode<synchronous>, transform_indices = @transform_2, window_bounds = array<i64: 1, 128>}, {pipeline_mode = #tpu.pipeline_mode<synchronous>, transform_indices = @transform_3, window_bounds = array<i64: 1, 128>}, {pipeline_mode = #tpu.pipeline_mode<synchronous>, transform_indices = @transform_4, window_bounds = array<i64: 2, 4, 4, 128>}, {pipeline_mode = #tpu.pipeline_mode<synchronous>, transform_indices = @transform_5, window_bounds = array<i64: 2, 128>}]} {
    %c0 = arith.constant 0 : index
    %c0_0 = arith.constant 0 : index
    %0 = vector.load %arg1[%c0, %c0_0] : memref<128x256xbf16, #tpu.memory_space<vmem>>, vector<128x256xbf16>
    %c0_1 = arith.constant 0 : index
    %c0_2 = arith.constant 0 : index
    %1 = vector.load %arg2[%c0_1, %c0_2] : memref<256x128xbf16, #tpu.memory_space<vmem>>, vector<256x128xbf16>
    %cst = arith.constant dense<0.000000e+00> : vector<128x128xf32>
    %2 = tpu.matmul %0, %1, %cst {dimension_numbers = #tpu.dot_dimension_numbers<[1], [0], [0], [1], [0, 0, 1, 1], [], []>} : vector<128x256xbf16>, vector<256x128xbf16>, vector<128x128xf32> -> vector<128x128xf32>
    %cst_3 = arith.constant dense<0.000000e+00> : vector<128xf32>
    %3 = vector.multi_reduction <add>, %2, %cst_3 [0] : vector<128x128xf32> to vector<128xf32>
    %4 = vector.shape_cast %3 : vector<128xf32> to vector<1x128xf32>
    %cst_4 = arith.constant 7.812500e-03 : f32
    %5 = vector.broadcast %cst_4 : f32 to vector<1x128xf32>
    %6 = arith.mulf %4, %5 : vector<1x128xf32>
    %7 = vector.broadcast %6 : vector<1x128xf32> to vector<128x128xf32>
    %8 = arith.subf %2, %7 : vector<128x128xf32>
    %9 = arith.mulf %8, %8 : vector<128x128xf32>
    %cst_5 = arith.constant dense<0.000000e+00> : vector<128xf32>
    %10 = vector.multi_reduction <add>, %9, %cst_5 [0] : vector<128x128xf32> to vector<128xf32>
    %11 = vector.shape_cast %10 : vector<128xf32> to vector<1x128xf32>
    %cst_6 = arith.constant 7.812500e-03 : f32
    %12 = vector.broadcast %cst_6 : f32 to vector<1x128xf32>
    %13 = arith.mulf %11, %12 : vector<1x128xf32>
    %c0_7 = arith.constant 0 : index
    %c0_8 = arith.constant 0 : index
    %14 = vector.load %arg3[%c0_7, %c0_8] : memref<1x128xf32, #tpu.memory_space<vmem>>, vector<1x128xf32>
    %cst_9 = arith.constant 9.99999974E-6 : f32
    %15 = vector.broadcast %cst_9 : f32 to vector<1x128xf32>
    %16 = arith.addf %13, %15 : vector<1x128xf32>
    %17 = math.rsqrt %16 : vector<1x128xf32>
    %18 = arith.mulf %14, %17 : vector<1x128xf32>
    %19 = vector.broadcast %18 : vector<1x128xf32> to vector<128x128xf32>
    %20 = arith.mulf %8, %19 : vector<128x128xf32>
    %c0_10 = arith.constant 0 : index
    %c0_11 = arith.constant 0 : index
    %21 = vector.load %arg4[%c0_10, %c0_11] : memref<1x128xf32, #tpu.memory_space<vmem>>, vector<1x128xf32>
    %22 = vector.broadcast %21 : vector<1x128xf32> to vector<128x128xf32>
    %23 = arith.addf %20, %22 : vector<128x128xf32>
    %cst_12 = arith.constant 0.000000e+00 : f32
    %24 = vector.broadcast %cst_12 : f32 to vector<128x128xf32>
    %25 = arith.maximumf %23, %24 : vector<128x128xf32>
    %26 = vector.shape_cast %25 : vector<128x128xf32> to vector<2x64x128xf32>
    %cst_13 = arith.constant dense<0.000000e+00> : vector<2x128xf32>
    %27 = vector.multi_reduction <add>, %26, %cst_13 [1] : vector<2x64x128xf32> to vector<2x128xf32>
    %cst_14 = arith.constant 1.562500e-02 : f32
    %28 = vector.broadcast %cst_14 : f32 to vector<2x128xf32>
    %29 = arith.mulf %27, %28 : vector<2x128xf32>
    %c0_15 = arith.constant 0 : index
    %c0_16 = arith.constant 0 : index
    %30 = vector.load %arg6[%c0_15, %c0_16] : memref<2x128xf32, #tpu.memory_space<vmem>>, vector<2x128xf32>
    tpu.vector_store %arg6[%c0_15, %c0_16], %29 {strides = array<i32>} : memref<2x128xf32, #tpu.memory_space<vmem>>, vector<2x128xf32>,
    %31 = vector.shape_cast %25 : vector<128x128xf32> to vector<64x2x128xf32>
    %cst_17 = arith.constant dense<0xFF800000> : vector<64x128xf32>
    %32 = vector.multi_reduction <maximumf>, %31, %cst_17 [1] : vector<64x2x128xf32> to vector<64x128xf32>
    %33 = vector.shape_cast %32 : vector<64x128xf32> to vector<8x2x4x128xf32>
    %cst_18 = arith.constant dense<0xFF800000> : vector<8x4x128xf32>
    %34 = vector.multi_reduction <maximumf>, %33, %cst_18 [1] : vector<8x2x4x128xf32> to vector<8x4x128xf32>
    %35 = vector.shape_cast %34 : vector<8x4x128xf32> to vector<2x4x4x128xf32>
    %c0_19 = arith.constant 0 : index
    %c0_20 = arith.constant 0 : index
    %c0_21 = arith.constant 0 : index
    %c0_22 = arith.constant 0 : index
    %36 = vector.load %arg5[%c0_19, %c0_20, %c0_21, %c0_22] : memref<2x4x4x128xf32, #tpu.memory_space<vmem>>, vector<2x4x4x128xf32>
    tpu.vector_store %arg5[%c0_19, %c0_20, %c0_21, %c0_22], %35 {strides = array<i32>} : memref<2x4x4x128xf32, #tpu.memory_space<vmem>>, vector<2x4x4x128xf32>,
    return
  }
  func.func @transform_0(%arg0: i32) -> (i32, i32) {
    %c0_i32 = arith.constant 0 : i32
    %c0_i32_0 = arith.constant 0 : i32
    %c0_i32_1 = arith.constant 0 : i32
    return %c0_i32, %c0_i32_0 : i32, i32
  }
  func.func @transform_1(%arg0: i32) -> (i32, i32) {
    %c0_i32 = arith.constant 0 : i32
    %c0_i32_0 = arith.constant 0 : i32
    %c0_i32_1 = arith.constant 0 : i32
    return %c0_i32, %c0_i32_0 : i32, i32
  }
  func.func @transform_2(%arg0: i32) -> (i32, i32) {
    %c0_i32 = arith.constant 0 : i32
    %c0_i32_0 = arith.constant 0 : i32
    %c0_i32_1 = arith.constant 0 : i32
    return %c0_i32, %c0_i32_0 : i32, i32
  }
  func.func @transform_3(%arg0: i32) -> (i32, i32) {
    %c0_i32 = arith.constant 0 : i32
    %c0_i32_0 = arith.constant 0 : i32
    %c0_i32_1 = arith.constant 0 : i32
    return %c0_i32, %c0_i32_0 : i32, i32
  }
  func.func @transform_4(%arg0: i32) -> (i32, i32, i32, i32) {
    %c0_i32 = arith.constant 0 : i32
    %c0_i32_0 = arith.constant 0 : i32
    %c0_i32_1 = arith.constant 0 : i32
    %c0_i32_2 = arith.constant 0 : i32
    %c0_i32_3 = arith.constant 0 : i32
    return %c0_i32, %c0_i32_0, %c0_i32_1, %c0_i32_2 : i32, i32, i32, i32
  }
  func.func @transform_5(%arg0: i32) -> (i32, i32) {
    %c0_i32 = arith.constant 0 : i32
    %c0_i32_0 = arith.constant 0 : i32
    %c0_i32_1 = arith.constant 0 : i32
    return %c0_i32, %c0_i32_0 : i32, i32
  }
}

module attributes {stable_mosaic.version = 11 : i64} {
  func.func @kernel(%arg0: i32, %arg1: memref<32x256xbf16, #tpu.memory_space<vmem>>, %arg2: memref<256x128xbf16, #tpu.memory_space<vmem>>, %arg3: memref<1x128xf32, #tpu.memory_space<vmem>>, %arg4: memref<1x128xf32, #tpu.memory_space<vmem>>, %arg5: memref<128x128xf32, #tpu.memory_space<vmem>>, %arg6: memref<1x128xf32, #tpu.memory_space<vmem>>, %arg7: memref<2x128xf32, #tpu.memory_space<vmem>>, %arg8: memref<2x128xf32, #tpu.memory_space<vmem>>) attributes {dimension_semantics = [#tpu.dimension_semantics<arbitrary>], iteration_bounds = array<i64: 1>, scalar_prefetch = 0 : i64, scratch_operands = 0 : i64, tpu.core_type = #tpu.core_type<tc>, window_params = [{pipeline_mode = #tpu.pipeline_mode<synchronous>, transform_indices = @transform_0, window_bounds = array<i64: 32, 256>}, {pipeline_mode = #tpu.pipeline_mode<synchronous>, transform_indices = @transform_1, window_bounds = array<i64: 256, 128>}, {pipeline_mode = #tpu.pipeline_mode<synchronous>, transform_indices = @transform_2, window_bounds = array<i64: 1, 128>}, {pipeline_mode = #tpu.pipeline_mode<synchronous>, transform_indices = @transform_3, window_bounds = array<i64: 1, 128>}, {pipeline_mode = #tpu.pipeline_mode<synchronous>, transform_indices = @transform_4, window_bounds = array<i64: 128, 128>}, {pipeline_mode = #tpu.pipeline_mode<synchronous>, transform_indices = @transform_5, window_bounds = array<i64: 1, 128>}, {pipeline_mode = #tpu.pipeline_mode<synchronous>, transform_indices = @transform_6, window_bounds = array<i64: 2, 128>}, {pipeline_mode = #tpu.pipeline_mode<synchronous>, transform_indices = @transform_7, window_bounds = array<i64: 2, 128>}]} {
    %c0 = arith.constant 0 : index
    %c0_0 = arith.constant 0 : index
    %0 = vector.load %arg1[%c0, %c0_0] : memref<32x256xbf16, #tpu.memory_space<vmem>>, vector<32x256xbf16>
    %c0_1 = arith.constant 0 : index
    %c0_2 = arith.constant 0 : index
    %1 = vector.load %arg2[%c0_1, %c0_2] : memref<256x128xbf16, #tpu.memory_space<vmem>>, vector<256x128xbf16>
    %cst = arith.constant dense<0.000000e+00> : vector<32x128xf32>
    %2 = tpu.matmul %0, %1, %cst {dimension_numbers = #tpu.dot_dimension_numbers<[1], [0], [0], [1], [0, 0, 1, 1], [], []>} : vector<32x256xbf16>, vector<256x128xbf16>, vector<32x128xf32> -> vector<32x128xf32>
    %cst_3 = arith.constant dense<0.000000e+00> : vector<128xf32>
    %3 = vector.multi_reduction <add>, %2, %cst_3 [0] : vector<32x128xf32> to vector<128xf32>
    %4 = vector.shape_cast %3 : vector<128xf32> to vector<1x128xf32>
    %cst_4 = arith.constant 3.125000e-02 : f32
    %5 = vector.broadcast %cst_4 : f32 to vector<1x128xf32>
    %6 = arith.mulf %4, %5 : vector<1x128xf32>
    %7 = vector.broadcast %6 : vector<1x128xf32> to vector<32x128xf32>
    %8 = arith.subf %2, %7 : vector<32x128xf32>
    %9 = arith.mulf %8, %8 : vector<32x128xf32>
    %cst_5 = arith.constant dense<0.000000e+00> : vector<128xf32>
    %10 = vector.multi_reduction <add>, %9, %cst_5 [0] : vector<32x128xf32> to vector<128xf32>
    %11 = vector.shape_cast %10 : vector<128xf32> to vector<1x128xf32>
    %cst_6 = arith.constant 3.125000e-02 : f32
    %12 = vector.broadcast %cst_6 : f32 to vector<1x128xf32>
    %13 = arith.mulf %11, %12 : vector<1x128xf32>
    %c0_7 = arith.constant 0 : index
    %c0_8 = arith.constant 0 : index
    %14 = vector.load %arg3[%c0_7, %c0_8] : memref<1x128xf32, #tpu.memory_space<vmem>>, vector<1x128xf32>
    %cst_9 = arith.constant 9.99999974E-6 : f32
    %15 = vector.broadcast %cst_9 : f32 to vector<1x128xf32>
    %16 = arith.addf %13, %15 : vector<1x128xf32>
    %17 = math.rsqrt %16 : vector<1x128xf32>
    %18 = arith.mulf %14, %17 : vector<1x128xf32>
    %19 = vector.broadcast %18 : vector<1x128xf32> to vector<32x128xf32>
    %20 = arith.mulf %8, %19 : vector<32x128xf32>
    %c0_10 = arith.constant 0 : index
    %c0_11 = arith.constant 0 : index
    %21 = vector.load %arg4[%c0_10, %c0_11] : memref<1x128xf32, #tpu.memory_space<vmem>>, vector<1x128xf32>
    %22 = vector.broadcast %21 : vector<1x128xf32> to vector<32x128xf32>
    %23 = arith.addf %20, %22 : vector<32x128xf32>
    %cst_12 = arith.constant 0.000000e+00 : f32
    %24 = vector.broadcast %cst_12 : f32 to vector<32x128xf32>
    %25 = arith.maximumf %23, %24 : vector<32x128xf32>
    %26 = vector.shape_cast %25 : vector<32x128xf32> to vector<2x16x128xf32>
    %cst_13 = arith.constant dense<0.000000e+00> : vector<2x128xf32>
    %27 = vector.multi_reduction <add>, %26, %cst_13 [1] : vector<2x16x128xf32> to vector<2x128xf32>
    %cst_14 = arith.constant 6.250000e-02 : f32
    %28 = vector.broadcast %cst_14 : f32 to vector<2x128xf32>
    %29 = arith.mulf %27, %28 : vector<2x128xf32>
    %c0_15 = arith.constant 0 : index
    %c0_16 = arith.constant 0 : index
    %30 = vector.load %arg7[%c0_15, %c0_16] : memref<2x128xf32, #tpu.memory_space<vmem>>, vector<2x128xf32>
    tpu.vector_store %arg7[%c0_15, %c0_16], %29 {strides = array<i32>} : memref<2x128xf32, #tpu.memory_space<vmem>>, vector<2x128xf32>,
    %c0_17 = arith.constant 0 : index
    %c0_18 = arith.constant 0 : index
    %31 = vector.load %arg5[%c0_17, %c0_18] : memref<128x128xf32, #tpu.memory_space<vmem>>, vector<128x128xf32>
    %cst_19 = arith.constant dense<0.000000e+00> : vector<2x128xf32>
    %32 = tpu.matmul %29, %31, %cst_19 {dimension_numbers = #tpu.dot_dimension_numbers<[1], [0], [0], [1], [0, 0, 1, 1], [], []>} : vector<2x128xf32>, vector<128x128xf32>, vector<2x128xf32> -> vector<2x128xf32>
    %c0_20 = arith.constant 0 : index
    %c0_21 = arith.constant 0 : index
    %33 = vector.load %arg6[%c0_20, %c0_21] : memref<1x128xf32, #tpu.memory_space<vmem>>, vector<1x128xf32>
    %34 = vector.broadcast %33 : vector<1x128xf32> to vector<2x128xf32>
    %35 = arith.addf %32, %34 : vector<2x128xf32>
    %c0_22 = arith.constant 0 : index
    %c0_23 = arith.constant 0 : index
    %36 = vector.load %arg8[%c0_22, %c0_23] : memref<2x128xf32, #tpu.memory_space<vmem>>, vector<2x128xf32>
    tpu.vector_store %arg8[%c0_22, %c0_23], %35 {strides = array<i32>} : memref<2x128xf32, #tpu.memory_space<vmem>>, vector<2x128xf32>,
    return
  }
  func.func @transform_0(%arg0: i32) -> (i32, i32) {
    %c0_i32 = arith.constant 0 : i32
    %c0_i32_0 = arith.constant 0 : i32
    %c0_i32_1 = arith.constant 0 : i32
    return %c0_i32, %c0_i32_0 : i32, i32
  }
  func.func @transform_1(%arg0: i32) -> (i32, i32) {
    %c0_i32 = arith.constant 0 : i32
    %c0_i32_0 = arith.constant 0 : i32
    %c0_i32_1 = arith.constant 0 : i32
    return %c0_i32, %c0_i32_0 : i32, i32
  }
  func.func @transform_2(%arg0: i32) -> (i32, i32) {
    %c0_i32 = arith.constant 0 : i32
    %c0_i32_0 = arith.constant 0 : i32
    %c0_i32_1 = arith.constant 0 : i32
    return %c0_i32, %c0_i32_0 : i32, i32
  }
  func.func @transform_3(%arg0: i32) -> (i32, i32) {
    %c0_i32 = arith.constant 0 : i32
    %c0_i32_0 = arith.constant 0 : i32
    %c0_i32_1 = arith.constant 0 : i32
    return %c0_i32, %c0_i32_0 : i32, i32
  }
  func.func @transform_4(%arg0: i32) -> (i32, i32) {
    %c0_i32 = arith.constant 0 : i32
    %c0_i32_0 = arith.constant 0 : i32
    %c0_i32_1 = arith.constant 0 : i32
    return %c0_i32, %c0_i32_0 : i32, i32
  }
  func.func @transform_5(%arg0: i32) -> (i32, i32) {
    %c0_i32 = arith.constant 0 : i32
    %c0_i32_0 = arith.constant 0 : i32
    %c0_i32_1 = arith.constant 0 : i32
    return %c0_i32, %c0_i32_0 : i32, i32
  }
  func.func @transform_6(%arg0: i32) -> (i32, i32) {
    %c0_i32 = arith.constant 0 : i32
    %c0_i32_0 = arith.constant 0 : i32
    %c0_i32_1 = arith.constant 0 : i32
    return %c0_i32, %c0_i32_0 : i32, i32
  }
  func.func @transform_7(%arg0: i32) -> (i32, i32) {
    %c0_i32 = arith.constant 0 : i32
    %c0_i32_0 = arith.constant 0 : i32
    %c0_i32_1 = arith.constant 0 : i32
    return %c0_i32, %c0_i32_0 : i32, i32
  }
}

</mosaic_0001>

<llo_original>
// kernel: gp_lenet_forward.3
$region0: #{gp_lenet_forward.3}
  #allocation0 [shape = 'u32[]', space=smem, size = 0x4, offset = 0x4, fixed_abs, tag = 'smem constant byte address 0x4 - core index']
  #allocation1 [shape = 'u32[144,128]{1,0:T(1,128)}', space=vmem, size = 0x12000, scoped, tag = 'internal scratch']
  %s0 = inlined_call_operand.vmem [shape: bf16[512,128], index: 0, kind: input, shape index: {}]
  %s1 = inlined_call_operand.vmem [shape: bf16[128,128], index: 1, kind: input, shape index: {}]
  %s2 = inlined_call_operand.vmem [shape: f32[1,128], index: 2, kind: input, shape index: {}]
  %s3 = inlined_call_operand.vmem [shape: f32[1,128], index: 3, kind: input, shape index: {}]
  %s4 = inlined_call_operand.vmem [shape: f32[2,8,8,128], index: 4, kind: output, shape index: {0}]
  %s5 = inlined_call_operand.hbm [shape: f32[2,128], index: 5, kind: output, shape index: {1}]
  %6 = xla_tuple %s4, %s5
  %s7 = sld [smem:[#allocation0]]
  $region34: #{gp_lenet_forward.3} parent=0
    _
  %s9 = ssub.s32 1, %s7
  %s10 = scalar_select 0, %s9, %s7
  $region1: #{gp_lenet_forward.3} parent=0
    #allocation2 [shape = 'u8[1024]{0}', space=vmem, size = 0x400, scoped, tag = 'output window, operand 1, single buffered']
    #allocation3 [shape = 's32[1]{0}', space=sflag, size = 0x4, scoped, tag = 'scoped memory for gp_lenet_forward.3']
    %11 = vsyncpa [#allocation3], 0
    // Predicated region
    $region2: #{gp_lenet_forward.3} parent=1 // pred_check
      _
    $region3: #{gp_lenet_forward.3} parent=1 // pred_check_branch
      %13 = sbr.rel (0) target = $region5
    $region4: #{gp_lenet_forward.3} parent=1 // pred_region
      _
    $region5: #{gp_lenet_forward.3} parent=1 // pred_fallthru
      _
    // Predicated region
    $region6: #{gp_lenet_forward.3} parent=1 // pred_check
      _
    $region7: #{gp_lenet_forward.3} parent=1 // pred_check_branch
      %15 = sbr.rel (0) target = $region9
    $region8: #{gp_lenet_forward.3} parent=1 // pred_region
      _
    $region9: #{gp_lenet_forward.3} parent=1 // pred_fallthru
      _
    // Predicated region
    $region10: #{gp_lenet_forward.3} parent=1 // pred_check
      _
    $region11: #{gp_lenet_forward.3} parent=1 // pred_check_branch
      %17 = sbr.rel (0) target = $region13
    $region12: #{gp_lenet_forward.3} parent=1 // pred_region
      _
    $region13: #{gp_lenet_forward.3} parent=1 // pred_fallthru
      _
    // Predicated region
    $region14: #{gp_lenet_forward.3} parent=1 // pred_check
      _
    $region15: #{gp_lenet_forward.3} parent=1 // pred_check_branch
      %19 = sbr.rel (0) target = $region17
    $region16: #{gp_lenet_forward.3} parent=1 // pred_region
      _
    $region17: #{gp_lenet_forward.3} parent=1 // pred_fallthru
      _
    %v21 = vld [vmem:[%s0] sm:$0xf]
    %v22 = vld [vmem:[%s0 + $0x4] sm:$0xf]
    %v23 = vld [vmem:[%s0 + $0x8] sm:$0xf]
    %v24 = vld [vmem:[%s0 + $0xc] sm:$0xf]
    %v25 = vld [vmem:[%s0 + $0x10] sm:$0xf]
    %v26 = vld [vmem:[%s0 + $0x14] sm:$0xf]
    %v27 = vld [vmem:[%s0 + $0x18] sm:$0xf]
    %v28 = vld [vmem:[%s0 + $0x1c] sm:$0xf]
    %v29 = vld [vmem:[%s0 + $0x20] sm:$0xf]
    %v30 = vld [vmem:[%s0 + $0x24] sm:$0xf]
    %v31 = vld [vmem:[%s0 + $0x28] sm:$0xf]
    %v32 = vld [vmem:[%s0 + $0x2c] sm:$0xf]
    %v33 = vld [vmem:[%s0 + $0x30] sm:$0xf]
    %v34 = vld [vmem:[%s0 + $0x34] sm:$0xf]
    %v35 = vld [vmem:[%s0 + $0x38] sm:$0xf]
    %v36 = vld [vmem:[%s0 + $0x3c] sm:$0xf]
    %v37 = vld [vmem:[%s0 + $0x40] sm:$0xf]
    %v38 = vld [vmem:[%s0 + $0x44] sm:$0xf]
    %v39 = vld [vmem:[%s0 + $0x48] sm:$0xf]
    %v40 = vld [vmem:[%s0 + $0x4c] sm:$0xf]
    %v41 = vld [vmem:[%s0 + $0x50] sm:$0xf]
    %v42 = vld [vmem:[%s0 + $0x54] sm:$0xf]
    %v43 = vld [vmem:[%s0 + $0x58] sm:$0xf]
    %v44 = vld [vmem:[%s0 + $0x5c] sm:$0xf]
    %v45 = vld [vmem:[%s0 + $0x60] sm:$0xf]
    %v46 = vld [vmem:[%s0 + $0x64] sm:$0xf]
    %v47 = vld [vmem:[%s0 + $0x68] sm:$0xf]
    %v48 = vld [vmem:[%s0 + $0x6c] sm:$0xf]
    %v49 = vld [vmem:[%s0 + $0x70] sm:$0xf]
    %v50 = vld [vmem:[%s0 + $0x74] sm:$0xf]
    %v51 = vld [vmem:[%s0 + $0x78] sm:$0xf]
    %v52 = vld [vmem:[%s0 + $0x7c] sm:$0xf]
    %v53 = vld [vmem:[%s0 + $0x80] sm:$0xf]
    %v54 = vld [vmem:[%s0 + $0x84] sm:$0xf]
    %v55 = vld [vmem:[%s0 + $0x88] sm:$0xf]
    %v56 = vld [vmem:[%s0 + $0x8c] sm:$0xf]
    %v57 = vld [vmem:[%s0 + $0x90] sm:$0xf]
    %v58 = vld [vmem:[%s0 + $0x94] sm:$0xf]
    %v59 = vld [vmem:[%s0 + $0x98] sm:$0xf]
    %v60 = vld [vmem:[%s0 + $0x9c] sm:$0xf]
    %v61 = vld [vmem:[%s0 + $0xa0] sm:$0xf]
    %v62 = vld [vmem:[%s0 + $0xa4] sm:$0xf]
    %v63 = vld [vmem:[%s0 + $0xa8] sm:$0xf]
    %v64 = vld [vmem:[%s0 + $0xac] sm:$0xf]
    %v65 = vld [vmem:[%s0 + $0xb0] sm:$0xf]
    %v66 = vld [vmem:[%s0 + $0xb4] sm:$0xf]
    %v67 = vld [vmem:[%s0 + $0xb8] sm:$0xf]
    %v68 = vld [vmem:[%s0 + $0xbc] sm:$0xf]
    %v69 = vld [vmem:[%s0 + $0xc0] sm:$0xf]
    %v70 = vld [vmem:[%s0 + $0xc4] sm:$0xf]
    %v71 = vld [vmem:[%s0 + $0xc8] sm:$0xf]
    %v72 = vld [vmem:[%s0 + $0xcc] sm:$0xf]
    %v73 = vld [vmem:[%s0 + $0xd0] sm:$0xf]
    %v74 = vld [vmem:[%s0 + $0xd4] sm:$0xf]
    %v75 = vld [vmem:[%s0 + $0xd8] sm:$0xf]
    %v76 = vld [vmem:[%s0 + $0xdc] sm:$0xf]
    %v77 = vld [vmem:[%s0 + $0xe0] sm:$0xf]
    %v78 = vld [vmem:[%s0 + $0xe4] sm:$0xf]
    %v79 = vld [vmem:[%s0 + $0xe8] sm:$0xf]
    %v80 = vld [vmem:[%s0 + $0xec] sm:$0xf]
    %v81 = vld [vmem:[%s0 + $0xf0] sm:$0xf]
    %v82 = vld [vmem:[%s0 + $0xf4] sm:$0xf]
    %v83 = vld [vmem:[%s0 + $0xf8] sm:$0xf]
    %v84 = vld [vmem:[%s0 + $0xfc] sm:$0xf]
    %v85 = vld [vmem:[%s1] sm:$0xf]
    %v86 = vld [vmem:[%s1 + $0x4] sm:$0xf]
    %v87 = vld [vmem:[%s1 + $0x8] sm:$0xf]
    %v88 = vld [vmem:[%s1 + $0xc] sm:$0xf]
    %v89 = vld [vmem:[%s1 + $0x10] sm:$0xf]
    %v90 = vld [vmem:[%s1 + $0x14] sm:$0xf]
    %v91 = vld [vmem:[%s1 + $0x18] sm:$0xf]
    %v92 = vld [vmem:[%s1 + $0x1c] sm:$0xf]
    %v93 = vld [vmem:[%s1 + $0x20] sm:$0xf]
    %v94 = vld [vmem:[%s1 + $0x24] sm:$0xf]
    %v95 = vld [vmem:[%s1 + $0x28] sm:$0xf]
    %v96 = vld [vmem:[%s1 + $0x2c] sm:$0xf]
    %v97 = vld [vmem:[%s1 + $0x30] sm:$0xf]
    %v98 = vld [vmem:[%s1 + $0x34] sm:$0xf]
    %v99 = vld [vmem:[%s1 + $0x38] sm:$0xf]
    %v100 = vld [vmem:[%s1 + $0x3c] sm:$0xf]
    %v165 = vunpack.c.l.b16 %v21
    %v166 = vunpack.c.l.b16 %v22
    %v167 = vunpack.c.l.b16 %v23
    %v168 = vunpack.c.l.b16 %v24
    %v169 = vunpack.c.l.b16 %v25
    %v170 = vunpack.c.l.b16 %v26
    %v171 = vunpack.c.l.b16 %v27
    %v172 = vunpack.c.l.b16 %v28
    %v173 = vunpack.c.l.b16 %v29
    %v174 = vunpack.c.l.b16 %v30
    %v175 = vunpack.c.l.b16 %v31
    %v176 = vunpack.c.l.b16 %v32
    %v177 = vunpack.c.l.b16 %v33
    %v178 = vunpack.c.l.b16 %v34
    %v179 = vunpack.c.l.b16 %v35
    %v180 = vunpack.c.l.b16 %v36
    %v181 = vunpack.c.l.b16 %v37
    %v182 = vunpack.c.l.b16 %v38
    %v183 = vunpack.c.l.b16 %v39
    %v184 = vunpack.c.l.b16 %v40
    %v185 = vunpack.c.l.b16 %v41
    %v186 = vunpack.c.l.b16 %v42
    %v187 = vunpack.c.l.b16 %v43
    %v188 = vunpack.c.l.b16 %v44
    %v189 = vunpack.c.l.b16 %v45
    %v190 = vunpack.c.l.b16 %v46
    %v191 = vunpack.c.l.b16 %v47
    %v192 = vunpack.c.l.b16 %v48
    %v193 = vunpack.c.l.b16 %v49
    %v194 = vunpack.c.l.b16 %v50
    %v195 = vunpack.c.l.b16 %v51
    %v196 = vunpack.c.l.b16 %v52
    %v197 = vunpack.c.l.b16 %v53
    %v198 = vunpack.c.l.b16 %v54
    %v199 = vunpack.c.l.b16 %v55
    %v200 = vunpack.c.l.b16 %v56
    %v201 = vunpack.c.l.b16 %v57
    %v202 = vunpack.c.l.b16 %v58
    %v203 = vunpack.c.l.b16 %v59
    %v204 = vunpack.c.l.b16 %v60
    %v205 = vunpack.c.l.b16 %v61
    %v206 = vunpack.c.l.b16 %v62
    %v207 = vunpack.c.l.b16 %v63
    %v208 = vunpack.c.l.b16 %v64
    %v209 = vunpack.c.l.b16 %v65
    %v210 = vunpack.c.l.b16 %v66
    %v211 = vunpack.c.l.b16 %v67
    %v212 = vunpack.c.l.b16 %v68
    %v213 = vunpack.c.l.b16 %v69
    %v214 = vunpack.c.l.b16 %v70
    %v215 = vunpack.c.l.b16 %v71
    %v216 = vunpack.c.l.b16 %v72
    %v217 = vunpack.c.l.b16 %v73
    %v218 = vunpack.c.l.b16 %v74
    %v219 = vunpack.c.l.b16 %v75
    %v220 = vunpack.c.l.b16 %v76
    %v221 = vunpack.c.l.b16 %v77
    %v222 = vunpack.c.l.b16 %v78
    %v223 = vunpack.c.l.b16 %v79
    %v224 = vunpack.c.l.b16 %v80
    %v225 = vunpack.c.l.b16 %v81
    %v226 = vunpack.c.l.b16 %v82
    %v227 = vunpack.c.l.b16 %v83
    %v228 = vunpack.c.l.b16 %v84
    %v229 = vpack.c.b16 %v166, %v165
    %v230 = vpack.c.b16 %v168, %v167
    %v231 = vpack.c.b16 %v170, %v169
    %v232 = vpack.c.b16 %v172, %v171
    %v233 = vpack.c.b16 %v174, %v173
    %v234 = vpack.c.b16 %v176, %v175
    %v235 = vpack.c.b16 %v178, %v177
    %v236 = vpack.c.b16 %v180, %v179
    %v237 = vpack.c.b16 %v182, %v181
    %v238 = vpack.c.b16 %v184, %v183
    %v239 = vpack.c.b16 %v186, %v185
    %v240 = vpack.c.b16 %v188, %v187
    %v241 = vpack.c.b16 %v190, %v189
    %v242 = vpack.c.b16 %v192, %v191
    %v243 = vpack.c.b16 %v194, %v193
    %v244 = vpack.c.b16 %v196, %v195
    %v245 = vpack.c.b16 %v198, %v197
    %v246 = vpack.c.b16 %v200, %v199
    %v247 = vpack.c.b16 %v202, %v201
    %v248 = vpack.c.b16 %v204, %v203
    %v249 = vpack.c.b16 %v206, %v205
    %v250 = vpack.c.b16 %v208, %v207
    %v251 = vpack.c.b16 %v210, %v209
    %v252 = vpack.c.b16 %v212, %v211
    %v253 = vpack.c.b16 %v214, %v213
    %v254 = vpack.c.b16 %v216, %v215
    %v255 = vpack.c.b16 %v218, %v217
    %v256 = vpack.c.b16 %v220, %v219
    %v257 = vpack.c.b16 %v222, %v221
    %v258 = vpack.c.b16 %v224, %v223
    %v259 = vpack.c.b16 %v226, %v225
    %v260 = vpack.c.b16 %v228, %v227
    %v309 = vunpack.c.l.b16 %v85
    %v310 = vunpack.c.l.b16 %v86
    %v311 = vunpack.c.l.b16 %v87
    %v312 = vunpack.c.l.b16 %v88
    %v313 = vunpack.c.l.b16 %v89
    %v314 = vunpack.c.l.b16 %v90
    %v315 = vunpack.c.l.b16 %v91
    %v316 = vunpack.c.l.b16 %v92
    %v317 = vunpack.c.l.b16 %v93
    %v318 = vunpack.c.l.b16 %v94
    %v319 = vunpack.c.l.b16 %v95
    %v320 = vunpack.c.l.b16 %v96
    %v321 = vunpack.c.l.b16 %v97
    %v322 = vunpack.c.l.b16 %v98
    %v323 = vunpack.c.l.b16 %v99
    %v324 = vunpack.c.l.b16 %v100
    %v325 = vpack.c.b16 %v310, %v309
    %v326 = vpack.c.b16 %v312, %v311
    %v327 = vpack.c.b16 %v314, %v313
    %v328 = vpack.c.b16 %v316, %v315
    %v329 = vpack.c.b16 %v318, %v317
    %v330 = vpack.c.b16 %v320, %v319
    %v331 = vpack.c.b16 %v322, %v321
    %v332 = vpack.c.b16 %v324, %v323
    %341 = vmatprep.subr.bf16.mxu0 0
    %342 = vmatpush1.bf16.msra.mxu0 %v325
    %343 = vmatprep.subr.bf16.mxu0 0
    %344 = vmatpush1.bf16.msra.mxu0 %v326
    %345 = vmatprep.subr.bf16.mxu0 0
    %346 = vmatpush1.bf16.msra.mxu0 %v327
    %347 = vmatprep.subr.bf16.mxu0 0
    %348 = vmatpush1.bf16.msra.mxu0 %v328
    %349 = vmatprep.subr.bf16.mxu0 0
    %350 = vmatpush1.bf16.msra.mxu0 %v329
    %351 = vmatprep.subr.bf16.mxu0 0
    %352 = vmatpush1.bf16.msra.mxu0 %v330
    %353 = vmatprep.subr.bf16.mxu0 0
    %354 = vmatpush1.bf16.msra.mxu0 %v331
    %355 = vmatprep.subr.bf16.mxu0 0
    %356 = vmatpush1.bf16.msra.mxu0 %v332
    %357 = vmatprep.subr.bf16.mxu0 0
    %358 = vmatpush1.bf16.msra.mxu0 0
    %359 = vmatprep.subr.bf16.mxu0 0
    %360 = vmatpush1.bf16.msra.mxu0 0
    %361 = vmatprep.subr.bf16.mxu0 0
    %362 = vmatpush1.bf16.msra.mxu0 0
    %363 = vmatprep.subr.bf16.mxu0 0
    %364 = vmatpush1.bf16.msra.mxu0 0
    %365 = vmatprep.subr.bf16.mxu0 0
    %366 = vmatpush1.bf16.msra.mxu0 0
    %367 = vmatprep.subr.bf16.mxu0 0
    %368 = vmatpush1.bf16.msra.mxu0 0
    %369 = vmatprep.subr.bf16.mxu0 0
    %370 = vmatpush1.bf16.msra.mxu0 0
    %371 = vmatprep.subr.bf16.mxu0 0
    %372 = vmatpush1.bf16.msra.mxu0 0
    %373 = vmatprep.mubr.bf16.mxu0 0
    %374 = vmatmul.mubr.bf16.gmra.mrb[0].mxu0 %v229
    %v375 = vpop.f32.mrb[0].mxu0
    %v376 = vadd.f32 0.0, %v375
    %v377 = vpop.f32.mrb[0].mxu0
    %v378 = vpop.f32.mrb[0].mxu0
    %v379 = vadd.f32 0.0, %v378
    %v380 = vpop.f32.mrb[0].mxu0
    %381 = vmatprep.mubr.bf16.mxu0 0
    %382 = vmatmul.mubr.bf16.gmra.mrb[0].mxu0 %v230
    %v383 = vpop.f32.mrb[0].mxu0
    %v384 = vadd.f32 0.0, %v383
    %v385 = vpop.f32.mrb[0].mxu0
    %v386 = vpop.f32.mrb[0].mxu0
    %v387 = vadd.f32 0.0, %v386
    %v388 = vpop.f32.mrb[0].mxu0
    %389 = vmatprep.mubr.bf16.mxu0 0
    %390 = vmatmul.mubr.bf16.gmra.mrb[0].mxu0 %v231
    %v391 = vpop.f32.mrb[0].mxu0
    %v392 = vadd.f32 0.0, %v391
    %v393 = vpop.f32.mrb[0].mxu0
    %v394 = vpop.f32.mrb[0].mxu0
    %v395 = vadd.f32 0.0, %v394
    %v396 = vpop.f32.mrb[0].mxu0
    %397 = vmatprep.mubr.bf16.mxu0 0
    %398 = vmatmul.mubr.bf16.gmra.mrb[0].mxu0 %v232
    %v399 = vpop.f32.mrb[0].mxu0
    %v400 = vadd.f32 0.0, %v399
    %v401 = vpop.f32.mrb[0].mxu0
    %v402 = vpop.f32.mrb[0].mxu0
    %v403 = vadd.f32 0.0, %v402
    %v404 = vpop.f32.mrb[0].mxu0
    %405 = vmatprep.mubr.bf16.mxu0 0
    %406 = vmatmul.mubr.bf16.gmra.mrb[0].mxu0 %v233
    %v407 = vpop.f32.mrb[0].mxu0
    %v408 = vadd.f32 0.0, %v407
    %v409 = vpop.f32.mrb[0].mxu0
    %v410 = vpop.f32.mrb[0].mxu0
    %v411 = vadd.f32 0.0, %v410
    %v412 = vpop.f32.mrb[0].mxu0
    %413 = vmatprep.mubr.bf16.mxu0 0
    %414 = vmatmul.mubr.bf16.gmra.mrb[0].mxu0 %v234
    %v415 = vpop.f32.mrb[0].mxu0
    %v416 = vadd.f32 0.0, %v415
    %v417 = vpop.f32.mrb[0].mxu0
    %v418 = vpop.f32.mrb[0].mxu0
    %v419 = vadd.f32 0.0, %v418
    %v420 = vpop.f32.mrb[0].mxu0
    %421 = vmatprep.mubr.bf16.mxu0 0
    %422 = vmatmul.mubr.bf16.gmra.mrb[0].mxu0 %v235
    %v423 = vpop.f32.mrb[0].mxu0
    %v424 = vadd.f32 0.0, %v423
    %v425 = vpop.f32.mrb[0].mxu0
    %v426 = vpop.f32.mrb[0].mxu0
    %v427 = vadd.f32 0.0, %v426
    %v428 = vpop.f32.mrb[0].mxu0
    %429 = vmatprep.mubr.bf16.mxu0 0
    %430 = vmatmul.mubr.bf16.gmra.mrb[0].mxu0 %v236
    %v431 = vpop.f32.mrb[0].mxu0
    %v432 = vadd.f32 0.0, %v431
    %v433 = vpop.f32.mrb[0].mxu0
    %v434 = vpop.f32.mrb[0].mxu0
    %v435 = vadd.f32 0.0, %v434
    %v436 = vpop.f32.mrb[0].mxu0
    %437 = vmatprep.mubr.bf16.mxu0 0
    %438 = vmatmul.mubr.bf16.gmra.mrb[0].mxu0 %v237
    %v439 = vpop.f32.mrb[0].mxu0
    %v440 = vadd.f32 0.0, %v439
    %v441 = vpop.f32.mrb[0].mxu0
    %v442 = vpop.f32.mrb[0].mxu0
    %v443 = vadd.f32 0.0, %v442
    %v444 = vpop.f32.mrb[0].mxu0
    %445 = vmatprep.mubr.bf16.mxu0 0
    %446 = vmatmul.mubr.bf16.gmra.mrb[0].mxu0 %v238
    %v447 = vpop.f32.mrb[0].mxu0
    %v448 = vadd.f32 0.0, %v447
    %v449 = vpop.f32.mrb[0].mxu0
    %v450 = vpop.f32.mrb[0].mxu0
    %v451 = vadd.f32 0.0, %v450
    %v452 = vpop.f32.mrb[0].mxu0
    %453 = vmatprep.mubr.bf16.mxu0 0
    %454 = vmatmul.mubr.bf16.gmra.mrb[0].mxu0 %v239
    %v455 = vpop.f32.mrb[0].mxu0
    %v456 = vadd.f32 0.0, %v455
    %v457 = vpop.f32.mrb[0].mxu0
    %v458 = vpop.f32.mrb[0].mxu0
    %v459 = vadd.f32 0.0, %v458
    %v460 = vpop.f32.mrb[0].mxu0
    %461 = vmatprep.mubr.bf16.mxu0 0
    %462 = vmatmul.mubr.bf16.gmra.mrb[0].mxu0 %v240
    %v463 = vpop.f32.mrb[0].mxu0
    %v464 = vadd.f32 0.0, %v463
    %v465 = vpop.f32.mrb[0].mxu0
    %v466 = vpop.f32.mrb[0].mxu0
    %v467 = vadd.f32 0.0, %v466
    %v468 = vpop.f32.mrb[0].mxu0
    %469 = vmatprep.mubr.bf16.mxu0 0
    %470 = vmatmul.mubr.bf16.gmra.mrb[0].mxu0 %v241
    %v471 = vpop.f32.mrb[0].mxu0
    %v472 = vadd.f32 0.0, %v471
    %v473 = vpop.f32.mrb[0].mxu0
    %v474 = vpop.f32.mrb[0].mxu0
    %v475 = vadd.f32 0.0, %v474
    %v476 = vpop.f32.mrb[0].mxu0
    %477 = vmatprep.mubr.bf16.mxu0 0
    %478 = vmatmul.mubr.bf16.gmra.mrb[0].mxu0 %v242
    %v479 = vpop.f32.mrb[0].mxu0
    %v480 = vadd.f32 0.0, %v479
    %v481 = vpop.f32.mrb[0].mxu0
    %v482 = vpop.f32.mrb[0].mxu0
    %v483 = vadd.f32 0.0, %v482
    %v484 = vpop.f32.mrb[0].mxu0
    %485 = vmatprep.mubr.bf16.mxu0 0
    %486 = vmatmul.mubr.bf16.gmra.mrb[0].mxu0 %v243
    %v487 = vpop.f32.mrb[0].mxu0
    %v488 = vadd.f32 0.0, %v487
    %v489 = vpop.f32.mrb[0].mxu0
    %v490 = vpop.f32.mrb[0].mxu0
    %v491 = vadd.f32 0.0, %v490
    %v492 = vpop.f32.mrb[0].mxu0
    %493 = vmatprep.mubr.bf16.mxu0 0
    %494 = vmatmul.mubr.bf16.gmra.mrb[0].mxu0 %v244
    %v495 = vpop.f32.mrb[0].mxu0
    %v496 = vadd.f32 0.0, %v495
    %v497 = vpop.f32.mrb[0].mxu0
    %v498 = vpop.f32.mrb[0].mxu0
    %v499 = vadd.f32 0.0, %v498
    %v500 = vpop.f32.mrb[0].mxu0
    %501 = vmatprep.mubr.bf16.mxu0 0
    %502 = vmatmul.mubr.bf16.gmra.mrb[0].mxu0 %v245
    %v503 = vpop.f32.mrb[0].mxu0
    %v504 = vadd.f32 0.0, %v503
    %v505 = vpop.f32.mrb[0].mxu0
    %v506 = vpop.f32.mrb[0].mxu0
    %v507 = vadd.f32 0.0, %v506
    %v508 = vpop.f32.mrb[0].mxu0
    %509 = vmatprep.mubr.bf16.mxu0 0
    %510 = vmatmul.mubr.bf16.gmra.mrb[0].mxu0 %v246
    %v511 = vpop.f32.mrb[0].mxu0
    %v512 = vadd.f32 0.0, %v511
    %v513 = vpop.f32.mrb[0].mxu0
    %v514 = vpop.f32.mrb[0].mxu0
    %v515 = vadd.f32 0.0, %v514
    %v516 = vpop.f32.mrb[0].mxu0
    %517 = vmatprep.mubr.bf16.mxu0 0
    %518 = vmatmul.mubr.bf16.gmra.mrb[0].mxu0 %v247
    %v519 = vpop.f32.mrb[0].mxu0
    %v520 = vadd.f32 0.0, %v519
    %v521 = vpop.f32.mrb[0].mxu0
    %v522 = vpop.f32.mrb[0].mxu0
    %v523 = vadd.f32 0.0, %v522
    %v524 = vpop.f32.mrb[0].mxu0
    %525 = vmatprep.mubr.bf16.mxu0 0
    %526 = vmatmul.mubr.bf16.gmra.mrb[0].mxu0 %v248
    %v527 = vpop.f32.mrb[0].mxu0
    %v528 = vadd.f32 0.0, %v527
    %v529 = vpop.f32.mrb[0].mxu0
    %v530 = vpop.f32.mrb[0].mxu0
    %v531 = vadd.f32 0.0, %v530
    %v532 = vpop.f32.mrb[0].mxu0
    %533 = vmatprep.mubr.bf16.mxu0 0
    %534 = vmatmul.mubr.bf16.gmra.mrb[0].mxu0 %v249
    %v535 = vpop.f32.mrb[0].mxu0
    %v536 = vadd.f32 0.0, %v535
    %v537 = vpop.f32.mrb[0].mxu0
    %v538 = vpop.f32.mrb[0].mxu0
    %v539 = vadd.f32 0.0, %v538
    %v540 = vpop.f32.mrb[0].mxu0
    %541 = vmatprep.mubr.bf16.mxu0 0
    %542 = vmatmul.mubr.bf16.gmra.mrb[0].mxu0 %v250
    %v543 = vpop.f32.mrb[0].mxu0
    %v544 = vadd.f32 0.0, %v543
    %v545 = vpop.f32.mrb[0].mxu0
    %v546 = vpop.f32.mrb[0].mxu0
    %v547 = vadd.f32 0.0, %v546
    %v548 = vpop.f32.mrb[0].mxu0
    %549 = vmatprep.mubr.bf16.mxu0 0
    %550 = vmatmul.mubr.bf16.gmra.mrb[0].mxu0 %v251
    %v551 = vpop.f32.mrb[0].mxu0
    %v552 = vadd.f32 0.0, %v551
    %v553 = vpop.f32.mrb[0].mxu0
    %v554 = vpop.f32.mrb[0].mxu0
    %v555 = vadd.f32 0.0, %v554
    %v556 = vpop.f32.mrb[0].mxu0
    %557 = vmatprep.mubr.bf16.mxu0 0
    %558 = vmatmul.mubr.bf16.gmra.mrb[0].mxu0 %v252
    %v559 = vpop.f32.mrb[0].mxu0
    %v560 = vadd.f32 0.0, %v559
    %v561 = vpop.f32.mrb[0].mxu0
    %v562 = vpop.f32.mrb[0].mxu0
    %v563 = vadd.f32 0.0, %v562
    %v564 = vpop.f32.mrb[0].mxu0
    %565 = vmatprep.mubr.bf16.mxu0 0
    %566 = vmatmul.mubr.bf16.gmra.mrb[0].mxu0 %v253
    %v567 = vpop.f32.mrb[0].mxu0
    %v568 = vadd.f32 0.0, %v567
    %v569 = vpop.f32.mrb[0].mxu0
    %v570 = vpop.f32.mrb[0].mxu0
    %v571 = vadd.f32 0.0, %v570
    %v572 = vpop.f32.mrb[0].mxu0
    %573 = vmatprep.mubr.bf16.mxu0 0
    %574 = vmatmul.mubr.bf16.gmra.mrb[0].mxu0 %v254
    %v575 = vpop.f32.mrb[0].mxu0
    %v576 = vadd.f32 0.0, %v575
    %v577 = vpop.f32.mrb[0].mxu0
    %v578 = vpop.f32.mrb[0].mxu0
    %v579 = vadd.f32 0.0, %v578
    %v580 = vpop.f32.mrb[0].mxu0
    %581 = vmatprep.mubr.bf16.mxu0 0
    %582 = vmatmul.mubr.bf16.gmra.mrb[0].mxu0 %v255
    %v583 = vpop.f32.mrb[0].mxu0
    %v584 = vadd.f32 0.0, %v583
    %v585 = vpop.f32.mrb[0].mxu0
    %v586 = vpop.f32.mrb[0].mxu0
    %v587 = vadd.f32 0.0, %v586
    %v588 = vpop.f32.mrb[0].mxu0
    %589 = vmatprep.mubr.bf16.mxu0 0
    %590 = vmatmul.mubr.bf16.gmra.mrb[0].mxu0 %v256
    %v591 = vpop.f32.mrb[0].mxu0
    %v592 = vadd.f32 0.0, %v591
    %v593 = vpop.f32.mrb[0].mxu0
    %v594 = vpop.f32.mrb[0].mxu0
    %v595 = vadd.f32 0.0, %v594
    %v596 = vpop.f32.mrb[0].mxu0
    %597 = vmatprep.mubr.bf16.mxu0 0
    %598 = vmatmul.mubr.bf16.gmra.mrb[0].mxu0 %v257
    %v599 = vpop.f32.mrb[0].mxu0
    %v600 = vadd.f32 0.0, %v599
    %v601 = vpop.f32.mrb[0].mxu0
    %v602 = vpop.f32.mrb[0].mxu0
    %v603 = vadd.f32 0.0, %v602
    %v604 = vpop.f32.mrb[0].mxu0
    %605 = vmatprep.mubr.bf16.mxu0 0
    %606 = vmatmul.mubr.bf16.gmra.mrb[0].mxu0 %v258
    %v607 = vpop.f32.mrb[0].mxu0
    %v608 = vadd.f32 0.0, %v607
    %v609 = vpop.f32.mrb[0].mxu0
    %v610 = vpop.f32.mrb[0].mxu0
    %v611 = vadd.f32 0.0, %v610
    %v612 = vpop.f32.mrb[0].mxu0
    %613 = vmatprep.mubr.bf16.mxu0 0
    %614 = vmatmul.mubr.bf16.gmra.mrb[0].mxu0 %v259
    %v615 = vpop.f32.mrb[0].mxu0
    %v616 = vadd.f32 0.0, %v615
    %v617 = vpop.f32.mrb[0].mxu0
    %v618 = vpop.f32.mrb[0].mxu0
    %v619 = vadd.f32 0.0, %v618
    %v620 = vpop.f32.mrb[0].mxu0
    %621 = vmatprep.mubr.bf16.mxu0 0
    %622 = vmatmul.mubr.bf16.gmra.mrb[0].mxu0 %v260
    %v623 = vpop.f32.mrb[0].mxu0
    %v624 = vadd.f32 0.0, %v623
    %v625 = vpop.f32.mrb[0].mxu0
    %v626 = vpop.f32.mrb[0].mxu0
    %v627 = vadd.f32 0.0, %v626
    %v628 = vpop.f32.mrb[0].mxu0
    %629 = vdwg.mxu0
    %v630 = vadd.f32 %v376, %v379
    %v631 = vadd.f32 %v630, %v384
    %v632 = vadd.f32 %v631, %v387
    %v633 = vadd.f32 %v632, %v392
    %v634 = vadd.f32 %v633, %v395
    %v635 = vadd.f32 %v634, %v400
    %v636 = vadd.f32 %v635, %v403
    %v637 = vadd.f32 %v636, %v408
    %v638 = vadd.f32 %v637, %v411
    %v639 = vadd.f32 %v638, %v416
    %v640 = vadd.f32 %v639, %v419
    %v641 = vadd.f32 %v640, %v424
    %v642 = vadd.f32 %v641, %v427
    %v643 = vadd.f32 %v642, %v432
    %v644 = vadd.f32 %v643, %v435
    %v645 = vadd.f32 %v644, %v440
    %v646 = vadd.f32 %v645, %v443
    %v647 = vadd.f32 %v646, %v448
    %v648 = vadd.f32 %v647, %v451
    %v649 = vadd.f32 %v648, %v456
    %v650 = vadd.f32 %v649, %v459
    %v651 = vadd.f32 %v650, %v464
    %v652 = vadd.f32 %v651, %v467
    %v653 = vadd.f32 %v652, %v472
    %v654 = vadd.f32 %v653, %v475
    %v655 = vadd.f32 %v654, %v480
    %v656 = vadd.f32 %v655, %v483
    %v657 = vadd.f32 %v656, %v488
    %v658 = vadd.f32 %v657, %v491
    %v659 = vadd.f32 %v658, %v496
    %v660 = vadd.f32 %v659, %v499
    %v661 = vadd.f32 %v660, %v504
    %v662 = vadd.f32 %v661, %v507
    %v663 = vadd.f32 %v662, %v512
    %v664 = vadd.f32 %v663, %v515
    %v665 = vadd.f32 %v664, %v520
    %v666 = vadd.f32 %v665, %v523
    %v667 = vadd.f32 %v666, %v528
    %v668 = vadd.f32 %v667, %v531
    %v669 = vadd.f32 %v668, %v536
    %v670 = vadd.f32 %v669, %v539
    %v671 = vadd.f32 %v670, %v544
    %v672 = vadd.f32 %v671, %v547
    %v673 = vadd.f32 %v672, %v552
    %v674 = vadd.f32 %v673, %v555
    %v675 = vadd.f32 %v674, %v560
    %v676 = vadd.f32 %v675, %v563
    %v677 = vadd.f32 %v676, %v568
    %v678 = vadd.f32 %v677, %v571
    %v679 = vadd.f32 %v678, %v576
    %v680 = vadd.f32 %v679, %v579
    %v681 = vadd.f32 %v680, %v584
    %v682 = vadd.f32 %v681, %v587
    %v683 = vadd.f32 %v682, %v592
    %v684 = vadd.f32 %v683, %v595
    %v685 = vadd.f32 %v684, %v600
    %v686 = vadd.f32 %v685, %v603
    %v687 = vadd.f32 %v686, %v608
    %v688 = vadd.f32 %v687, %v611
    %v689 = vadd.f32 %v688, %v616
    %v690 = vadd.f32 %v689, %v619
    %v691 = vadd.f32 %v690, %v624
    %v692 = vadd.f32 %v691, %v627
    %v693 = vrot.slane %v692, 4
    %v694 = vadd.f32 %v692, %v693
    %v695 = vrot.slane %v694, 2
    %v696 = vadd.f32 %v694, %v695
    %v697 = vrot.slane %v696, 1
    %v698 = vadd.f32 %v696, %v697
    %v699 = vmul.f32 %v698, 0.001953125
    %v700 = vsub.f32 %v376, %v699
    %v701 = vsub.f32 %v379, %v699
    %v702 = vsub.f32 %v384, %v699
    %v703 = vsub.f32 %v387, %v699
    %v704 = vsub.f32 %v392, %v699
    %v705 = vsub.f32 %v395, %v699
    %v706 = vsub.f32 %v400, %v699
    %v707 = vsub.f32 %v403, %v699
    %v708 = vsub.f32 %v408, %v699
    %v709 = vsub.f32 %v411, %v699
    %v710 = vsub.f32 %v416, %v699
    %v711 = vsub.f32 %v419, %v699
    %v712 = vsub.f32 %v424, %v699
    %v713 = vsub.f32 %v427, %v699
    %v714 = vsub.f32 %v432, %v699
    %v715 = vsub.f32 %v435, %v699
    %v716 = vsub.f32 %v440, %v699
    %v717 = vsub.f32 %v443, %v699
    %v718 = vsub.f32 %v448, %v699
    %v719 = vsub.f32 %v451, %v699
    %v720 = vsub.f32 %v456, %v699
    %v721 = vsub.f32 %v459, %v699
    %v722 = vsub.f32 %v464, %v699
    %v723 = vsub.f32 %v467, %v699
    %v724 = vsub.f32 %v472, %v699
    %v725 = vsub.f32 %v475, %v699
    %v726 = vsub.f32 %v480, %v699
    %v727 = vsub.f32 %v483, %v699
    %v728 = vsub.f32 %v488, %v699
    %v729 = vsub.f32 %v491, %v699
    %v730 = vsub.f32 %v496, %v699
    %v731 = vsub.f32 %v499, %v699
    %v732 = vsub.f32 %v504, %v699
    %v733 = vsub.f32 %v507, %v699
    %v734 = vsub.f32 %v512, %v699
    %v735 = vsub.f32 %v515, %v699
    %v736 = vsub.f32 %v520, %v699
    %v737 = vsub.f32 %v523, %v699
    %v738 = vsub.f32 %v528, %v699
    %v739 = vsub.f32 %v531, %v699
    %v740 = vsub.f32 %v536, %v699
    %v741 = vsub.f32 %v539, %v699
    %v742 = vsub.f32 %v544, %v699
    %v743 = vsub.f32 %v547, %v699
    %v744 = vsub.f32 %v552, %v699
    %v745 = vsub.f32 %v555, %v699
    %v746 = vsub.f32 %v560, %v699
    %v747 = vsub.f32 %v563, %v699
    %v748 = vsub.f32 %v568, %v699
    %v749 = vsub.f32 %v571, %v699
    %v750 = vsub.f32 %v576, %v699
    %v751 = vsub.f32 %v579, %v699
    %v752 = vsub.f32 %v584, %v699
    %v753 = vsub.f32 %v587, %v699
    %v754 = vsub.f32 %v592, %v699
    %v755 = vsub.f32 %v595, %v699
    %v756 = vsub.f32 %v600, %v699
    %v757 = vsub.f32 %v603, %v699
    %v758 = vsub.f32 %v608, %v699
    %v759 = vsub.f32 %v611, %v699
    %v760 = vsub.f32 %v616, %v699
    %v761 = vsub.f32 %v619, %v699
    %v762 = vsub.f32 %v624, %v699
    %v763 = vsub.f32 %v627, %v699
    %v764 = vmul.f32 %v700, %v700
    %v765 = vmul.f32 %v701, %v701
    %v766 = vmul.f32 %v702, %v702
    %v767 = vmul.f32 %v703, %v703
    %v768 = vmul.f32 %v704, %v704
    %v769 = vmul.f32 %v705, %v705
    %v770 = vmul.f32 %v706, %v706
    %v771 = vmul.f32 %v707, %v707
    %v772 = vmul.f32 %v708, %v708
    %v773 = vmul.f32 %v709, %v709
    %v774 = vmul.f32 %v710, %v710
    %v775 = vmul.f32 %v711, %v711
    %v776 = vmul.f32 %v712, %v712
    %v777 = vmul.f32 %v713, %v713
    %v778 = vmul.f32 %v714, %v714
    %v779 = vmul.f32 %v715, %v715
    %v780 = vmul.f32 %v716, %v716
    %v781 = vmul.f32 %v717, %v717
    %v782 = vmul.f32 %v718, %v718
    %v783 = vmul.f32 %v719, %v719
    %v784 = vmul.f32 %v720, %v720
    %v785 = vmul.f32 %v721, %v721
    %v786 = vmul.f32 %v722, %v722
    %v787 = vmul.f32 %v723, %v723
    %v788 = vmul.f32 %v724, %v724
    %v789 = vmul.f32 %v725, %v725
    %v790 = vmul.f32 %v726, %v726
    %v791 = vmul.f32 %v727, %v727
    %v792 = vmul.f32 %v728, %v728
    %v793 = vmul.f32 %v729, %v729
    %v794 = vmul.f32 %v730, %v730
    %v795 = vmul.f32 %v731, %v731
    %v796 = vmul.f32 %v732, %v732
    %v797 = vmul.f32 %v733, %v733
    %v798 = vmul.f32 %v734, %v734
    %v799 = vmul.f32 %v735, %v735
    %v800 = vmul.f32 %v736, %v736
    %v801 = vmul.f32 %v737, %v737
    %v802 = vmul.f32 %v738, %v738
    %v803 = vmul.f32 %v739, %v739
    %v804 = vmul.f32 %v740, %v740
    %v805 = vmul.f32 %v741, %v741
    %v806 = vmul.f32 %v742, %v742
    %v807 = vmul.f32 %v743, %v743
    %v808 = vmul.f32 %v744, %v744
    %v809 = vmul.f32 %v745, %v745
    %v810 = vmul.f32 %v746, %v746
    %v811 = vmul.f32 %v747, %v747
    %v812 = vmul.f32 %v748, %v748
    %v813 = vmul.f32 %v749, %v749
    %v814 = vmul.f32 %v750, %v750
    %v815 = vmul.f32 %v751, %v751
    %v816 = vmul.f32 %v752, %v752
    %v817 = vmul.f32 %v753, %v753
    %v818 = vmul.f32 %v754, %v754
    %v819 = vmul.f32 %v755, %v755
    %v820 = vmul.f32 %v756, %v756
    %v821 = vmul.f32 %v757, %v757
    %v822 = vmul.f32 %v758, %v758
    %v823 = vmul.f32 %v759, %v759
    %v824 = vmul.f32 %v760, %v760
    %v825 = vmul.f32 %v761, %v761
    %v826 = vmul.f32 %v762, %v762
    %v827 = vmul.f32 %v763, %v763
    %v828 = vadd.f32 %v764, %v765
    %v829 = vadd.f32 %v828, %v766
    %v830 = vadd.f32 %v829, %v767
    %v831 = vadd.f32 %v830, %v768
    %v832 = vadd.f32 %v831, %v769
    %v833 = vadd.f32 %v832, %v770
    %v834 = vadd.f32 %v833, %v771
    %v835 = vadd.f32 %v834, %v772
    %v836 = vadd.f32 %v835, %v773
    %v837 = vadd.f32 %v836, %v774
    %v838 = vadd.f32 %v837, %v775
    %v839 = vadd.f32 %v838, %v776
    %v840 = vadd.f32 %v839, %v777
    %v841 = vadd.f32 %v840, %v778
    %v842 = vadd.f32 %v841, %v779
    %v843 = vadd.f32 %v842, %v780
    %v844 = vadd.f32 %v843, %v781
    %v845 = vadd.f32 %v844, %v782
    %v846 = vadd.f32 %v845, %v783
    %v847 = vadd.f32 %v846, %v784
    %v848 = vadd.f32 %v847, %v785
    %v849 = vadd.f32 %v848, %v786
    %v850 = vadd.f32 %v849, %v787
    %v851 = vadd.f32 %v850, %v788
    %v852 = vadd.f32 %v851, %v789
    %v853 = vadd.f32 %v852, %v790
    %v854 = vadd.f32 %v853, %v791
    %v855 = vadd.f32 %v854, %v792
    %v856 = vadd.f32 %v855, %v793
    %v857 = vadd.f32 %v856, %v794
    %v858 = vadd.f32 %v857, %v795
    %v859 = vadd.f32 %v858, %v796
    %v860 = vadd.f32 %v859, %v797
    %v861 = vadd.f32 %v860, %v798
    %v862 = vadd.f32 %v861, %v799
    %v863 = vadd.f32 %v862, %v800
    %v864 = vadd.f32 %v863, %v801
    %v865 = vadd.f32 %v864, %v802
    %v866 = vadd.f32 %v865, %v803
    %v867 = vadd.f32 %v866, %v804
    %v868 = vadd.f32 %v867, %v805
    %v869 = vadd.f32 %v868, %v806
    %v870 = vadd.f32 %v869, %v807
    %v871 = vadd.f32 %v870, %v808
    %v872 = vadd.f32 %v871, %v809
    %v873 = vadd.f32 %v872, %v810
    %v874 = vadd.f32 %v873, %v811
    %v875 = vadd.f32 %v874, %v812
    %v876 = vadd.f32 %v875, %v813
    %v877 = vadd.f32 %v876, %v814
    %v878 = vadd.f32 %v877, %v815
    %v879 = vadd.f32 %v878, %v816
    %v880 = vadd.f32 %v879, %v817
    %v881 = vadd.f32 %v880, %v818
    %v882 = vadd.f32 %v881, %v819
    %v883 = vadd.f32 %v882, %v820
    %v884 = vadd.f32 %v883, %v821
    %v885 = vadd.f32 %v884, %v822
    %v886 = vadd.f32 %v885, %v823
    %v887 = vadd.f32 %v886, %v824
    %v888 = vadd.f32 %v887, %v825
    %v889 = vadd.f32 %v888, %v826
    %v890 = vadd.f32 %v889, %v827
    %v891 = vrot.slane %v890, 4
    %v892 = vadd.f32 %v890, %v891
    %v893 = vrot.slane %v892, 2
    %v894 = vadd.f32 %v892, %v893
    %v895 = vrot.slane %v894, 1
    %v896 = vadd.f32 %v894, %v895
    %v897 = vmul.f32 %v896, 0.001953125
    %v898 = vld [vmem:[%s2] sm:$0x1]
    %v899 = vadd.f32 %v897, 1e-05
    %v900 = vrsqrt.pop %v899
    %v901 = vmul.f32 %v898, %v900
    %v903 = vlaneseq
    %v904 = vshrl.u32 %v903, 7
    %v905 = vsub.s32 0, %v904
    %v906 = vrot.slane %v901, %v905
    %v908 = vmul.f32 %v700, %v906
    %v909 = vmul.f32 %v701, %v906
    %v910 = vmul.f32 %v702, %v906
    %v911 = vmul.f32 %v703, %v906
    %v912 = vmul.f32 %v704, %v906
    %v913 = vmul.f32 %v705, %v906
    %v914 = vmul.f32 %v706, %v906
    %v915 = vmul.f32 %v707, %v906
    %v916 = vmul.f32 %v708, %v906
    %v917 = vmul.f32 %v709, %v906
    %v918 = vmul.f32 %v710, %v906
    %v919 = vmul.f32 %v711, %v906
    %v920 = vmul.f32 %v712, %v906
    %v921 = vmul.f32 %v713, %v906
    %v922 = vmul.f32 %v714, %v906
    %v923 = vmul.f32 %v715, %v906
    %v924 = vmul.f32 %v716, %v906
    %v925 = vmul.f32 %v717, %v906
    %v926 = vmul.f32 %v718, %v906
    %v927 = vmul.f32 %v719, %v906
    %v928 = vmul.f32 %v720, %v906
    %v929 = vmul.f32 %v721, %v906
    %v930 = vmul.f32 %v722, %v906
    %v931 = vmul.f32 %v723, %v906
    %v932 = vmul.f32 %v724, %v906
    %v933 = vmul.f32 %v725, %v906
    %v934 = vmul.f32 %v726, %v906
    %v935 = vmul.f32 %v727, %v906
    %v936 = vmul.f32 %v728, %v906
    %v937 = vmul.f32 %v729, %v906
    %v938 = vmul.f32 %v730, %v906
    %v939 = vmul.f32 %v731, %v906
    %v940 = vmul.f32 %v732, %v906
    %v941 = vmul.f32 %v733, %v906
    %v942 = vmul.f32 %v734, %v906
    %v943 = vmul.f32 %v735, %v906
    %v944 = vmul.f32 %v736, %v906
    %v945 = vmul.f32 %v737, %v906
    %v946 = vmul.f32 %v738, %v906
    %v947 = vmul.f32 %v739, %v906
    %v948 = vmul.f32 %v740, %v906
    %v949 = vmul.f32 %v741, %v906
    %v950 = vmul.f32 %v742, %v906
    %v951 = vmul.f32 %v743, %v906
    %v952 = vmul.f32 %v744, %v906
    %v953 = vmul.f32 %v745, %v906
    %v954 = vmul.f32 %v746, %v906
    %v955 = vmul.f32 %v747, %v906
    %v956 = vmul.f32 %v748, %v906
    %v957 = vmul.f32 %v749, %v906
    %v958 = vmul.f32 %v750, %v906
    %v959 = vmul.f32 %v751, %v906
    %v960 = vmul.f32 %v752, %v906
    %v961 = vmul.f32 %v753, %v906
    %v962 = vmul.f32 %v754, %v906
    %v963 = vmul.f32 %v755, %v906
    %v964 = vmul.f32 %v756, %v906
    %v965 = vmul.f32 %v757, %v906
    %v966 = vmul.f32 %v758, %v906
    %v967 = vmul.f32 %v759, %v906
    %v968 = vmul.f32 %v760, %v906
    %v969 = vmul.f32 %v761, %v906
    %v970 = vmul.f32 %v762, %v906
    %v971 = vmul.f32 %v763, %v906
    %v972 = vld [vmem:[%s3] sm:$0x1]
    %v974 = vlaneseq
    %v975 = vshrl.u32 %v974, 7
    %v976 = vsub.s32 0, %v975
    %v977 = vrot.slane %v972, %v976
    %v979 = vadd.f32 %v908, %v977
    %v980 = vadd.f32 %v909, %v977
    %v981 = vadd.f32 %v910, %v977
    %v982 = vadd.f32 %v911, %v977
    %v983 = vadd.f32 %v912, %v977
    %v984 = vadd.f32 %v913, %v977
    %v985 = vadd.f32 %v914, %v977
    %v986 = vadd.f32 %v915, %v977
    %v987 = vadd.f32 %v916, %v977
    %v988 = vadd.f32 %v917, %v977
    %v989 = vadd.f32 %v918, %v977
    %v990 = vadd.f32 %v919, %v977
    %v991 = vadd.f32 %v920, %v977
    %v992 = vadd.f32 %v921, %v977
    %v993 = vadd.f32 %v922, %v977
    %v994 = vadd.f32 %v923, %v977
    %v995 = vadd.f32 %v924, %v977
    %v996 = vadd.f32 %v925, %v977
    %v997 = vadd.f32 %v926, %v977
    %v998 = vadd.f32 %v927, %v977
    %v999 = vadd.f32 %v928, %v977
    %v1000 = vadd.f32 %v929, %v977
    %v1001 = vadd.f32 %v930, %v977
    %v1002 = vadd.f32 %v931, %v977
    %v1003 = vadd.f32 %v932, %v977
    %v1004 = vadd.f32 %v933, %v977
    %v1005 = vadd.f32 %v934, %v977
    %v1006 = vadd.f32 %v935, %v977
    %v1007 = vadd.f32 %v936, %v977
    %v1008 = vadd.f32 %v937, %v977
    %v1009 = vadd.f32 %v938, %v977
    %v1010 = vadd.f32 %v939, %v977
    %v1011 = vadd.f32 %v940, %v977
    %v1012 = vadd.f32 %v941, %v977
    %v1013 = vadd.f32 %v942, %v977
    %v1014 = vadd.f32 %v943, %v977
    %v1015 = vadd.f32 %v944, %v977
    %v1016 = vadd.f32 %v945, %v977
    %v1017 = vadd.f32 %v946, %v977
    %v1018 = vadd.f32 %v947, %v977
    %v1019 = vadd.f32 %v948, %v977
    %v1020 = vadd.f32 %v949, %v977
    %v1021 = vadd.f32 %v950, %v977
    %v1022 = vadd.f32 %v951, %v977
    %v1023 = vadd.f32 %v952, %v977
    %v1024 = vadd.f32 %v953, %v977
    %v1025 = vadd.f32 %v954, %v977
    %v1026 = vadd.f32 %v955, %v977
    %v1027 = vadd.f32 %v956, %v977
    %v1028 = vadd.f32 %v957, %v977
    %v1029 = vadd.f32 %v958, %v977
    %v1030 = vadd.f32 %v959, %v977
    %v1031 = vadd.f32 %v960, %v977
    %v1032 = vadd.f32 %v961, %v977
    %v1033 = vadd.f32 %v962, %v977
    %v1034 = vadd.f32 %v963, %v977
    %v1035 = vadd.f32 %v964, %v977
    %v1036 = vadd.f32 %v965, %v977
    %v1037 = vadd.f32 %v966, %v977
    %v1038 = vadd.f32 %v967, %v977
    %v1039 = vadd.f32 %v968, %v977
    %v1040 = vadd.f32 %v969, %v977
    %v1041 = vadd.f32 %v970, %v977
    %v1042 = vadd.f32 %v971, %v977
    %v1043 = vmax.f32 %v979, 0.0
    %v1044 = vmax.f32 %v980, 0.0
    %v1045 = vmax.f32 %v981, 0.0
    %v1046 = vmax.f32 %v982, 0.0
    %v1047 = vmax.f32 %v983, 0.0
    %v1048 = vmax.f32 %v984, 0.0
    %v1049 = vmax.f32 %v985, 0.0
    %v1050 = vmax.f32 %v986, 0.0
    %v1051 = vmax.f32 %v987, 0.0
    %v1052 = vmax.f32 %v988, 0.0
    %v1053 = vmax.f32 %v989, 0.0
    %v1054 = vmax.f32 %v990, 0.0
    %v1055 = vmax.f32 %v991, 0.0
    %v1056 = vmax.f32 %v992, 0.0
    %v1057 = vmax.f32 %v993, 0.0
    %v1058 = vmax.f32 %v994, 0.0
    %v1059 = vmax.f32 %v995, 0.0
    %v1060 = vmax.f32 %v996, 0.0
    %v1061 = vmax.f32 %v997, 0.0
    %v1062 = vmax.f32 %v998, 0.0
    %v1063 = vmax.f32 %v999, 0.0
    %v1064 = vmax.f32 %v1000, 0.0
    %v1065 = vmax.f32 %v1001, 0.0
    %v1066 = vmax.f32 %v1002, 0.0
    %v1067 = vmax.f32 %v1003, 0.0
    %v1068 = vmax.f32 %v1004, 0.0
    %v1069 = vmax.f32 %v1005, 0.0
    %v1070 = vmax.f32 %v1006, 0.0
    %v1071 = vmax.f32 %v1007, 0.0
    %v1072 = vmax.f32 %v1008, 0.0
    %v1073 = vmax.f32 %v1009, 0.0
    %v1074 = vmax.f32 %v1010, 0.0
    %v1075 = vmax.f32 %v1011, 0.0
    %v1076 = vmax.f32 %v1012, 0.0
    %v1077 = vmax.f32 %v1013, 0.0
    %v1078 = vmax.f32 %v1014, 0.0
    %v1079 = vmax.f32 %v1015, 0.0
    %v1080 = vmax.f32 %v1016, 0.0
    %v1081 = vmax.f32 %v1017, 0.0
    %v1082 = vmax.f32 %v1018, 0.0
    %v1083 = vmax.f32 %v1019, 0.0
    %v1084 = vmax.f32 %v1020, 0.0
    %v1085 = vmax.f32 %v1021, 0.0
    %v1086 = vmax.f32 %v1022, 0.0
    %v1087 = vmax.f32 %v1023, 0.0
    %v1088 = vmax.f32 %v1024, 0.0
    %v1089 = vmax.f32 %v1025, 0.0
    %v1090 = vmax.f32 %v1026, 0.0
    %v1091 = vmax.f32 %v1027, 0.0
    %v1092 = vmax.f32 %v1028, 0.0
    %v1093 = vmax.f32 %v1029, 0.0
    %v1094 = vmax.f32 %v1030, 0.0
    %v1095 = vmax.f32 %v1031, 0.0
    %v1096 = vmax.f32 %v1032, 0.0
    %v1097 = vmax.f32 %v1033, 0.0
    %v1098 = vmax.f32 %v1034, 0.0
    %v1099 = vmax.f32 %v1035, 0.0
    %v1100 = vmax.f32 %v1036, 0.0
    %v1101 = vmax.f32 %v1037, 0.0
    %v1102 = vmax.f32 %v1038, 0.0
    %v1103 = vmax.f32 %v1039, 0.0
    %v1104 = vmax.f32 %v1040, 0.0
    %v1105 = vmax.f32 %v1041, 0.0
    %v1106 = vmax.f32 %v1042, 0.0
    %v1107 = vadd.f32 %v1043, %v1044
    %v1108 = vadd.f32 %v1107, %v1045
    %v1109 = vadd.f32 %v1108, %v1046
    %v1110 = vadd.f32 %v1109, %v1047
    %v1111 = vadd.f32 %v1110, %v1048
    %v1112 = vadd.f32 %v1111, %v1049
    %v1113 = vadd.f32 %v1112, %v1050
    %v1114 = vadd.f32 %v1113, %v1051
    %v1115 = vadd.f32 %v1114, %v1052
    %v1116 = vadd.f32 %v1115, %v1053
    %v1117 = vadd.f32 %v1116, %v1054
    %v1118 = vadd.f32 %v1117, %v1055
    %v1119 = vadd.f32 %v1118, %v1056
    %v1120 = vadd.f32 %v1119, %v1057
    %v1121 = vadd.f32 %v1120, %v1058
    %v1122 = vadd.f32 %v1121, %v1059
    %v1123 = vadd.f32 %v1122, %v1060
    %v1124 = vadd.f32 %v1123, %v1061
    %v1125 = vadd.f32 %v1124, %v1062
    %v1126 = vadd.f32 %v1125, %v1063
    %v1127 = vadd.f32 %v1126, %v1064
    %v1128 = vadd.f32 %v1127, %v1065
    %v1129 = vadd.f32 %v1128, %v1066
    %v1130 = vadd.f32 %v1129, %v1067
    %v1131 = vadd.f32 %v1130, %v1068
    %v1132 = vadd.f32 %v1131, %v1069
    %v1133 = vadd.f32 %v1132, %v1070
    %v1134 = vadd.f32 %v1133, %v1071
    %v1135 = vadd.f32 %v1134, %v1072
    %v1136 = vadd.f32 %v1135, %v1073
    %v1137 = vadd.f32 %v1136, %v1074
    %v1138 = vrot.slane %v1137, 4
    %v1139 = vadd.f32 %v1137, %v1138
    %v1140 = vrot.slane %v1139, 2
    %v1141 = vadd.f32 %v1139, %v1140
    %v1142 = vrot.slane %v1141, 1
    %v1143 = vadd.f32 %v1141, %v1142
    %v1144 = vadd.f32 %v1075, %v1076
    %v1145 = vadd.f32 %v1144, %v1077
    %v1146 = vadd.f32 %v1145, %v1078
    %v1147 = vadd.f32 %v1146, %v1079
    %v1148 = vadd.f32 %v1147, %v1080
    %v1149 = vadd.f32 %v1148, %v1081
    %v1150 = vadd.f32 %v1149, %v1082
    %v1151 = vadd.f32 %v1150, %v1083
    %v1152 = vadd.f32 %v1151, %v1084
    %v1153 = vadd.f32 %v1152, %v1085
    %v1154 = vadd.f32 %v1153, %v1086
    %v1155 = vadd.f32 %v1154, %v1087
    %v1156 = vadd.f32 %v1155, %v1088
    %v1157 = vadd.f32 %v1156, %v1089
    %v1158 = vadd.f32 %v1157, %v1090
    %v1159 = vadd.f32 %v1158, %v1091
    %v1160 = vadd.f32 %v1159, %v1092
    %v1161 = vadd.f32 %v1160, %v1093
    %v1162 = vadd.f32 %v1161, %v1094
    %v1163 = vadd.f32 %v1162, %v1095
    %v1164 = vadd.f32 %v1163, %v1096
    %v1165 = vadd.f32 %v1164, %v1097
    %v1166 = vadd.f32 %v1165, %v1098
    %v1167 = vadd.f32 %v1166, %v1099
    %v1168 = vadd.f32 %v1167, %v1100
    %v1169 = vadd.f32 %v1168, %v1101
    %v1170 = vadd.f32 %v1169, %v1102
    %v1171 = vadd.f32 %v1170, %v1103
    %v1172 = vadd.f32 %v1171, %v1104
    %v1173 = vadd.f32 %v1172, %v1105
    %v1174 = vadd.f32 %v1173, %v1106
    %v1175 = vrot.slane %v1174, 4
    %v1176 = vadd.f32 %v1174, %v1175
    %v1177 = vrot.slane %v1176, 2
    %v1178 = vadd.f32 %v1176, %v1177
    %v1179 = vrot.slane %v1178, 1
    %v1180 = vadd.f32 %v1178, %v1179
    %v1181 = vmul.f32 %v1143, 0.00390625
    %v1182 = vmul.f32 %v1180, 0.00390625
    %vm1185 = vcmask 1041409
    %v1186 = vsel %vm1185, %v1182, %v1181
    %1188 = vst [vmem:[#allocation2] sm:$0x3] %v1186
    %v1253 = vcombine.high %v1043, %v1043
    %v1255 = vunpack.c.l.s4 1983009808
    %v1256 = vunpack.c.0.s8 %v1255
    %v1257 = vlaneseq
    %v1258 = vshrl.u32 %v1257, 7
    %v1259 = vsub.s32 %v1256, %v1258
    %v1260 = vrot.slane %v1043, %v1259
    %v1262 = vunpack.c.l.s4 1983009808
    %v1263 = vunpack.c.0.s8 %v1262
    %v1264 = vlaneseq
    %v1265 = vshrl.u32 %v1264, 7
    %v1266 = vsub.s32 %v1263, %v1265
    %v1267 = vrot.slane %v1253, %v1266
    %v1268 = vcombine.high %v1260, %v1260
    %v1269 = vcombine.high %v1267, %v1267
    %v1270 = vcombine.high %v1044, %v1044
    %v1272 = vunpack.c.l.s4 1983009808
    %v1273 = vunpack.c.0.s8 %v1272
    %v1274 = vlaneseq
    %v1275 = vshrl.u32 %v1274, 7
    %v1276 = vsub.s32 %v1273, %v1275
    %v1277 = vrot.slane %v1044, %v1276
    %v1279 = vunpack.c.l.s4 1983009808
    %v1280 = vunpack.c.0.s8 %v1279
    %v1281 = vlaneseq
    %v1282 = vshrl.u32 %v1281, 7
    %v1283 = vsub.s32 %v1280, %v1282
    %v1284 = vrot.slane %v1270, %v1283
    %v1285 = vcombine.high %v1277, %v1277
    %v1286 = vcombine.high %v1284, %v1284
    %v1287 = vcombine.high %v1045, %v1045
    %v1289 = vunpack.c.l.s4 1983009808
    %v1290 = vunpack.c.0.s8 %v1289
    %v1291 = vlaneseq
    %v1292 = vshrl.u32 %v1291, 7
    %v1293 = vsub.s32 %v1290, %v1292
    %v1294 = vrot.slane %v1045, %v1293
    %v1296 = vunpack.c.l.s4 1983009808
    %v1297 = vunpack.c.0.s8 %v1296
    %v1298 = vlaneseq
    %v1299 = vshrl.u32 %v1298, 7
    %v1300 = vsub.s32 %v1297, %v1299
    %v1301 = vrot.slane %v1287, %v1300
    %v1302 = vcombine.high %v1294, %v1294
    %v1303 = vcombine.high %v1301, %v1301
    %v1304 = vcombine.high %v1046, %v1046
    %v1306 = vunpack.c.l.s4 1983009808
    %v1307 = vunpack.c.0.s8 %v1306
    %v1308 = vlaneseq
    %v1309 = vshrl.u32 %v1308, 7
    %v1310 = vsub.s32 %v1307, %v1309
    %v1311 = vrot.slane %v1046, %v1310
    %v1313 = vunpack.c.l.s4 1983009808
    %v1314 = vunpack.c.0.s8 %v1313
    %v1315 = vlaneseq
    %v1316 = vshrl.u32 %v1315, 7
    %v1317 = vsub.s32 %v1314, %v1316
    %v1318 = vrot.slane %v1304, %v1317
    %v1319 = vcombine.high %v1311, %v1311
    %v1320 = vcombine.high %v1318, %v1318
    %v1321 = vcombine.high %v1047, %v1047
    %v1323 = vunpack.c.l.s4 1983009808
    %v1324 = vunpack.c.0.s8 %v1323
    %v1325 = vlaneseq
    %v1326 = vshrl.u32 %v1325, 7
    %v1327 = vsub.s32 %v1324, %v1326
    %v1328 = vrot.slane %v1047, %v1327
    %v1330 = vunpack.c.l.s4 1983009808
    %v1331 = vunpack.c.0.s8 %v1330
    %v1332 = vlaneseq
    %v1333 = vshrl.u32 %v1332, 7
    %v1334 = vsub.s32 %v1331, %v1333
    %v1335 = vrot.slane %v1321, %v1334
    %v1336 = vcombine.high %v1328, %v1328
    %v1337 = vcombine.high %v1335, %v1335
    %v1338 = vcombine.high %v1048, %v1048
    %v1340 = vunpack.c.l.s4 1983009808
    %v1341 = vunpack.c.0.s8 %v1340
    %v1342 = vlaneseq
    %v1343 = vshrl.u32 %v1342, 7
    %v1344 = vsub.s32 %v1341, %v1343
    %v1345 = vrot.slane %v1048, %v1344
    %v1347 = vunpack.c.l.s4 1983009808
    %v1348 = vunpack.c.0.s8 %v1347
    %v1349 = vlaneseq
    %v1350 = vshrl.u32 %v1349, 7
    %v1351 = vsub.s32 %v1348, %v1350
    %v1352 = vrot.slane %v1338, %v1351
    %v1353 = vcombine.high %v1345, %v1345
    %v1354 = vcombine.high %v1352, %v1352
    %v1355 = vcombine.high %v1049, %v1049
    %v1357 = vunpack.c.l.s4 1983009808
    %v1358 = vunpack.c.0.s8 %v1357
    %v1359 = vlaneseq
    %v1360 = vshrl.u32 %v1359, 7
    %v1361 = vsub.s32 %v1358, %v1360
    %v1362 = vrot.slane %v1049, %v1361
    %v1364 = vunpack.c.l.s4 1983009808
    %v1365 = vunpack.c.0.s8 %v1364
    %v1366 = vlaneseq
    %v1367 = vshrl.u32 %v1366, 7
    %v1368 = vsub.s32 %v1365, %v1367
    %v1369 = vrot.slane %v1355, %v1368
    %v1370 = vcombine.high %v1362, %v1362
    %v1371 = vcombine.high %v1369, %v1369
    %v1372 = vcombine.high %v1050, %v1050
    %v1374 = vunpack.c.l.s4 1983009808
    %v1375 = vunpack.c.0.s8 %v1374
    %v1376 = vlaneseq
    %v1377 = vshrl.u32 %v1376, 7
    %v1378 = vsub.s32 %v1375, %v1377
    %v1379 = vrot.slane %v1050, %v1378
    %v1381 = vunpack.c.l.s4 1983009808
    %v1382 = vunpack.c.0.s8 %v1381
    %v1383 = vlaneseq
    %v1384 = vshrl.u32 %v1383, 7
    %v1385 = vsub.s32 %v1382, %v1384
    %v1386 = vrot.slane %v1372, %v1385
    %v1387 = vcombine.high %v1379, %v1379
    %v1388 = vcombine.high %v1386, %v1386
    %v1389 = vcombine.high %v1051, %v1051
    %v1391 = vunpack.c.l.s4 1983009808
    %v1392 = vunpack.c.0.s8 %v1391
    %v1393 = vlaneseq
    %v1394 = vshrl.u32 %v1393, 7
    %v1395 = vsub.s32 %v1392, %v1394
    %v1396 = vrot.slane %v1051, %v1395
    %v1398 = vunpack.c.l.s4 1983009808
    %v1399 = vunpack.c.0.s8 %v1398
    %v1400 = vlaneseq
    %v1401 = vshrl.u32 %v1400, 7
    %v1402 = vsub.s32 %v1399, %v1401
    %v1403 = vrot.slane %v1389, %v1402
    %v1404 = vcombine.high %v1396, %v1396
    %v1405 = vcombine.high %v1403, %v1403
    %v1406 = vcombine.high %v1052, %v1052
    %v1408 = vunpack.c.l.s4 1983009808
    %v1409 = vunpack.c.0.s8 %v1408
    %v1410 = vlaneseq
    %v1411 = vshrl.u32 %v1410, 7
    %v1412 = vsub.s32 %v1409, %v1411
    %v1413 = vrot.slane %v1052, %v1412
    %v1415 = vunpack.c.l.s4 1983009808
    %v1416 = vunpack.c.0.s8 %v1415
    %v1417 = vlaneseq
    %v1418 = vshrl.u32 %v1417, 7
    %v1419 = vsub.s32 %v1416, %v1418
    %v1420 = vrot.slane %v1406, %v1419
    %v1421 = vcombine.high %v1413, %v1413
    %v1422 = vcombine.high %v1420, %v1420
    %v1423 = vcombine.high %v1053, %v1053
    %v1425 = vunpack.c.l.s4 1983009808
    %v1426 = vunpack.c.0.s8 %v1425
    %v1427 = vlaneseq
    %v1428 = vshrl.u32 %v1427, 7
    %v1429 = vsub.s32 %v1426, %v1428
    %v1430 = vrot.slane %v1053, %v1429
    %v1432 = vunpack.c.l.s4 1983009808
    %v1433 = vunpack.c.0.s8 %v1432
    %v1434 = vlaneseq
    %v1435 = vshrl.u32 %v1434, 7
    %v1436 = vsub.s32 %v1433, %v1435
    %v1437 = vrot.slane %v1423, %v1436
    %v1438 = vcombine.high %v1430, %v1430
    %v1439 = vcombine.high %v1437, %v1437
    %v1440 = vcombine.high %v1054, %v1054
    %v1442 = vunpack.c.l.s4 1983009808
    %v1443 = vunpack.c.0.s8 %v1442
    %v1444 = vlaneseq
    %v1445 = vshrl.u32 %v1444, 7
    %v1446 = vsub.s32 %v1443, %v1445
    %v1447 = vrot.slane %v1054, %v1446
    %v1449 = vunpack.c.l.s4 1983009808
    %v1450 = vunpack.c.0.s8 %v1449
    %v1451 = vlaneseq
    %v1452 = vshrl.u32 %v1451, 7
    %v1453 = vsub.s32 %v1450, %v1452
    %v1454 = vrot.slane %v1440, %v1453
    %v1455 = vcombine.high %v1447, %v1447
    %v1456 = vcombine.high %v1454, %v1454
    %v1457 = vcombine.high %v1055, %v1055
    %v1459 = vunpack.c.l.s4 1983009808
    %v1460 = vunpack.c.0.s8 %v1459
    %v1461 = vlaneseq
    %v1462 = vshrl.u32 %v1461, 7
    %v1463 = vsub.s32 %v1460, %v1462
    %v1464 = vrot.slane %v1055, %v1463
    %v1466 = vunpack.c.l.s4 1983009808
    %v1467 = vunpack.c.0.s8 %v1466
    %v1468 = vlaneseq
    %v1469 = vshrl.u32 %v1468, 7
    %v1470 = vsub.s32 %v1467, %v1469
    %v1471 = vrot.slane %v1457, %v1470
    %v1472 = vcombine.high %v1464, %v1464
    %v1473 = vcombine.high %v1471, %v1471
    %v1474 = vcombine.high %v1056, %v1056
    %v1476 = vunpack.c.l.s4 1983009808
    %v1477 = vunpack.c.0.s8 %v1476
    %v1478 = vlaneseq
    %v1479 = vshrl.u32 %v1478, 7
    %v1480 = vsub.s32 %v1477, %v1479
    %v1481 = vrot.slane %v1056, %v1480
    %v1483 = vunpack.c.l.s4 1983009808
    %v1484 = vunpack.c.0.s8 %v1483
    %v1485 = vlaneseq
    %v1486 = vshrl.u32 %v1485, 7
    %v1487 = vsub.s32 %v1484, %v1486
    %v1488 = vrot.slane %v1474, %v1487
    %v1489 = vcombine.high %v1481, %v1481
    %v1490 = vcombine.high %v1488, %v1488
    %v1491 = vcombine.high %v1057, %v1057
    %v1493 = vunpack.c.l.s4 1983009808
    %v1494 = vunpack.c.0.s8 %v1493
    %v1495 = vlaneseq
    %v1496 = vshrl.u32 %v1495, 7
    %v1497 = vsub.s32 %v1494, %v1496
    %v1498 = vrot.slane %v1057, %v1497
    %v1500 = vunpack.c.l.s4 1983009808
    %v1501 = vunpack.c.0.s8 %v1500
    %v1502 = vlaneseq
    %v1503 = vshrl.u32 %v1502, 7
    %v1504 = vsub.s32 %v1501, %v1503
    %v1505 = vrot.slane %v1491, %v1504
    %v1506 = vcombine.high %v1498, %v1498
    %v1507 = vcombine.high %v1505, %v1505
    %v1508 = vcombine.high %v1058, %v1058
    %v1510 = vunpack.c.l.s4 1983009808
    %v1511 = vunpack.c.0.s8 %v1510
    %v1512 = vlaneseq
    %v1513 = vshrl.u32 %v1512, 7
    %v1514 = vsub.s32 %v1511, %v1513
    %v1515 = vrot.slane %v1058, %v1514
    %v1517 = vunpack.c.l.s4 1983009808
    %v1518 = vunpack.c.0.s8 %v1517
    %v1519 = vlaneseq
    %v1520 = vshrl.u32 %v1519, 7
    %v1521 = vsub.s32 %v1518, %v1520
    %v1522 = vrot.slane %v1508, %v1521
    %v1523 = vcombine.high %v1515, %v1515
    %v1524 = vcombine.high %v1522, %v1522
    %v1525 = vcombine.high %v1059, %v1059
    %v1527 = vunpack.c.l.s4 1983009808
    %v1528 = vunpack.c.0.s8 %v1527
    %v1529 = vlaneseq
    %v1530 = vshrl.u32 %v1529, 7
    %v1531 = vsub.s32 %v1528, %v1530
    %v1532 = vrot.slane %v1059, %v1531
    %v1534 = vunpack.c.l.s4 1983009808
    %v1535 = vunpack.c.0.s8 %v1534
    %v1536 = vlaneseq
    %v1537 = vshrl.u32 %v1536, 7
    %v1538 = vsub.s32 %v1535, %v1537
    %v1539 = vrot.slane %v1525, %v1538
    %v1540 = vcombine.high %v1532, %v1532
    %v1541 = vcombine.high %v1539, %v1539
    %v1542 = vcombine.high %v1060, %v1060
    %v1544 = vunpack.c.l.s4 1983009808
    %v1545 = vunpack.c.0.s8 %v1544
    %v1546 = vlaneseq
    %v1547 = vshrl.u32 %v1546, 7
    %v1548 = vsub.s32 %v1545, %v1547
    %v1549 = vrot.slane %v1060, %v1548
    %v1551 = vunpack.c.l.s4 1983009808
    %v1552 = vunpack.c.0.s8 %v1551
    %v1553 = vlaneseq
    %v1554 = vshrl.u32 %v1553, 7
    %v1555 = vsub.s32 %v1552, %v1554
    %v1556 = vrot.slane %v1542, %v1555
    %v1557 = vcombine.high %v1549, %v1549
    %v1558 = vcombine.high %v1556, %v1556
    %v1559 = vcombine.high %v1061, %v1061
    %v1561 = vunpack.c.l.s4 1983009808
    %v1562 = vunpack.c.0.s8 %v1561
    %v1563 = vlaneseq
    %v1564 = vshrl.u32 %v1563, 7
    %v1565 = vsub.s32 %v1562, %v1564
    %v1566 = vrot.slane %v1061, %v1565
    %v1568 = vunpack.c.l.s4 1983009808
    %v1569 = vunpack.c.0.s8 %v1568
    %v1570 = vlaneseq
    %v1571 = vshrl.u32 %v1570, 7
    %v1572 = vsub.s32 %v1569, %v1571
    %v1573 = vrot.slane %v1559, %v1572
    %v1574 = vcombine.high %v1566, %v1566
    %v1575 = vcombine.high %v1573, %v1573
    %v1576 = vcombine.high %v1062, %v1062
    %v1578 = vunpack.c.l.s4 1983009808
    %v1579 = vunpack.c.0.s8 %v1578
    %v1580 = vlaneseq
    %v1581 = vshrl.u32 %v1580, 7
    %v1582 = vsub.s32 %v1579, %v1581
    %v1583 = vrot.slane %v1062, %v1582
    %v1585 = vunpack.c.l.s4 1983009808
    %v1586 = vunpack.c.0.s8 %v1585
    %v1587 = vlaneseq
    %v1588 = vshrl.u32 %v1587, 7
    %v1589 = vsub.s32 %v1586, %v1588
    %v1590 = vrot.slane %v1576, %v1589
    %v1591 = vcombine.high %v1583, %v1583
    %v1592 = vcombine.high %v1590, %v1590
    %v1593 = vcombine.high %v1063, %v1063
    %v1595 = vunpack.c.l.s4 1983009808
    %v1596 = vunpack.c.0.s8 %v1595
    %v1597 = vlaneseq
    %v1598 = vshrl.u32 %v1597, 7
    %v1599 = vsub.s32 %v1596, %v1598
    %v1600 = vrot.slane %v1063, %v1599
    %v1602 = vunpack.c.l.s4 1983009808
    %v1603 = vunpack.c.0.s8 %v1602
    %v1604 = vlaneseq
    %v1605 = vshrl.u32 %v1604, 7
    %v1606 = vsub.s32 %v1603, %v1605
    %v1607 = vrot.slane %v1593, %v1606
    %v1608 = vcombine.high %v1600, %v1600
    %v1609 = vcombine.high %v1607, %v1607
    %v1610 = vcombine.high %v1064, %v1064
    %v1612 = vunpack.c.l.s4 1983009808
    %v1613 = vunpack.c.0.s8 %v1612
    %v1614 = vlaneseq
    %v1615 = vshrl.u32 %v1614, 7
    %v1616 = vsub.s32 %v1613, %v1615
    %v1617 = vrot.slane %v1064, %v1616
    %v1619 = vunpack.c.l.s4 1983009808
    %v1620 = vunpack.c.0.s8 %v1619
    %v1621 = vlaneseq
    %v1622 = vshrl.u32 %v1621, 7
    %v1623 = vsub.s32 %v1620, %v1622
    %v1624 = vrot.slane %v1610, %v1623
    %v1625 = vcombine.high %v1617, %v1617
    %v1626 = vcombine.high %v1624, %v1624
    %v1627 = vcombine.high %v1065, %v1065
    %v1629 = vunpack.c.l.s4 1983009808
    %v1630 = vunpack.c.0.s8 %v1629
    %v1631 = vlaneseq
    %v1632 = vshrl.u32 %v1631, 7
    %v1633 = vsub.s32 %v1630, %v1632
    %v1634 = vrot.slane %v1065, %v1633
    %v1636 = vunpack.c.l.s4 1983009808
    %v1637 = vunpack.c.0.s8 %v1636
    %v1638 = vlaneseq
    %v1639 = vshrl.u32 %v1638, 7
    %v1640 = vsub.s32 %v1637, %v1639
    %v1641 = vrot.slane %v1627, %v1640
    %v1642 = vcombine.high %v1634, %v1634
    %v1643 = vcombine.high %v1641, %v1641
    %v1644 = vcombine.high %v1066, %v1066
    %v1646 = vunpack.c.l.s4 1983009808
    %v1647 = vunpack.c.0.s8 %v1646
    %v1648 = vlaneseq
    %v1649 = vshrl.u32 %v1648, 7
    %v1650 = vsub.s32 %v1647, %v1649
    %v1651 = vrot.slane %v1066, %v1650
    %v1653 = vunpack.c.l.s4 1983009808
    %v1654 = vunpack.c.0.s8 %v1653
    %v1655 = vlaneseq
    %v1656 = vshrl.u32 %v1655, 7
    %v1657 = vsub.s32 %v1654, %v1656
    %v1658 = vrot.slane %v1644, %v1657
    %v1659 = vcombine.high %v1651, %v1651
    %v1660 = vcombine.high %v1658, %v1658
    %v1661 = vcombine.high %v1067, %v1067
    %v1663 = vunpack.c.l.s4 1983009808
    %v1664 = vunpack.c.0.s8 %v1663
    %v1665 = vlaneseq
    %v1666 = vshrl.u32 %v1665, 7
    %v1667 = vsub.s32 %v1664, %v1666
    %v1668 = vrot.slane %v1067, %v1667
    %v1670 = vunpack.c.l.s4 1983009808
    %v1671 = vunpack.c.0.s8 %v1670
    %v1672 = vlaneseq
    %v1673 = vshrl.u32 %v1672, 7
    %v1674 = vsub.s32 %v1671, %v1673
    %v1675 = vrot.slane %v1661, %v1674
    %v1676 = vcombine.high %v1668, %v1668
    %v1677 = vcombine.high %v1675, %v1675
    %v1678 = vcombine.high %v1068, %v1068
    %v1680 = vunpack.c.l.s4 1983009808
    %v1681 = vunpack.c.0.s8 %v1680
    %v1682 = vlaneseq
    %v1683 = vshrl.u32 %v1682, 7
    %v1684 = vsub.s32 %v1681, %v1683
    %v1685 = vrot.slane %v1068, %v1684
    %v1687 = vunpack.c.l.s4 1983009808
    %v1688 = vunpack.c.0.s8 %v1687
    %v1689 = vlaneseq
    %v1690 = vshrl.u32 %v1689, 7
    %v1691 = vsub.s32 %v1688, %v1690
    %v1692 = vrot.slane %v1678, %v1691
    %v1693 = vcombine.high %v1685, %v1685
    %v1694 = vcombine.high %v1692, %v1692
    %v1695 = vcombine.high %v1069, %v1069
    %v1697 = vunpack.c.l.s4 1983009808
    %v1698 = vunpack.c.0.s8 %v1697
    %v1699 = vlaneseq
    %v1700 = vshrl.u32 %v1699, 7
    %v1701 = vsub.s32 %v1698, %v1700
    %v1702 = vrot.slane %v1069, %v1701
    %v1704 = vunpack.c.l.s4 1983009808
    %v1705 = vunpack.c.0.s8 %v1704
    %v1706 = vlaneseq
    %v1707 = vshrl.u32 %v1706, 7
    %v1708 = vsub.s32 %v1705, %v1707
    %v1709 = vrot.slane %v1695, %v1708
    %v1710 = vcombine.high %v1702, %v1702
    %v1711 = vcombine.high %v1709, %v1709
    %v1712 = vcombine.high %v1070, %v1070
    %v1714 = vunpack.c.l.s4 1983009808
    %v1715 = vunpack.c.0.s8 %v1714
    %v1716 = vlaneseq
    %v1717 = vshrl.u32 %v1716, 7
    %v1718 = vsub.s32 %v1715, %v1717
    %v1719 = vrot.slane %v1070, %v1718
    %v1721 = vunpack.c.l.s4 1983009808
    %v1722 = vunpack.c.0.s8 %v1721
    %v1723 = vlaneseq
    %v1724 = vshrl.u32 %v1723, 7
    %v1725 = vsub.s32 %v1722, %v1724
    %v1726 = vrot.slane %v1712, %v1725
    %v1727 = vcombine.high %v1719, %v1719
    %v1728 = vcombine.high %v1726, %v1726
    %v1729 = vcombine.high %v1071, %v1071
    %v1731 = vunpack.c.l.s4 1983009808
    %v1732 = vunpack.c.0.s8 %v1731
    %v1733 = vlaneseq
    %v1734 = vshrl.u32 %v1733, 7
    %v1735 = vsub.s32 %v1732, %v1734
    %v1736 = vrot.slane %v1071, %v1735
    %v1738 = vunpack.c.l.s4 1983009808
    %v1739 = vunpack.c.0.s8 %v1738
    %v1740 = vlaneseq
    %v1741 = vshrl.u32 %v1740, 7
    %v1742 = vsub.s32 %v1739, %v1741
    %v1743 = vrot.slane %v1729, %v1742
    %v1744 = vcombine.high %v1736, %v1736
    %v1745 = vcombine.high %v1743, %v1743
    %v1746 = vcombine.high %v1072, %v1072
    %v1748 = vunpack.c.l.s4 1983009808
    %v1749 = vunpack.c.0.s8 %v1748
    %v1750 = vlaneseq
    %v1751 = vshrl.u32 %v1750, 7
    %v1752 = vsub.s32 %v1749, %v1751
    %v1753 = vrot.slane %v1072, %v1752
    %v1755 = vunpack.c.l.s4 1983009808
    %v1756 = vunpack.c.0.s8 %v1755
    %v1757 = vlaneseq
    %v1758 = vshrl.u32 %v1757, 7
    %v1759 = vsub.s32 %v1756, %v1758
    %v1760 = vrot.slane %v1746, %v1759
    %v1761 = vcombine.high %v1753, %v1753
    %v1762 = vcombine.high %v1760, %v1760
    %v1763 = vcombine.high %v1073, %v1073
    %v1765 = vunpack.c.l.s4 1983009808
    %v1766 = vunpack.c.0.s8 %v1765
    %v1767 = vlaneseq
    %v1768 = vshrl.u32 %v1767, 7
    %v1769 = vsub.s32 %v1766, %v1768
    %v1770 = vrot.slane %v1073, %v1769
    %v1772 = vunpack.c.l.s4 1983009808
    %v1773 = vunpack.c.0.s8 %v1772
    %v1774 = vlaneseq
    %v1775 = vshrl.u32 %v1774, 7
    %v1776 = vsub.s32 %v1773, %v1775
    %v1777 = vrot.slane %v1763, %v1776
    %v1778 = vcombine.high %v1770, %v1770
    %v1779 = vcombine.high %v1777, %v1777
    %v1780 = vcombine.high %v1074, %v1074
    %v1782 = vunpack.c.l.s4 1983009808
    %v1783 = vunpack.c.0.s8 %v1782
    %v1784 = vlaneseq
    %v1785 = vshrl.u32 %v1784, 7
    %v1786 = vsub.s32 %v1783, %v1785
    %v1787 = vrot.slane %v1074, %v1786
    %v1789 = vunpack.c.l.s4 1983009808
    %v1790 = vunpack.c.0.s8 %v1789
    %v1791 = vlaneseq
    %v1792 = vshrl.u32 %v1791, 7
    %v1793 = vsub.s32 %v1790, %v1792
    %v1794 = vrot.slane %v1780, %v1793
    %v1795 = vcombine.high %v1787, %v1787
    %v1796 = vcombine.high %v1794, %v1794
    %v1797 = vcombine.high %v1075, %v1075
    %v1799 = vunpack.c.l.s4 1983009808
    %v1800 = vunpack.c.0.s8 %v1799
    %v1801 = vlaneseq
    %v1802 = vshrl.u32 %v1801, 7
    %v1803 = vsub.s32 %v1800, %v1802
    %v1804 = vrot.slane %v1075, %v1803
    %v1806 = vunpack.c.l.s4 1983009808
    %v1807 = vunpack.c.0.s8 %v1806
    %v1808 = vlaneseq
    %v1809 = vshrl.u32 %v1808, 7
    %v1810 = vsub.s32 %v1807, %v1809
    %v1811 = vrot.slane %v1797, %v1810
    %v1812 = vcombine.high %v1804, %v1804
    %v1813 = vcombine.high %v1811, %v1811
    %v1814 = vcombine.high %v1076, %v1076
    %v1816 = vunpack.c.l.s4 1983009808
    %v1817 = vunpack.c.0.s8 %v1816
    %v1818 = vlaneseq
    %v1819 = vshrl.u32 %v1818, 7
    %v1820 = vsub.s32 %v1817, %v1819
    %v1821 = vrot.slane %v1076, %v1820
    %v1823 = vunpack.c.l.s4 1983009808
    %v1824 = vunpack.c.0.s8 %v1823
    %v1825 = vlaneseq
    %v1826 = vshrl.u32 %v1825, 7
    %v1827 = vsub.s32 %v1824, %v1826
    %v1828 = vrot.slane %v1814, %v1827
    %v1829 = vcombine.high %v1821, %v1821
    %v1830 = vcombine.high %v1828, %v1828
    %v1831 = vcombine.high %v1077, %v1077
    %v1833 = vunpack.c.l.s4 1983009808
    %v1834 = vunpack.c.0.s8 %v1833
    %v1835 = vlaneseq
    %v1836 = vshrl.u32 %v1835, 7
    %v1837 = vsub.s32 %v1834, %v1836
    %v1838 = vrot.slane %v1077, %v1837
    %v1840 = vunpack.c.l.s4 1983009808
    %v1841 = vunpack.c.0.s8 %v1840
    %v1842 = vlaneseq
    %v1843 = vshrl.u32 %v1842, 7
    %v1844 = vsub.s32 %v1841, %v1843
    %v1845 = vrot.slane %v1831, %v1844
    %v1846 = vcombine.high %v1838, %v1838
    %v1847 = vcombine.high %v1845, %v1845
    %v1848 = vcombine.high %v1078, %v1078
    %v1850 = vunpack.c.l.s4 1983009808
    %v1851 = vunpack.c.0.s8 %v1850
    %v1852 = vlaneseq
    %v1853 = vshrl.u32 %v1852, 7
    %v1854 = vsub.s32 %v1851, %v1853
    %v1855 = vrot.slane %v1078, %v1854
    %v1857 = vunpack.c.l.s4 1983009808
    %v1858 = vunpack.c.0.s8 %v1857
    %v1859 = vlaneseq
    %v1860 = vshrl.u32 %v1859, 7
    %v1861 = vsub.s32 %v1858, %v1860
    %v1862 = vrot.slane %v1848, %v1861
    %v1863 = vcombine.high %v1855, %v1855
    %v1864 = vcombine.high %v1862, %v1862
    %v1865 = vcombine.high %v1079, %v1079
    %v1867 = vunpack.c.l.s4 1983009808
    %v1868 = vunpack.c.0.s8 %v1867
    %v1869 = vlaneseq
    %v1870 = vshrl.u32 %v1869, 7
    %v1871 = vsub.s32 %v1868, %v1870
    %v1872 = vrot.slane %v1079, %v1871
    %v1874 = vunpack.c.l.s4 1983009808
    %v1875 = vunpack.c.0.s8 %v1874
    %v1876 = vlaneseq
    %v1877 = vshrl.u32 %v1876, 7
    %v1878 = vsub.s32 %v1875, %v1877
    %v1879 = vrot.slane %v1865, %v1878
    %v1880 = vcombine.high %v1872, %v1872
    %v1881 = vcombine.high %v1879, %v1879
    %v1882 = vcombine.high %v1080, %v1080
    %v1884 = vunpack.c.l.s4 1983009808
    %v1885 = vunpack.c.0.s8 %v1884
    %v1886 = vlaneseq
    %v1887 = vshrl.u32 %v1886, 7
    %v1888 = vsub.s32 %v1885, %v1887
    %v1889 = vrot.slane %v1080, %v1888
    %v1891 = vunpack.c.l.s4 1983009808
    %v1892 = vunpack.c.0.s8 %v1891
    %v1893 = vlaneseq
    %v1894 = vshrl.u32 %v1893, 7
    %v1895 = vsub.s32 %v1892, %v1894
    %v1896 = vrot.slane %v1882, %v1895
    %v1897 = vcombine.high %v1889, %v1889
    %v1898 = vcombine.high %v1896, %v1896
    %v1899 = vcombine.high %v1081, %v1081
    %v1901 = vunpack.c.l.s4 1983009808
    %v1902 = vunpack.c.0.s8 %v1901
    %v1903 = vlaneseq
    %v1904 = vshrl.u32 %v1903, 7
    %v1905 = vsub.s32 %v1902, %v1904
    %v1906 = vrot.slane %v1081, %v1905
    %v1908 = vunpack.c.l.s4 1983009808
    %v1909 = vunpack.c.0.s8 %v1908
    %v1910 = vlaneseq
    %v1911 = vshrl.u32 %v1910, 7
    %v1912 = vsub.s32 %v1909, %v1911
    %v1913 = vrot.slane %v1899, %v1912
    %v1914 = vcombine.high %v1906, %v1906
    %v1915 = vcombine.high %v1913, %v1913
    %v1916 = vcombine.high %v1082, %v1082
    %v1918 = vunpack.c.l.s4 1983009808
    %v1919 = vunpack.c.0.s8 %v1918
    %v1920 = vlaneseq
    %v1921 = vshrl.u32 %v1920, 7
    %v1922 = vsub.s32 %v1919, %v1921
    %v1923 = vrot.slane %v1082, %v1922
    %v1925 = vunpack.c.l.s4 1983009808
    %v1926 = vunpack.c.0.s8 %v1925
    %v1927 = vlaneseq
    %v1928 = vshrl.u32 %v1927, 7
    %v1929 = vsub.s32 %v1926, %v1928
    %v1930 = vrot.slane %v1916, %v1929
    %v1931 = vcombine.high %v1923, %v1923
    %v1932 = vcombine.high %v1930, %v1930
    %v1933 = vcombine.high %v1083, %v1083
    %v1935 = vunpack.c.l.s4 1983009808
    %v1936 = vunpack.c.0.s8 %v1935
    %v1937 = vlaneseq
    %v1938 = vshrl.u32 %v1937, 7
    %v1939 = vsub.s32 %v1936, %v1938
    %v1940 = vrot.slane %v1083, %v1939
    %v1942 = vunpack.c.l.s4 1983009808
    %v1943 = vunpack.c.0.s8 %v1942
    %v1944 = vlaneseq
    %v1945 = vshrl.u32 %v1944, 7
    %v1946 = vsub.s32 %v1943, %v1945
    %v1947 = vrot.slane %v1933, %v1946
    %v1948 = vcombine.high %v1940, %v1940
    %v1949 = vcombine.high %v1947, %v1947
    %v1950 = vcombine.high %v1084, %v1084
    %v1952 = vunpack.c.l.s4 1983009808
    %v1953 = vunpack.c.0.s8 %v1952
    %v1954 = vlaneseq
    %v1955 = vshrl.u32 %v1954, 7
    %v1956 = vsub.s32 %v1953, %v1955
    %v1957 = vrot.slane %v1084, %v1956
    %v1959 = vunpack.c.l.s4 1983009808
    %v1960 = vunpack.c.0.s8 %v1959
    %v1961 = vlaneseq
    %v1962 = vshrl.u32 %v1961, 7
    %v1963 = vsub.s32 %v1960, %v1962
    %v1964 = vrot.slane %v1950, %v1963
    %v1965 = vcombine.high %v1957, %v1957
    %v1966 = vcombine.high %v1964, %v1964
    %v1967 = vcombine.high %v1085, %v1085
    %v1969 = vunpack.c.l.s4 1983009808
    %v1970 = vunpack.c.0.s8 %v1969
    %v1971 = vlaneseq
    %v1972 = vshrl.u32 %v1971, 7
    %v1973 = vsub.s32 %v1970, %v1972
    %v1974 = vrot.slane %v1085, %v1973
    %v1976 = vunpack.c.l.s4 1983009808
    %v1977 = vunpack.c.0.s8 %v1976
    %v1978 = vlaneseq
    %v1979 = vshrl.u32 %v1978, 7
    %v1980 = vsub.s32 %v1977, %v1979
    %v1981 = vrot.slane %v1967, %v1980
    %v1982 = vcombine.high %v1974, %v1974
    %v1983 = vcombine.high %v1981, %v1981
    %v1984 = vcombine.high %v1086, %v1086
    %v1986 = vunpack.c.l.s4 1983009808
    %v1987 = vunpack.c.0.s8 %v1986
    %v1988 = vlaneseq
    %v1989 = vshrl.u32 %v1988, 7
    %v1990 = vsub.s32 %v1987, %v1989
    %v1991 = vrot.slane %v1086, %v1990
    %v1993 = vunpack.c.l.s4 1983009808
    %v1994 = vunpack.c.0.s8 %v1993
    %v1995 = vlaneseq
    %v1996 = vshrl.u32 %v1995, 7
    %v1997 = vsub.s32 %v1994, %v1996
    %v1998 = vrot.slane %v1984, %v1997
    %v1999 = vcombine.high %v1991, %v1991
    %v2000 = vcombine.high %v1998, %v1998
    %v2001 = vcombine.high %v1087, %v1087
    %v2003 = vunpack.c.l.s4 1983009808
    %v2004 = vunpack.c.0.s8 %v2003
    %v2005 = vlaneseq
    %v2006 = vshrl.u32 %v2005, 7
    %v2007 = vsub.s32 %v2004, %v2006
    %v2008 = vrot.slane %v1087, %v2007
    %v2010 = vunpack.c.l.s4 1983009808
    %v2011 = vunpack.c.0.s8 %v2010
    %v2012 = vlaneseq
    %v2013 = vshrl.u32 %v2012, 7
    %v2014 = vsub.s32 %v2011, %v2013
    %v2015 = vrot.slane %v2001, %v2014
    %v2016 = vcombine.high %v2008, %v2008
    %v2017 = vcombine.high %v2015, %v2015
    %v2018 = vcombine.high %v1088, %v1088
    %v2020 = vunpack.c.l.s4 1983009808
    %v2021 = vunpack.c.0.s8 %v2020
    %v2022 = vlaneseq
    %v2023 = vshrl.u32 %v2022, 7
    %v2024 = vsub.s32 %v2021, %v2023
    %v2025 = vrot.slane %v1088, %v2024
    %v2027 = vunpack.c.l.s4 1983009808
    %v2028 = vunpack.c.0.s8 %v2027
    %v2029 = vlaneseq
    %v2030 = vshrl.u32 %v2029, 7
    %v2031 = vsub.s32 %v2028, %v2030
    %v2032 = vrot.slane %v2018, %v2031
    %v2033 = vcombine.high %v2025, %v2025
    %v2034 = vcombine.high %v2032, %v2032
    %v2035 = vcombine.high %v1089, %v1089
    %v2037 = vunpack.c.l.s4 1983009808
    %v2038 = vunpack.c.0.s8 %v2037
    %v2039 = vlaneseq
    %v2040 = vshrl.u32 %v2039, 7
    %v2041 = vsub.s32 %v2038, %v2040
    %v2042 = vrot.slane %v1089, %v2041
    %v2044 = vunpack.c.l.s4 1983009808
    %v2045 = vunpack.c.0.s8 %v2044
    %v2046 = vlaneseq
    %v2047 = vshrl.u32 %v2046, 7
    %v2048 = vsub.s32 %v2045, %v2047
    %v2049 = vrot.slane %v2035, %v2048
    %v2050 = vcombine.high %v2042, %v2042
    %v2051 = vcombine.high %v2049, %v2049
    %v2052 = vcombine.high %v1090, %v1090
    %v2054 = vunpack.c.l.s4 1983009808
    %v2055 = vunpack.c.0.s8 %v2054
    %v2056 = vlaneseq
    %v2057 = vshrl.u32 %v2056, 7
    %v2058 = vsub.s32 %v2055, %v2057
    %v2059 = vrot.slane %v1090, %v2058
    %v2061 = vunpack.c.l.s4 1983009808
    %v2062 = vunpack.c.0.s8 %v2061
    %v2063 = vlaneseq
    %v2064 = vshrl.u32 %v2063, 7
    %v2065 = vsub.s32 %v2062, %v2064
    %v2066 = vrot.slane %v2052, %v2065
    %v2067 = vcombine.high %v2059, %v2059
    %v2068 = vcombine.high %v2066, %v2066
    %v2069 = vcombine.high %v1091, %v1091
    %v2071 = vunpack.c.l.s4 1983009808
    %v2072 = vunpack.c.0.s8 %v2071
    %v2073 = vlaneseq
    %v2074 = vshrl.u32 %v2073, 7
    %v2075 = vsub.s32 %v2072, %v2074
    %v2076 = vrot.slane %v1091, %v2075
    %v2078 = vunpack.c.l.s4 1983009808
    %v2079 = vunpack.c.0.s8 %v2078
    %v2080 = vlaneseq
    %v2081 = vshrl.u32 %v2080, 7
    %v2082 = vsub.s32 %v2079, %v2081
    %v2083 = vrot.slane %v2069, %v2082
    %v2084 = vcombine.high %v2076, %v2076
    %v2085 = vcombine.high %v2083, %v2083
    %v2086 = vcombine.high %v1092, %v1092
    %v2088 = vunpack.c.l.s4 1983009808
    %v2089 = vunpack.c.0.s8 %v2088
    %v2090 = vlaneseq
    %v2091 = vshrl.u32 %v2090, 7
    %v2092 = vsub.s32 %v2089, %v2091
    %v2093 = vrot.slane %v1092, %v2092
    %v2095 = vunpack.c.l.s4 1983009808
    %v2096 = vunpack.c.0.s8 %v2095
    %v2097 = vlaneseq
    %v2098 = vshrl.u32 %v2097, 7
    %v2099 = vsub.s32 %v2096, %v2098
    %v2100 = vrot.slane %v2086, %v2099
    %v2101 = vcombine.high %v2093, %v2093
    %v2102 = vcombine.high %v2100, %v2100
    %v2103 = vcombine.high %v1093, %v1093
    %v2105 = vunpack.c.l.s4 1983009808
    %v2106 = vunpack.c.0.s8 %v2105
    %v2107 = vlaneseq
    %v2108 = vshrl.u32 %v2107, 7
    %v2109 = vsub.s32 %v2106, %v2108
    %v2110 = vrot.slane %v1093, %v2109
    %v2112 = vunpack.c.l.s4 1983009808
    %v2113 = vunpack.c.0.s8 %v2112
    %v2114 = vlaneseq
    %v2115 = vshrl.u32 %v2114, 7
    %v2116 = vsub.s32 %v2113, %v2115
    %v2117 = vrot.slane %v2103, %v2116
    %v2118 = vcombine.high %v2110, %v2110
    %v2119 = vcombine.high %v2117, %v2117
    %v2120 = vcombine.high %v1094, %v1094
    %v2122 = vunpack.c.l.s4 1983009808
    %v2123 = vunpack.c.0.s8 %v2122
    %v2124 = vlaneseq
    %v2125 = vshrl.u32 %v2124, 7
    %v2126 = vsub.s32 %v2123, %v2125
    %v2127 = vrot.slane %v1094, %v2126
    %v2129 = vunpack.c.l.s4 1983009808
    %v2130 = vunpack.c.0.s8 %v2129
    %v2131 = vlaneseq
    %v2132 = vshrl.u32 %v2131, 7
    %v2133 = vsub.s32 %v2130, %v2132
    %v2134 = vrot.slane %v2120, %v2133
    %v2135 = vcombine.high %v2127, %v2127
    %v2136 = vcombine.high %v2134, %v2134
    %v2137 = vcombine.high %v1095, %v1095
    %v2139 = vunpack.c.l.s4 1983009808
    %v2140 = vunpack.c.0.s8 %v2139
    %v2141 = vlaneseq
    %v2142 = vshrl.u32 %v2141, 7
    %v2143 = vsub.s32 %v2140, %v2142
    %v2144 = vrot.slane %v1095, %v2143
    %v2146 = vunpack.c.l.s4 1983009808
    %v2147 = vunpack.c.0.s8 %v2146
    %v2148 = vlaneseq
    %v2149 = vshrl.u32 %v2148, 7
    %v2150 = vsub.s32 %v2147, %v2149
    %v2151 = vrot.slane %v2137, %v2150
    %v2152 = vcombine.high %v2144, %v2144
    %v2153 = vcombine.high %v2151, %v2151
    %v2154 = vcombine.high %v1096, %v1096
    %v2156 = vunpack.c.l.s4 1983009808
    %v2157 = vunpack.c.0.s8 %v2156
    %v2158 = vlaneseq
    %v2159 = vshrl.u32 %v2158, 7
    %v2160 = vsub.s32 %v2157, %v2159
    %v2161 = vrot.slane %v1096, %v2160
    %v2163 = vunpack.c.l.s4 1983009808
    %v2164 = vunpack.c.0.s8 %v2163
    %v2165 = vlaneseq
    %v2166 = vshrl.u32 %v2165, 7
    %v2167 = vsub.s32 %v2164, %v2166
    %v2168 = vrot.slane %v2154, %v2167
    %v2169 = vcombine.high %v2161, %v2161
    %v2170 = vcombine.high %v2168, %v2168
    %v2171 = vcombine.high %v1097, %v1097
    %v2173 = vunpack.c.l.s4 1983009808
    %v2174 = vunpack.c.0.s8 %v2173
    %v2175 = vlaneseq
    %v2176 = vshrl.u32 %v2175, 7
    %v2177 = vsub.s32 %v2174, %v2176
    %v2178 = vrot.slane %v1097, %v2177
    %v2180 = vunpack.c.l.s4 1983009808
    %v2181 = vunpack.c.0.s8 %v2180
    %v2182 = vlaneseq
    %v2183 = vshrl.u32 %v2182, 7
    %v2184 = vsub.s32 %v2181, %v2183
    %v2185 = vrot.slane %v2171, %v2184
    %v2186 = vcombine.high %v2178, %v2178
    %v2187 = vcombine.high %v2185, %v2185
    %v2188 = vcombine.high %v1098, %v1098
    %v2190 = vunpack.c.l.s4 1983009808
    %v2191 = vunpack.c.0.s8 %v2190
    %v2192 = vlaneseq
    %v2193 = vshrl.u32 %v2192, 7
    %v2194 = vsub.s32 %v2191, %v2193
    %v2195 = vrot.slane %v1098, %v2194
    %v2197 = vunpack.c.l.s4 1983009808
    %v2198 = vunpack.c.0.s8 %v2197
    %v2199 = vlaneseq
    %v2200 = vshrl.u32 %v2199, 7
    %v2201 = vsub.s32 %v2198, %v2200
    %v2202 = vrot.slane %v2188, %v2201
    %v2203 = vcombine.high %v2195, %v2195
    %v2204 = vcombine.high %v2202, %v2202
    %v2205 = vcombine.high %v1099, %v1099
    %v2207 = vunpack.c.l.s4 1983009808
    %v2208 = vunpack.c.0.s8 %v2207
    %v2209 = vlaneseq
    %v2210 = vshrl.u32 %v2209, 7
    %v2211 = vsub.s32 %v2208, %v2210
    %v2212 = vrot.slane %v1099, %v2211
    %v2214 = vunpack.c.l.s4 1983009808
    %v2215 = vunpack.c.0.s8 %v2214
    %v2216 = vlaneseq
    %v2217 = vshrl.u32 %v2216, 7
    %v2218 = vsub.s32 %v2215, %v2217
    %v2219 = vrot.slane %v2205, %v2218
    %v2220 = vcombine.high %v2212, %v2212
    %v2221 = vcombine.high %v2219, %v2219
    %v2222 = vcombine.high %v1100, %v1100
    %v2224 = vunpack.c.l.s4 1983009808
    %v2225 = vunpack.c.0.s8 %v2224
    %v2226 = vlaneseq
    %v2227 = vshrl.u32 %v2226, 7
    %v2228 = vsub.s32 %v2225, %v2227
    %v2229 = vrot.slane %v1100, %v2228
    %v2231 = vunpack.c.l.s4 1983009808
    %v2232 = vunpack.c.0.s8 %v2231
    %v2233 = vlaneseq
    %v2234 = vshrl.u32 %v2233, 7
    %v2235 = vsub.s32 %v2232, %v2234
    %v2236 = vrot.slane %v2222, %v2235
    %v2237 = vcombine.high %v2229, %v2229
    %v2238 = vcombine.high %v2236, %v2236
    %v2239 = vcombine.high %v1101, %v1101
    %v2241 = vunpack.c.l.s4 1983009808
    %v2242 = vunpack.c.0.s8 %v2241
    %v2243 = vlaneseq
    %v2244 = vshrl.u32 %v2243, 7
    %v2245 = vsub.s32 %v2242, %v2244
    %v2246 = vrot.slane %v1101, %v2245
    %v2248 = vunpack.c.l.s4 1983009808
    %v2249 = vunpack.c.0.s8 %v2248
    %v2250 = vlaneseq
    %v2251 = vshrl.u32 %v2250, 7
    %v2252 = vsub.s32 %v2249, %v2251
    %v2253 = vrot.slane %v2239, %v2252
    %v2254 = vcombine.high %v2246, %v2246
    %v2255 = vcombine.high %v2253, %v2253
    %v2256 = vcombine.high %v1102, %v1102
    %v2258 = vunpack.c.l.s4 1983009808
    %v2259 = vunpack.c.0.s8 %v2258
    %v2260 = vlaneseq
    %v2261 = vshrl.u32 %v2260, 7
    %v2262 = vsub.s32 %v2259, %v2261
    %v2263 = vrot.slane %v1102, %v2262
    %v2265 = vunpack.c.l.s4 1983009808
    %v2266 = vunpack.c.0.s8 %v2265
    %v2267 = vlaneseq
    %v2268 = vshrl.u32 %v2267, 7
    %v2269 = vsub.s32 %v2266, %v2268
    %v2270 = vrot.slane %v2256, %v2269
    %v2271 = vcombine.high %v2263, %v2263
    %v2272 = vcombine.high %v2270, %v2270
    %v2273 = vcombine.high %v1103, %v1103
    %v2275 = vunpack.c.l.s4 1983009808
    %v2276 = vunpack.c.0.s8 %v2275
    %v2277 = vlaneseq
    %v2278 = vshrl.u32 %v2277, 7
    %v2279 = vsub.s32 %v2276, %v2278
    %v2280 = vrot.slane %v1103, %v2279
    %v2282 = vunpack.c.l.s4 1983009808
    %v2283 = vunpack.c.0.s8 %v2282
    %v2284 = vlaneseq
    %v2285 = vshrl.u32 %v2284, 7
    %v2286 = vsub.s32 %v2283, %v2285
    %v2287 = vrot.slane %v2273, %v2286
    %v2288 = vcombine.high %v2280, %v2280
    %v2289 = vcombine.high %v2287, %v2287
    %v2290 = vcombine.high %v1104, %v1104
    %v2292 = vunpack.c.l.s4 1983009808
    %v2293 = vunpack.c.0.s8 %v2292
    %v2294 = vlaneseq
    %v2295 = vshrl.u32 %v2294, 7
    %v2296 = vsub.s32 %v2293, %v2295
    %v2297 = vrot.slane %v1104, %v2296
    %v2299 = vunpack.c.l.s4 1983009808
    %v2300 = vunpack.c.0.s8 %v2299
    %v2301 = vlaneseq
    %v2302 = vshrl.u32 %v2301, 7
    %v2303 = vsub.s32 %v2300, %v2302
    %v2304 = vrot.slane %v2290, %v2303
    %v2305 = vcombine.high %v2297, %v2297
    %v2306 = vcombine.high %v2304, %v2304
    %v2307 = vcombine.high %v1105, %v1105
    %v2309 = vunpack.c.l.s4 1983009808
    %v2310 = vunpack.c.0.s8 %v2309
    %v2311 = vlaneseq
    %v2312 = vshrl.u32 %v2311, 7
    %v2313 = vsub.s32 %v2310, %v2312
    %v2314 = vrot.slane %v1105, %v2313
    %v2316 = vunpack.c.l.s4 1983009808
    %v2317 = vunpack.c.0.s8 %v2316
    %v2318 = vlaneseq
    %v2319 = vshrl.u32 %v2318, 7
    %v2320 = vsub.s32 %v2317, %v2319
    %v2321 = vrot.slane %v2307, %v2320
    %v2322 = vcombine.high %v2314, %v2314
    %v2323 = vcombine.high %v2321, %v2321
    %v2324 = vcombine.high %v1106, %v1106
    %v2326 = vunpack.c.l.s4 1983009808
    %v2327 = vunpack.c.0.s8 %v2326
    %v2328 = vlaneseq
    %v2329 = vshrl.u32 %v2328, 7
    %v2330 = vsub.s32 %v2327, %v2329
    %v2331 = vrot.slane %v1106, %v2330
    %v2333 = vunpack.c.l.s4 1983009808
    %v2334 = vunpack.c.0.s8 %v2333
    %v2335 = vlaneseq
    %v2336 = vshrl.u32 %v2335, 7
    %v2337 = vsub.s32 %v2334, %v2336
    %v2338 = vrot.slane %v2324, %v2337
    %v2339 = vcombine.high %v2331, %v2331
    %v2340 = vcombine.high %v2338, %v2338
    %vm2597 = vcmask 1041408
    %v2598 = vsel %vm2597, %v1260, -inf
    %v2599 = vrot.slane %v2598, 4
    %v2600 = vmax.f32 %v2598, %v2599
    %v2601 = vrot.slane %v2600, 2
    %v2602 = vmax.f32 %v2600, %v2601
    %v2603 = vrot.slane %v2602, 1
    %v2604 = vmax.f32 %v2602, %v2603
    %v2605 = vsel %vm2597, %v1268, -inf
    %v2606 = vrot.slane %v2605, 4
    %v2607 = vmax.f32 %v2605, %v2606
    %v2608 = vrot.slane %v2607, 2
    %v2609 = vmax.f32 %v2607, %v2608
    %v2610 = vrot.slane %v2609, 1
    %v2611 = vmax.f32 %v2609, %v2610
    %v2612 = vsel %vm2597, %v1267, -inf
    %v2613 = vrot.slane %v2612, 4
    %v2614 = vmax.f32 %v2612, %v2613
    %v2615 = vrot.slane %v2614, 2
    %v2616 = vmax.f32 %v2614, %v2615
    %v2617 = vrot.slane %v2616, 1
    %v2618 = vmax.f32 %v2616, %v2617
    %v2619 = vsel %vm2597, %v1269, -inf
    %v2620 = vrot.slane %v2619, 4
    %v2621 = vmax.f32 %v2619, %v2620
    %v2622 = vrot.slane %v2621, 2
    %v2623 = vmax.f32 %v2621, %v2622
    %v2624 = vrot.slane %v2623, 1
    %v2625 = vmax.f32 %v2623, %v2624
    %v2626 = vsel %vm2597, %v1277, -inf
    %v2627 = vrot.slane %v2626, 4
    %v2628 = vmax.f32 %v2626, %v2627
    %v2629 = vrot.slane %v2628, 2
    %v2630 = vmax.f32 %v2628, %v2629
    %v2631 = vrot.slane %v2630, 1
    %v2632 = vmax.f32 %v2630, %v2631
    %v2633 = vsel %vm2597, %v1285, -inf
    %v2634 = vrot.slane %v2633, 4
    %v2635 = vmax.f32 %v2633, %v2634
    %v2636 = vrot.slane %v2635, 2
    %v2637 = vmax.f32 %v2635, %v2636
    %v2638 = vrot.slane %v2637, 1
    %v2639 = vmax.f32 %v2637, %v2638
    %v2640 = vsel %vm2597, %v1284, -inf
    %v2641 = vrot.slane %v2640, 4
    %v2642 = vmax.f32 %v2640, %v2641
    %v2643 = vrot.slane %v2642, 2
    %v2644 = vmax.f32 %v2642, %v2643
    %v2645 = vrot.slane %v2644, 1
    %v2646 = vmax.f32 %v2644, %v2645
    %v2647 = vsel %vm2597, %v1286, -inf
    %v2648 = vrot.slane %v2647, 4
    %v2649 = vmax.f32 %v2647, %v2648
    %v2650 = vrot.slane %v2649, 2
    %v2651 = vmax.f32 %v2649, %v2650
    %v2652 = vrot.slane %v2651, 1
    %v2653 = vmax.f32 %v2651, %v2652
    %v2654 = vsel %vm2597, %v1294, -inf
    %v2655 = vrot.slane %v2654, 4
    %v2656 = vmax.f32 %v2654, %v2655
    %v2657 = vrot.slane %v2656, 2
    %v2658 = vmax.f32 %v2656, %v2657
    %v2659 = vrot.slane %v2658, 1
    %v2660 = vmax.f32 %v2658, %v2659
    %v2661 = vsel %vm2597, %v1302, -inf
    %v2662 = vrot.slane %v2661, 4
    %v2663 = vmax.f32 %v2661, %v2662
    %v2664 = vrot.slane %v2663, 2
    %v2665 = vmax.f32 %v2663, %v2664
    %v2666 = vrot.slane %v2665, 1
    %v2667 = vmax.f32 %v2665, %v2666
    %v2668 = vsel %vm2597, %v1301, -inf
    %v2669 = vrot.slane %v2668, 4
    %v2670 = vmax.f32 %v2668, %v2669
    %v2671 = vrot.slane %v2670, 2
    %v2672 = vmax.f32 %v2670, %v2671
    %v2673 = vrot.slane %v2672, 1
    %v2674 = vmax.f32 %v2672, %v2673
    %v2675 = vsel %vm2597, %v1303, -inf
    %v2676 = vrot.slane %v2675, 4
    %v2677 = vmax.f32 %v2675, %v2676
    %v2678 = vrot.slane %v2677, 2
    %v2679 = vmax.f32 %v2677, %v2678
    %v2680 = vrot.slane %v2679, 1
    %v2681 = vmax.f32 %v2679, %v2680
    %v2682 = vsel %vm2597, %v1311, -inf
    %v2683 = vrot.slane %v2682, 4
    %v2684 = vmax.f32 %v2682, %v2683
    %v2685 = vrot.slane %v2684, 2
    %v2686 = vmax.f32 %v2684, %v2685
    %v2687 = vrot.slane %v2686, 1
    %v2688 = vmax.f32 %v2686, %v2687
    %v2689 = vsel %vm2597, %v1319, -inf
    %v2690 = vrot.slane %v2689, 4
    %v2691 = vmax.f32 %v2689, %v2690
    %v2692 = vrot.slane %v2691, 2
    %v2693 = vmax.f32 %v2691, %v2692
    %v2694 = vrot.slane %v2693, 1
    %v2695 = vmax.f32 %v2693, %v2694
    %v2696 = vsel %vm2597, %v1318, -inf
    %v2697 = vrot.slane %v2696, 4
    %v2698 = vmax.f32 %v2696, %v2697
    %v2699 = vrot.slane %v2698, 2
    %v2700 = vmax.f32 %v2698, %v2699
    %v2701 = vrot.slane %v2700, 1
    %v2702 = vmax.f32 %v2700, %v2701
    %v2703 = vsel %vm2597, %v1320, -inf
    %v2704 = vrot.slane %v2703, 4
    %v2705 = vmax.f32 %v2703, %v2704
    %v2706 = vrot.slane %v2705, 2
    %v2707 = vmax.f32 %v2705, %v2706
    %v2708 = vrot.slane %v2707, 1
    %v2709 = vmax.f32 %v2707, %v2708
    %v2710 = vsel %vm2597, %v1328, -inf
    %v2711 = vrot.slane %v2710, 4
    %v2712 = vmax.f32 %v2710, %v2711
    %v2713 = vrot.slane %v2712, 2
    %v2714 = vmax.f32 %v2712, %v2713
    %v2715 = vrot.slane %v2714, 1
    %v2716 = vmax.f32 %v2714, %v2715
    %v2717 = vsel %vm2597, %v1336, -inf
    %v2718 = vrot.slane %v2717, 4
    %v2719 = vmax.f32 %v2717, %v2718
    %v2720 = vrot.slane %v2719, 2
    %v2721 = vmax.f32 %v2719, %v2720
    %v2722 = vrot.slane %v2721, 1
    %v2723 = vmax.f32 %v2721, %v2722
    %v2724 = vsel %vm2597, %v1335, -inf
    %v2725 = vrot.slane %v2724, 4
    %v2726 = vmax.f32 %v2724, %v2725
    %v2727 = vrot.slane %v2726, 2
    %v2728 = vmax.f32 %v2726, %v2727
    %v2729 = vrot.slane %v2728, 1
    %v2730 = vmax.f32 %v2728, %v2729
    %v2731 = vsel %vm2597, %v1337, -inf
    %v2732 = vrot.slane %v2731, 4
    %v2733 = vmax.f32 %v2731, %v2732
    %v2734 = vrot.slane %v2733, 2
    %v2735 = vmax.f32 %v2733, %v2734
    %v2736 = vrot.slane %v2735, 1
    %v2737 = vmax.f32 %v2735, %v2736
    %v2738 = vsel %vm2597, %v1345, -inf
    %v2739 = vrot.slane %v2738, 4
    %v2740 = vmax.f32 %v2738, %v2739
    %v2741 = vrot.slane %v2740, 2
    %v2742 = vmax.f32 %v2740, %v2741
    %v2743 = vrot.slane %v2742, 1
    %v2744 = vmax.f32 %v2742, %v2743
    %v2745 = vsel %vm2597, %v1353, -inf
    %v2746 = vrot.slane %v2745, 4
    %v2747 = vmax.f32 %v2745, %v2746
    %v2748 = vrot.slane %v2747, 2
    %v2749 = vmax.f32 %v2747, %v2748
    %v2750 = vrot.slane %v2749, 1
    %v2751 = vmax.f32 %v2749, %v2750
    %v2752 = vsel %vm2597, %v1352, -inf
    %v2753 = vrot.slane %v2752, 4
    %v2754 = vmax.f32 %v2752, %v2753
    %v2755 = vrot.slane %v2754, 2
    %v2756 = vmax.f32 %v2754, %v2755
    %v2757 = vrot.slane %v2756, 1
    %v2758 = vmax.f32 %v2756, %v2757
    %v2759 = vsel %vm2597, %v1354, -inf
    %v2760 = vrot.slane %v2759, 4
    %v2761 = vmax.f32 %v2759, %v2760
    %v2762 = vrot.slane %v2761, 2
    %v2763 = vmax.f32 %v2761, %v2762
    %v2764 = vrot.slane %v2763, 1
    %v2765 = vmax.f32 %v2763, %v2764
    %v2766 = vsel %vm2597, %v1362, -inf
    %v2767 = vrot.slane %v2766, 4
    %v2768 = vmax.f32 %v2766, %v2767
    %v2769 = vrot.slane %v2768, 2
    %v2770 = vmax.f32 %v2768, %v2769
    %v2771 = vrot.slane %v2770, 1
    %v2772 = vmax.f32 %v2770, %v2771
    %v2773 = vsel %vm2597, %v1370, -inf
    %v2774 = vrot.slane %v2773, 4
    %v2775 = vmax.f32 %v2773, %v2774
    %v2776 = vrot.slane %v2775, 2
    %v2777 = vmax.f32 %v2775, %v2776
    %v2778 = vrot.slane %v2777, 1
    %v2779 = vmax.f32 %v2777, %v2778
    %v2780 = vsel %vm2597, %v1369, -inf
    %v2781 = vrot.slane %v2780, 4
    %v2782 = vmax.f32 %v2780, %v2781
    %v2783 = vrot.slane %v2782, 2
    %v2784 = vmax.f32 %v2782, %v2783
    %v2785 = vrot.slane %v2784, 1
    %v2786 = vmax.f32 %v2784, %v2785
    %v2787 = vsel %vm2597, %v1371, -inf
    %v2788 = vrot.slane %v2787, 4
    %v2789 = vmax.f32 %v2787, %v2788
    %v2790 = vrot.slane %v2789, 2
    %v2791 = vmax.f32 %v2789, %v2790
    %v2792 = vrot.slane %v2791, 1
    %v2793 = vmax.f32 %v2791, %v2792
    %v2794 = vsel %vm2597, %v1379, -inf
    %v2795 = vrot.slane %v2794, 4
    %v2796 = vmax.f32 %v2794, %v2795
    %v2797 = vrot.slane %v2796, 2
    %v2798 = vmax.f32 %v2796, %v2797
    %v2799 = vrot.slane %v2798, 1
    %v2800 = vmax.f32 %v2798, %v2799
    %v2801 = vsel %vm2597, %v1387, -inf
    %v2802 = vrot.slane %v2801, 4
    %v2803 = vmax.f32 %v2801, %v2802
    %v2804 = vrot.slane %v2803, 2
    %v2805 = vmax.f32 %v2803, %v2804
    %v2806 = vrot.slane %v2805, 1
    %v2807 = vmax.f32 %v2805, %v2806
    %v2808 = vsel %vm2597, %v1386, -inf
    %v2809 = vrot.slane %v2808, 4
    %v2810 = vmax.f32 %v2808, %v2809
    %v2811 = vrot.slane %v2810, 2
    %v2812 = vmax.f32 %v2810, %v2811
    %v2813 = vrot.slane %v2812, 1
    %v2814 = vmax.f32 %v2812, %v2813
    %v2815 = vsel %vm2597, %v1388, -inf
    %v2816 = vrot.slane %v2815, 4
    %v2817 = vmax.f32 %v2815, %v2816
    %v2818 = vrot.slane %v2817, 2
    %v2819 = vmax.f32 %v2817, %v2818
    %v2820 = vrot.slane %v2819, 1
    %v2821 = vmax.f32 %v2819, %v2820
    %v2822 = vsel %vm2597, %v1396, -inf
    %v2823 = vrot.slane %v2822, 4
    %v2824 = vmax.f32 %v2822, %v2823
    %v2825 = vrot.slane %v2824, 2
    %v2826 = vmax.f32 %v2824, %v2825
    %v2827 = vrot.slane %v2826, 1
    %v2828 = vmax.f32 %v2826, %v2827
    %v2829 = vsel %vm2597, %v1404, -inf
    %v2830 = vrot.slane %v2829, 4
    %v2831 = vmax.f32 %v2829, %v2830
    %v2832 = vrot.slane %v2831, 2
    %v2833 = vmax.f32 %v2831, %v2832
    %v2834 = vrot.slane %v2833, 1
    %v2835 = vmax.f32 %v2833, %v2834
    %v2836 = vsel %vm2597, %v1403, -inf
    %v2837 = vrot.slane %v2836, 4
    %v2838 = vmax.f32 %v2836, %v2837
    %v2839 = vrot.slane %v2838, 2
    %v2840 = vmax.f32 %v2838, %v2839
    %v2841 = vrot.slane %v2840, 1
    %v2842 = vmax.f32 %v2840, %v2841
    %v2843 = vsel %vm2597, %v1405, -inf
    %v2844 = vrot.slane %v2843, 4
    %v2845 = vmax.f32 %v2843, %v2844
    %v2846 = vrot.slane %v2845, 2
    %v2847 = vmax.f32 %v2845, %v2846
    %v2848 = vrot.slane %v2847, 1
    %v2849 = vmax.f32 %v2847, %v2848
    %v2850 = vsel %vm2597, %v1413, -inf
    %v2851 = vrot.slane %v2850, 4
    %v2852 = vmax.f32 %v2850, %v2851
    %v2853 = vrot.slane %v2852, 2
    %v2854 = vmax.f32 %v2852, %v2853
    %v2855 = vrot.slane %v2854, 1
    %v2856 = vmax.f32 %v2854, %v2855
    %v2857 = vsel %vm2597, %v1421, -inf
    %v2858 = vrot.slane %v2857, 4
    %v2859 = vmax.f32 %v2857, %v2858
    %v2860 = vrot.slane %v2859, 2
    %v2861 = vmax.f32 %v2859, %v2860
    %v2862 = vrot.slane %v2861, 1
    %v2863 = vmax.f32 %v2861, %v2862
    %v2864 = vsel %vm2597, %v1420, -inf
    %v2865 = vrot.slane %v2864, 4
    %v2866 = vmax.f32 %v2864, %v2865
    %v2867 = vrot.slane %v2866, 2
    %v2868 = vmax.f32 %v2866, %v2867
    %v2869 = vrot.slane %v2868, 1
    %v2870 = vmax.f32 %v2868, %v2869
    %v2871 = vsel %vm2597, %v1422, -inf
    %v2872 = vrot.slane %v2871, 4
    %v2873 = vmax.f32 %v2871, %v2872
    %v2874 = vrot.slane %v2873, 2
    %v2875 = vmax.f32 %v2873, %v2874
    %v2876 = vrot.slane %v2875, 1
    %v2877 = vmax.f32 %v2875, %v2876
    %v2878 = vsel %vm2597, %v1430, -inf
    %v2879 = vrot.slane %v2878, 4
    %v2880 = vmax.f32 %v2878, %v2879
    %v2881 = vrot.slane %v2880, 2
    %v2882 = vmax.f32 %v2880, %v2881
    %v2883 = vrot.slane %v2882, 1
    %v2884 = vmax.f32 %v2882, %v2883
    %v2885 = vsel %vm2597, %v1438, -inf
    %v2886 = vrot.slane %v2885, 4
    %v2887 = vmax.f32 %v2885, %v2886
    %v2888 = vrot.slane %v2887, 2
    %v2889 = vmax.f32 %v2887, %v2888
    %v2890 = vrot.slane %v2889, 1
    %v2891 = vmax.f32 %v2889, %v2890
    %v2892 = vsel %vm2597, %v1437, -inf
    %v2893 = vrot.slane %v2892, 4
    %v2894 = vmax.f32 %v2892, %v2893
    %v2895 = vrot.slane %v2894, 2
    %v2896 = vmax.f32 %v2894, %v2895
    %v2897 = vrot.slane %v2896, 1
    %v2898 = vmax.f32 %v2896, %v2897
    %v2899 = vsel %vm2597, %v1439, -inf
    %v2900 = vrot.slane %v2899, 4
    %v2901 = vmax.f32 %v2899, %v2900
    %v2902 = vrot.slane %v2901, 2
    %v2903 = vmax.f32 %v2901, %v2902
    %v2904 = vrot.slane %v2903, 1
    %v2905 = vmax.f32 %v2903, %v2904
    %v2906 = vsel %vm2597, %v1447, -inf
    %v2907 = vrot.slane %v2906, 4
    %v2908 = vmax.f32 %v2906, %v2907
    %v2909 = vrot.slane %v2908, 2
    %v2910 = vmax.f32 %v2908, %v2909
    %v2911 = vrot.slane %v2910, 1
    %v2912 = vmax.f32 %v2910, %v2911
    %v2913 = vsel %vm2597, %v1455, -inf
    %v2914 = vrot.slane %v2913, 4
    %v2915 = vmax.f32 %v2913, %v2914
    %v2916 = vrot.slane %v2915, 2
    %v2917 = vmax.f32 %v2915, %v2916
    %v2918 = vrot.slane %v2917, 1
    %v2919 = vmax.f32 %v2917, %v2918
    %v2920 = vsel %vm2597, %v1454, -inf
    %v2921 = vrot.slane %v2920, 4
    %v2922 = vmax.f32 %v2920, %v2921
    %v2923 = vrot.slane %v2922, 2
    %v2924 = vmax.f32 %v2922, %v2923
    %v2925 = vrot.slane %v2924, 1
    %v2926 = vmax.f32 %v2924, %v2925
    %v2927 = vsel %vm2597, %v1456, -inf
    %v2928 = vrot.slane %v2927, 4
    %v2929 = vmax.f32 %v2927, %v2928
    %v2930 = vrot.slane %v2929, 2
    %v2931 = vmax.f32 %v2929, %v2930
    %v2932 = vrot.slane %v2931, 1
    %v2933 = vmax.f32 %v2931, %v2932
    %v2934 = vsel %vm2597, %v1464, -inf
    %v2935 = vrot.slane %v2934, 4
    %v2936 = vmax.f32 %v2934, %v2935
    %v2937 = vrot.slane %v2936, 2
    %v2938 = vmax.f32 %v2936, %v2937
    %v2939 = vrot.slane %v2938, 1
    %v2940 = vmax.f32 %v2938, %v2939
    %v2941 = vsel %vm2597, %v1472, -inf
    %v2942 = vrot.slane %v2941, 4
    %v2943 = vmax.f32 %v2941, %v2942
    %v2944 = vrot.slane %v2943, 2
    %v2945 = vmax.f32 %v2943, %v2944
    %v2946 = vrot.slane %v2945, 1
    %v2947 = vmax.f32 %v2945, %v2946
    %v2948 = vsel %vm2597, %v1471, -inf
    %v2949 = vrot.slane %v2948, 4
    %v2950 = vmax.f32 %v2948, %v2949
    %v2951 = vrot.slane %v2950, 2
    %v2952 = vmax.f32 %v2950, %v2951
    %v2953 = vrot.slane %v2952, 1
    %v2954 = vmax.f32 %v2952, %v2953
    %v2955 = vsel %vm2597, %v1473, -inf
    %v2956 = vrot.slane %v2955, 4
    %v2957 = vmax.f32 %v2955, %v2956
    %v2958 = vrot.slane %v2957, 2
    %v2959 = vmax.f32 %v2957, %v2958
    %v2960 = vrot.slane %v2959, 1
    %v2961 = vmax.f32 %v2959, %v2960
    %v2962 = vsel %vm2597, %v1481, -inf
    %v2963 = vrot.slane %v2962, 4
    %v2964 = vmax.f32 %v2962, %v2963
    %v2965 = vrot.slane %v2964, 2
    %v2966 = vmax.f32 %v2964, %v2965
    %v2967 = vrot.slane %v2966, 1
    %v2968 = vmax.f32 %v2966, %v2967
    %v2969 = vsel %vm2597, %v1489, -inf
    %v2970 = vrot.slane %v2969, 4
    %v2971 = vmax.f32 %v2969, %v2970
    %v2972 = vrot.slane %v2971, 2
    %v2973 = vmax.f32 %v2971, %v2972
    %v2974 = vrot.slane %v2973, 1
    %v2975 = vmax.f32 %v2973, %v2974
    %v2976 = vsel %vm2597, %v1488, -inf
    %v2977 = vrot.slane %v2976, 4
    %v2978 = vmax.f32 %v2976, %v2977
    %v2979 = vrot.slane %v2978, 2
    %v2980 = vmax.f32 %v2978, %v2979
    %v2981 = vrot.slane %v2980, 1
    %v2982 = vmax.f32 %v2980, %v2981
    %v2983 = vsel %vm2597, %v1490, -inf
    %v2984 = vrot.slane %v2983, 4
    %v2985 = vmax.f32 %v2983, %v2984
    %v2986 = vrot.slane %v2985, 2
    %v2987 = vmax.f32 %v2985, %v2986
    %v2988 = vrot.slane %v2987, 1
    %v2989 = vmax.f32 %v2987, %v2988
    %v2990 = vsel %vm2597, %v1498, -inf
    %v2991 = vrot.slane %v2990, 4
    %v2992 = vmax.f32 %v2990, %v2991
    %v2993 = vrot.slane %v2992, 2
    %v2994 = vmax.f32 %v2992, %v2993
    %v2995 = vrot.slane %v2994, 1
    %v2996 = vmax.f32 %v2994, %v2995
    %v2997 = vsel %vm2597, %v1506, -inf
    %v2998 = vrot.slane %v2997, 4
    %v2999 = vmax.f32 %v2997, %v2998
    %v3000 = vrot.slane %v2999, 2
    %v3001 = vmax.f32 %v2999, %v3000
    %v3002 = vrot.slane %v3001, 1
    %v3003 = vmax.f32 %v3001, %v3002
    %v3004 = vsel %vm2597, %v1505, -inf
    %v3005 = vrot.slane %v3004, 4
    %v3006 = vmax.f32 %v3004, %v3005
    %v3007 = vrot.slane %v3006, 2
    %v3008 = vmax.f32 %v3006, %v3007
    %v3009 = vrot.slane %v3008, 1
    %v3010 = vmax.f32 %v3008, %v3009
    %v3011 = vsel %vm2597, %v1507, -inf
    %v3012 = vrot.slane %v3011, 4
    %v3013 = vmax.f32 %v3011, %v3012
    %v3014 = vrot.slane %v3013, 2
    %v3015 = vmax.f32 %v3013, %v3014
    %v3016 = vrot.slane %v3015, 1
    %v3017 = vmax.f32 %v3015, %v3016
    %v3018 = vsel %vm2597, %v1515, -inf
    %v3019 = vrot.slane %v3018, 4
    %v3020 = vmax.f32 %v3018, %v3019
    %v3021 = vrot.slane %v3020, 2
    %v3022 = vmax.f32 %v3020, %v3021
    %v3023 = vrot.slane %v3022, 1
    %v3024 = vmax.f32 %v3022, %v3023
    %v3025 = vsel %vm2597, %v1523, -inf
    %v3026 = vrot.slane %v3025, 4
    %v3027 = vmax.f32 %v3025, %v3026
    %v3028 = vrot.slane %v3027, 2
    %v3029 = vmax.f32 %v3027, %v3028
    %v3030 = vrot.slane %v3029, 1
    %v3031 = vmax.f32 %v3029, %v3030
    %v3032 = vsel %vm2597, %v1522, -inf
    %v3033 = vrot.slane %v3032, 4
    %v3034 = vmax.f32 %v3032, %v3033
    %v3035 = vrot.slane %v3034, 2
    %v3036 = vmax.f32 %v3034, %v3035
    %v3037 = vrot.slane %v3036, 1
    %v3038 = vmax.f32 %v3036, %v3037
    %v3039 = vsel %vm2597, %v1524, -inf
    %v3040 = vrot.slane %v3039, 4
    %v3041 = vmax.f32 %v3039, %v3040
    %v3042 = vrot.slane %v3041, 2
    %v3043 = vmax.f32 %v3041, %v3042
    %v3044 = vrot.slane %v3043, 1
    %v3045 = vmax.f32 %v3043, %v3044
    %v3046 = vsel %vm2597, %v1532, -inf
    %v3047 = vrot.slane %v3046, 4
    %v3048 = vmax.f32 %v3046, %v3047
    %v3049 = vrot.slane %v3048, 2
    %v3050 = vmax.f32 %v3048, %v3049
    %v3051 = vrot.slane %v3050, 1
    %v3052 = vmax.f32 %v3050, %v3051
    %v3053 = vsel %vm2597, %v1540, -inf
    %v3054 = vrot.slane %v3053, 4
    %v3055 = vmax.f32 %v3053, %v3054
    %v3056 = vrot.slane %v3055, 2
    %v3057 = vmax.f32 %v3055, %v3056
    %v3058 = vrot.slane %v3057, 1
    %v3059 = vmax.f32 %v3057, %v3058
    %v3060 = vsel %vm2597, %v1539, -inf
    %v3061 = vrot.slane %v3060, 4
    %v3062 = vmax.f32 %v3060, %v3061
    %v3063 = vrot.slane %v3062, 2
    %v3064 = vmax.f32 %v3062, %v3063
    %v3065 = vrot.slane %v3064, 1
    %v3066 = vmax.f32 %v3064, %v3065
    %v3067 = vsel %vm2597, %v1541, -inf
    %v3068 = vrot.slane %v3067, 4
    %v3069 = vmax.f32 %v3067, %v3068
    %v3070 = vrot.slane %v3069, 2
    %v3071 = vmax.f32 %v3069, %v3070
    %v3072 = vrot.slane %v3071, 1
    %v3073 = vmax.f32 %v3071, %v3072
    %v3074 = vsel %vm2597, %v1549, -inf
    %v3075 = vrot.slane %v3074, 4
    %v3076 = vmax.f32 %v3074, %v3075
    %v3077 = vrot.slane %v3076, 2
    %v3078 = vmax.f32 %v3076, %v3077
    %v3079 = vrot.slane %v3078, 1
    %v3080 = vmax.f32 %v3078, %v3079
    %v3081 = vsel %vm2597, %v1557, -inf
    %v3082 = vrot.slane %v3081, 4
    %v3083 = vmax.f32 %v3081, %v3082
    %v3084 = vrot.slane %v3083, 2
    %v3085 = vmax.f32 %v3083, %v3084
    %v3086 = vrot.slane %v3085, 1
    %v3087 = vmax.f32 %v3085, %v3086
    %v3088 = vsel %vm2597, %v1556, -inf
    %v3089 = vrot.slane %v3088, 4
    %v3090 = vmax.f32 %v3088, %v3089
    %v3091 = vrot.slane %v3090, 2
    %v3092 = vmax.f32 %v3090, %v3091
    %v3093 = vrot.slane %v3092, 1
    %v3094 = vmax.f32 %v3092, %v3093
    %v3095 = vsel %vm2597, %v1558, -inf
    %v3096 = vrot.slane %v3095, 4
    %v3097 = vmax.f32 %v3095, %v3096
    %v3098 = vrot.slane %v3097, 2
    %v3099 = vmax.f32 %v3097, %v3098
    %v3100 = vrot.slane %v3099, 1
    %v3101 = vmax.f32 %v3099, %v3100
    %v3102 = vsel %vm2597, %v1566, -inf
    %v3103 = vrot.slane %v3102, 4
    %v3104 = vmax.f32 %v3102, %v3103
    %v3105 = vrot.slane %v3104, 2
    %v3106 = vmax.f32 %v3104, %v3105
    %v3107 = vrot.slane %v3106, 1
    %v3108 = vmax.f32 %v3106, %v3107
    %v3109 = vsel %vm2597, %v1574, -inf
    %v3110 = vrot.slane %v3109, 4
    %v3111 = vmax.f32 %v3109, %v3110
    %v3112 = vrot.slane %v3111, 2
    %v3113 = vmax.f32 %v3111, %v3112
    %v3114 = vrot.slane %v3113, 1
    %v3115 = vmax.f32 %v3113, %v3114
    %v3116 = vsel %vm2597, %v1573, -inf
    %v3117 = vrot.slane %v3116, 4
    %v3118 = vmax.f32 %v3116, %v3117
    %v3119 = vrot.slane %v3118, 2
    %v3120 = vmax.f32 %v3118, %v3119
    %v3121 = vrot.slane %v3120, 1
    %v3122 = vmax.f32 %v3120, %v3121
    %v3123 = vsel %vm2597, %v1575, -inf
    %v3124 = vrot.slane %v3123, 4
    %v3125 = vmax.f32 %v3123, %v3124
    %v3126 = vrot.slane %v3125, 2
    %v3127 = vmax.f32 %v3125, %v3126
    %v3128 = vrot.slane %v3127, 1
    %v3129 = vmax.f32 %v3127, %v3128
    %v3130 = vsel %vm2597, %v1583, -inf
    %v3131 = vrot.slane %v3130, 4
    %v3132 = vmax.f32 %v3130, %v3131
    %v3133 = vrot.slane %v3132, 2
    %v3134 = vmax.f32 %v3132, %v3133
    %v3135 = vrot.slane %v3134, 1
    %v3136 = vmax.f32 %v3134, %v3135
    %v3137 = vsel %vm2597, %v1591, -inf
    %v3138 = vrot.slane %v3137, 4
    %v3139 = vmax.f32 %v3137, %v3138
    %v3140 = vrot.slane %v3139, 2
    %v3141 = vmax.f32 %v3139, %v3140
    %v3142 = vrot.slane %v3141, 1
    %v3143 = vmax.f32 %v3141, %v3142
    %v3144 = vsel %vm2597, %v1590, -inf
    %v3145 = vrot.slane %v3144, 4
    %v3146 = vmax.f32 %v3144, %v3145
    %v3147 = vrot.slane %v3146, 2
    %v3148 = vmax.f32 %v3146, %v3147
    %v3149 = vrot.slane %v3148, 1
    %v3150 = vmax.f32 %v3148, %v3149
    %v3151 = vsel %vm2597, %v1592, -inf
    %v3152 = vrot.slane %v3151, 4
    %v3153 = vmax.f32 %v3151, %v3152
    %v3154 = vrot.slane %v3153, 2
    %v3155 = vmax.f32 %v3153, %v3154
    %v3156 = vrot.slane %v3155, 1
    %v3157 = vmax.f32 %v3155, %v3156
    %v3158 = vsel %vm2597, %v1600, -inf
    %v3159 = vrot.slane %v3158, 4
    %v3160 = vmax.f32 %v3158, %v3159
    %v3161 = vrot.slane %v3160, 2
    %v3162 = vmax.f32 %v3160, %v3161
    %v3163 = vrot.slane %v3162, 1
    %v3164 = vmax.f32 %v3162, %v3163
    %v3165 = vsel %vm2597, %v1608, -inf
    %v3166 = vrot.slane %v3165, 4
    %v3167 = vmax.f32 %v3165, %v3166
    %v3168 = vrot.slane %v3167, 2
    %v3169 = vmax.f32 %v3167, %v3168
    %v3170 = vrot.slane %v3169, 1
    %v3171 = vmax.f32 %v3169, %v3170
    %v3172 = vsel %vm2597, %v1607, -inf
    %v3173 = vrot.slane %v3172, 4
    %v3174 = vmax.f32 %v3172, %v3173
    %v3175 = vrot.slane %v3174, 2
    %v3176 = vmax.f32 %v3174, %v3175
    %v3177 = vrot.slane %v3176, 1
    %v3178 = vmax.f32 %v3176, %v3177
    %v3179 = vsel %vm2597, %v1609, -inf
    %v3180 = vrot.slane %v3179, 4
    %v3181 = vmax.f32 %v3179, %v3180
    %v3182 = vrot.slane %v3181, 2
    %v3183 = vmax.f32 %v3181, %v3182
    %v3184 = vrot.slane %v3183, 1
    %v3185 = vmax.f32 %v3183, %v3184
    %v3186 = vsel %vm2597, %v1617, -inf
    %v3187 = vrot.slane %v3186, 4
    %v3188 = vmax.f32 %v3186, %v3187
    %v3189 = vrot.slane %v3188, 2
    %v3190 = vmax.f32 %v3188, %v3189
    %v3191 = vrot.slane %v3190, 1
    %v3192 = vmax.f32 %v3190, %v3191
    %v3193 = vsel %vm2597, %v1625, -inf
    %v3194 = vrot.slane %v3193, 4
    %v3195 = vmax.f32 %v3193, %v3194
    %v3196 = vrot.slane %v3195, 2
    %v3197 = vmax.f32 %v3195, %v3196
    %v3198 = vrot.slane %v3197, 1
    %v3199 = vmax.f32 %v3197, %v3198
    %v3200 = vsel %vm2597, %v1624, -inf
    %v3201 = vrot.slane %v3200, 4
    %v3202 = vmax.f32 %v3200, %v3201
    %v3203 = vrot.slane %v3202, 2
    %v3204 = vmax.f32 %v3202, %v3203
    %v3205 = vrot.slane %v3204, 1
    %v3206 = vmax.f32 %v3204, %v3205
    %v3207 = vsel %vm2597, %v1626, -inf
    %v3208 = vrot.slane %v3207, 4
    %v3209 = vmax.f32 %v3207, %v3208
    %v3210 = vrot.slane %v3209, 2
    %v3211 = vmax.f32 %v3209, %v3210
    %v3212 = vrot.slane %v3211, 1
    %v3213 = vmax.f32 %v3211, %v3212
    %v3214 = vsel %vm2597, %v1634, -inf
    %v3215 = vrot.slane %v3214, 4
    %v3216 = vmax.f32 %v3214, %v3215
    %v3217 = vrot.slane %v3216, 2
    %v3218 = vmax.f32 %v3216, %v3217
    %v3219 = vrot.slane %v3218, 1
    %v3220 = vmax.f32 %v3218, %v3219
    %v3221 = vsel %vm2597, %v1642, -inf
    %v3222 = vrot.slane %v3221, 4
    %v3223 = vmax.f32 %v3221, %v3222
    %v3224 = vrot.slane %v3223, 2
    %v3225 = vmax.f32 %v3223, %v3224
    %v3226 = vrot.slane %v3225, 1
    %v3227 = vmax.f32 %v3225, %v3226
    %v3228 = vsel %vm2597, %v1641, -inf
    %v3229 = vrot.slane %v3228, 4
    %v3230 = vmax.f32 %v3228, %v3229
    %v3231 = vrot.slane %v3230, 2
    %v3232 = vmax.f32 %v3230, %v3231
    %v3233 = vrot.slane %v3232, 1
    %v3234 = vmax.f32 %v3232, %v3233
    %v3235 = vsel %vm2597, %v1643, -inf
    %v3236 = vrot.slane %v3235, 4
    %v3237 = vmax.f32 %v3235, %v3236
    %v3238 = vrot.slane %v3237, 2
    %v3239 = vmax.f32 %v3237, %v3238
    %v3240 = vrot.slane %v3239, 1
    %v3241 = vmax.f32 %v3239, %v3240
    %v3242 = vsel %vm2597, %v1651, -inf
    %v3243 = vrot.slane %v3242, 4
    %v3244 = vmax.f32 %v3242, %v3243
    %v3245 = vrot.slane %v3244, 2
    %v3246 = vmax.f32 %v3244, %v3245
    %v3247 = vrot.slane %v3246, 1
    %v3248 = vmax.f32 %v3246, %v3247
    %v3249 = vsel %vm2597, %v1659, -inf
    %v3250 = vrot.slane %v3249, 4
    %v3251 = vmax.f32 %v3249, %v3250
    %v3252 = vrot.slane %v3251, 2
    %v3253 = vmax.f32 %v3251, %v3252
    %v3254 = vrot.slane %v3253, 1
    %v3255 = vmax.f32 %v3253, %v3254
    %v3256 = vsel %vm2597, %v1658, -inf
    %v3257 = vrot.slane %v3256, 4
    %v3258 = vmax.f32 %v3256, %v3257
    %v3259 = vrot.slane %v3258, 2
    %v3260 = vmax.f32 %v3258, %v3259
    %v3261 = vrot.slane %v3260, 1
    %v3262 = vmax.f32 %v3260, %v3261
    %v3263 = vsel %vm2597, %v1660, -inf
    %v3264 = vrot.slane %v3263, 4
    %v3265 = vmax.f32 %v3263, %v3264
    %v3266 = vrot.slane %v3265, 2
    %v3267 = vmax.f32 %v3265, %v3266
    %v3268 = vrot.slane %v3267, 1
    %v3269 = vmax.f32 %v3267, %v3268
    %v3270 = vsel %vm2597, %v1668, -inf
    %v3271 = vrot.slane %v3270, 4
    %v3272 = vmax.f32 %v3270, %v3271
    %v3273 = vrot.slane %v3272, 2
    %v3274 = vmax.f32 %v3272, %v3273
    %v3275 = vrot.slane %v3274, 1
    %v3276 = vmax.f32 %v3274, %v3275
    %v3277 = vsel %vm2597, %v1676, -inf
    %v3278 = vrot.slane %v3277, 4
    %v3279 = vmax.f32 %v3277, %v3278
    %v3280 = vrot.slane %v3279, 2
    %v3281 = vmax.f32 %v3279, %v3280
    %v3282 = vrot.slane %v3281, 1
    %v3283 = vmax.f32 %v3281, %v3282
    %v3284 = vsel %vm2597, %v1675, -inf
    %v3285 = vrot.slane %v3284, 4
    %v3286 = vmax.f32 %v3284, %v3285
    %v3287 = vrot.slane %v3286, 2
    %v3288 = vmax.f32 %v3286, %v3287
    %v3289 = vrot.slane %v3288, 1
    %v3290 = vmax.f32 %v3288, %v3289
    %v3291 = vsel %vm2597, %v1677, -inf
    %v3292 = vrot.slane %v3291, 4
    %v3293 = vmax.f32 %v3291, %v3292
    %v3294 = vrot.slane %v3293, 2
    %v3295 = vmax.f32 %v3293, %v3294
    %v3296 = vrot.slane %v3295, 1
    %v3297 = vmax.f32 %v3295, %v3296
    %v3298 = vsel %vm2597, %v1685, -inf
    %v3299 = vrot.slane %v3298, 4
    %v3300 = vmax.f32 %v3298, %v3299
    %v3301 = vrot.slane %v3300, 2
    %v3302 = vmax.f32 %v3300, %v3301
    %v3303 = vrot.slane %v3302, 1
    %v3304 = vmax.f32 %v3302, %v3303
    %v3305 = vsel %vm2597, %v1693, -inf
    %v3306 = vrot.slane %v3305, 4
    %v3307 = vmax.f32 %v3305, %v3306
    %v3308 = vrot.slane %v3307, 2
    %v3309 = vmax.f32 %v3307, %v3308
    %v3310 = vrot.slane %v3309, 1
    %v3311 = vmax.f32 %v3309, %v3310
    %v3312 = vsel %vm2597, %v1692, -inf
    %v3313 = vrot.slane %v3312, 4
    %v3314 = vmax.f32 %v3312, %v3313
    %v3315 = vrot.slane %v3314, 2
    %v3316 = vmax.f32 %v3314, %v3315
    %v3317 = vrot.slane %v3316, 1
    %v3318 = vmax.f32 %v3316, %v3317
    %v3319 = vsel %vm2597, %v1694, -inf
    %v3320 = vrot.slane %v3319, 4
    %v3321 = vmax.f32 %v3319, %v3320
    %v3322 = vrot.slane %v3321, 2
    %v3323 = vmax.f32 %v3321, %v3322
    %v3324 = vrot.slane %v3323, 1
    %v3325 = vmax.f32 %v3323, %v3324
    %v3326 = vsel %vm2597, %v1702, -inf
    %v3327 = vrot.slane %v3326, 4
    %v3328 = vmax.f32 %v3326, %v3327
    %v3329 = vrot.slane %v3328, 2
    %v3330 = vmax.f32 %v3328, %v3329
    %v3331 = vrot.slane %v3330, 1
    %v3332 = vmax.f32 %v3330, %v3331
    %v3333 = vsel %vm2597, %v1710, -inf
    %v3334 = vrot.slane %v3333, 4
    %v3335 = vmax.f32 %v3333, %v3334
    %v3336 = vrot.slane %v3335, 2
    %v3337 = vmax.f32 %v3335, %v3336
    %v3338 = vrot.slane %v3337, 1
    %v3339 = vmax.f32 %v3337, %v3338
    %v3340 = vsel %vm2597, %v1709, -inf
    %v3341 = vrot.slane %v3340, 4
    %v3342 = vmax.f32 %v3340, %v3341
    %v3343 = vrot.slane %v3342, 2
    %v3344 = vmax.f32 %v3342, %v3343
    %v3345 = vrot.slane %v3344, 1
    %v3346 = vmax.f32 %v3344, %v3345
    %v3347 = vsel %vm2597, %v1711, -inf
    %v3348 = vrot.slane %v3347, 4
    %v3349 = vmax.f32 %v3347, %v3348
    %v3350 = vrot.slane %v3349, 2
    %v3351 = vmax.f32 %v3349, %v3350
    %v3352 = vrot.slane %v3351, 1
    %v3353 = vmax.f32 %v3351, %v3352
    %v3354 = vsel %vm2597, %v1719, -inf
    %v3355 = vrot.slane %v3354, 4
    %v3356 = vmax.f32 %v3354, %v3355
    %v3357 = vrot.slane %v3356, 2
    %v3358 = vmax.f32 %v3356, %v3357
    %v3359 = vrot.slane %v3358, 1
    %v3360 = vmax.f32 %v3358, %v3359
    %v3361 = vsel %vm2597, %v1727, -inf
    %v3362 = vrot.slane %v3361, 4
    %v3363 = vmax.f32 %v3361, %v3362
    %v3364 = vrot.slane %v3363, 2
    %v3365 = vmax.f32 %v3363, %v3364
    %v3366 = vrot.slane %v3365, 1
    %v3367 = vmax.f32 %v3365, %v3366
    %v3368 = vsel %vm2597, %v1726, -inf
    %v3369 = vrot.slane %v3368, 4
    %v3370 = vmax.f32 %v3368, %v3369
    %v3371 = vrot.slane %v3370, 2
    %v3372 = vmax.f32 %v3370, %v3371
    %v3373 = vrot.slane %v3372, 1
    %v3374 = vmax.f32 %v3372, %v3373
    %v3375 = vsel %vm2597, %v1728, -inf
    %v3376 = vrot.slane %v3375, 4
    %v3377 = vmax.f32 %v3375, %v3376
    %v3378 = vrot.slane %v3377, 2
    %v3379 = vmax.f32 %v3377, %v3378
    %v3380 = vrot.slane %v3379, 1
    %v3381 = vmax.f32 %v3379, %v3380
    %v3382 = vsel %vm2597, %v1736, -inf
    %v3383 = vrot.slane %v3382, 4
    %v3384 = vmax.f32 %v3382, %v3383
    %v3385 = vrot.slane %v3384, 2
    %v3386 = vmax.f32 %v3384, %v3385
    %v3387 = vrot.slane %v3386, 1
    %v3388 = vmax.f32 %v3386, %v3387
    %v3389 = vsel %vm2597, %v1744, -inf
    %v3390 = vrot.slane %v3389, 4
    %v3391 = vmax.f32 %v3389, %v3390
    %v3392 = vrot.slane %v3391, 2
    %v3393 = vmax.f32 %v3391, %v3392
    %v3394 = vrot.slane %v3393, 1
    %v3395 = vmax.f32 %v3393, %v3394
    %v3396 = vsel %vm2597, %v1743, -inf
    %v3397 = vrot.slane %v3396, 4
    %v3398 = vmax.f32 %v3396, %v3397
    %v3399 = vrot.slane %v3398, 2
    %v3400 = vmax.f32 %v3398, %v3399
    %v3401 = vrot.slane %v3400, 1
    %v3402 = vmax.f32 %v3400, %v3401
    %v3403 = vsel %vm2597, %v1745, -inf
    %v3404 = vrot.slane %v3403, 4
    %v3405 = vmax.f32 %v3403, %v3404
    %v3406 = vrot.slane %v3405, 2
    %v3407 = vmax.f32 %v3405, %v3406
    %v3408 = vrot.slane %v3407, 1
    %v3409 = vmax.f32 %v3407, %v3408
    %v3410 = vsel %vm2597, %v1753, -inf
    %v3411 = vrot.slane %v3410, 4
    %v3412 = vmax.f32 %v3410, %v3411
    %v3413 = vrot.slane %v3412, 2
    %v3414 = vmax.f32 %v3412, %v3413
    %v3415 = vrot.slane %v3414, 1
    %v3416 = vmax.f32 %v3414, %v3415
    %v3417 = vsel %vm2597, %v1761, -inf
    %v3418 = vrot.slane %v3417, 4
    %v3419 = vmax.f32 %v3417, %v3418
    %v3420 = vrot.slane %v3419, 2
    %v3421 = vmax.f32 %v3419, %v3420
    %v3422 = vrot.slane %v3421, 1
    %v3423 = vmax.f32 %v3421, %v3422
    %v3424 = vsel %vm2597, %v1760, -inf
    %v3425 = vrot.slane %v3424, 4
    %v3426 = vmax.f32 %v3424, %v3425
    %v3427 = vrot.slane %v3426, 2
    %v3428 = vmax.f32 %v3426, %v3427
    %v3429 = vrot.slane %v3428, 1
    %v3430 = vmax.f32 %v3428, %v3429
    %v3431 = vsel %vm2597, %v1762, -inf
    %v3432 = vrot.slane %v3431, 4
    %v3433 = vmax.f32 %v3431, %v3432
    %v3434 = vrot.slane %v3433, 2
    %v3435 = vmax.f32 %v3433, %v3434
    %v3436 = vrot.slane %v3435, 1
    %v3437 = vmax.f32 %v3435, %v3436
    %v3438 = vsel %vm2597, %v1770, -inf
    %v3439 = vrot.slane %v3438, 4
    %v3440 = vmax.f32 %v3438, %v3439
    %v3441 = vrot.slane %v3440, 2
    %v3442 = vmax.f32 %v3440, %v3441
    %v3443 = vrot.slane %v3442, 1
    %v3444 = vmax.f32 %v3442, %v3443
    %v3445 = vsel %vm2597, %v1778, -inf
    %v3446 = vrot.slane %v3445, 4
    %v3447 = vmax.f32 %v3445, %v3446
    %v3448 = vrot.slane %v3447, 2
    %v3449 = vmax.f32 %v3447, %v3448
    %v3450 = vrot.slane %v3449, 1
    %v3451 = vmax.f32 %v3449, %v3450
    %v3452 = vsel %vm2597, %v1777, -inf
    %v3453 = vrot.slane %v3452, 4
    %v3454 = vmax.f32 %v3452, %v3453
    %v3455 = vrot.slane %v3454, 2
    %v3456 = vmax.f32 %v3454, %v3455
    %v3457 = vrot.slane %v3456, 1
    %v3458 = vmax.f32 %v3456, %v3457
    %v3459 = vsel %vm2597, %v1779, -inf
    %v3460 = vrot.slane %v3459, 4
    %v3461 = vmax.f32 %v3459, %v3460
    %v3462 = vrot.slane %v3461, 2
    %v3463 = vmax.f32 %v3461, %v3462
    %v3464 = vrot.slane %v3463, 1
    %v3465 = vmax.f32 %v3463, %v3464
    %v3466 = vsel %vm2597, %v1787, -inf
    %v3467 = vrot.slane %v3466, 4
    %v3468 = vmax.f32 %v3466, %v3467
    %v3469 = vrot.slane %v3468, 2
    %v3470 = vmax.f32 %v3468, %v3469
    %v3471 = vrot.slane %v3470, 1
    %v3472 = vmax.f32 %v3470, %v3471
    %v3473 = vsel %vm2597, %v1795, -inf
    %v3474 = vrot.slane %v3473, 4
    %v3475 = vmax.f32 %v3473, %v3474
    %v3476 = vrot.slane %v3475, 2
    %v3477 = vmax.f32 %v3475, %v3476
    %v3478 = vrot.slane %v3477, 1
    %v3479 = vmax.f32 %v3477, %v3478
    %v3480 = vsel %vm2597, %v1794, -inf
    %v3481 = vrot.slane %v3480, 4
    %v3482 = vmax.f32 %v3480, %v3481
    %v3483 = vrot.slane %v3482, 2
    %v3484 = vmax.f32 %v3482, %v3483
    %v3485 = vrot.slane %v3484, 1
    %v3486 = vmax.f32 %v3484, %v3485
    %v3487 = vsel %vm2597, %v1796, -inf
    %v3488 = vrot.slane %v3487, 4
    %v3489 = vmax.f32 %v3487, %v3488
    %v3490 = vrot.slane %v3489, 2
    %v3491 = vmax.f32 %v3489, %v3490
    %v3492 = vrot.slane %v3491, 1
    %v3493 = vmax.f32 %v3491, %v3492
    %v3494 = vsel %vm2597, %v1804, -inf
    %v3495 = vrot.slane %v3494, 4
    %v3496 = vmax.f32 %v3494, %v3495
    %v3497 = vrot.slane %v3496, 2
    %v3498 = vmax.f32 %v3496, %v3497
    %v3499 = vrot.slane %v3498, 1
    %v3500 = vmax.f32 %v3498, %v3499
    %v3501 = vsel %vm2597, %v1812, -inf
    %v3502 = vrot.slane %v3501, 4
    %v3503 = vmax.f32 %v3501, %v3502
    %v3504 = vrot.slane %v3503, 2
    %v3505 = vmax.f32 %v3503, %v3504
    %v3506 = vrot.slane %v3505, 1
    %v3507 = vmax.f32 %v3505, %v3506
    %v3508 = vsel %vm2597, %v1811, -inf
    %v3509 = vrot.slane %v3508, 4
    %v3510 = vmax.f32 %v3508, %v3509
    %v3511 = vrot.slane %v3510, 2
    %v3512 = vmax.f32 %v3510, %v3511
    %v3513 = vrot.slane %v3512, 1
    %v3514 = vmax.f32 %v3512, %v3513
    %v3515 = vsel %vm2597, %v1813, -inf
    %v3516 = vrot.slane %v3515, 4
    %v3517 = vmax.f32 %v3515, %v3516
    %v3518 = vrot.slane %v3517, 2
    %v3519 = vmax.f32 %v3517, %v3518
    %v3520 = vrot.slane %v3519, 1
    %v3521 = vmax.f32 %v3519, %v3520
    %v3522 = vsel %vm2597, %v1821, -inf
    %v3523 = vrot.slane %v3522, 4
    %v3524 = vmax.f32 %v3522, %v3523
    %v3525 = vrot.slane %v3524, 2
    %v3526 = vmax.f32 %v3524, %v3525
    %v3527 = vrot.slane %v3526, 1
    %v3528 = vmax.f32 %v3526, %v3527
    %v3529 = vsel %vm2597, %v1829, -inf
    %v3530 = vrot.slane %v3529, 4
    %v3531 = vmax.f32 %v3529, %v3530
    %v3532 = vrot.slane %v3531, 2
    %v3533 = vmax.f32 %v3531, %v3532
    %v3534 = vrot.slane %v3533, 1
    %v3535 = vmax.f32 %v3533, %v3534
    %v3536 = vsel %vm2597, %v1828, -inf
    %v3537 = vrot.slane %v3536, 4
    %v3538 = vmax.f32 %v3536, %v3537
    %v3539 = vrot.slane %v3538, 2
    %v3540 = vmax.f32 %v3538, %v3539
    %v3541 = vrot.slane %v3540, 1
    %v3542 = vmax.f32 %v3540, %v3541
    %v3543 = vsel %vm2597, %v1830, -inf
    %v3544 = vrot.slane %v3543, 4
    %v3545 = vmax.f32 %v3543, %v3544
    %v3546 = vrot.slane %v3545, 2
    %v3547 = vmax.f32 %v3545, %v3546
    %v3548 = vrot.slane %v3547, 1
    %v3549 = vmax.f32 %v3547, %v3548
    %v3550 = vsel %vm2597, %v1838, -inf
    %v3551 = vrot.slane %v3550, 4
    %v3552 = vmax.f32 %v3550, %v3551
    %v3553 = vrot.slane %v3552, 2
    %v3554 = vmax.f32 %v3552, %v3553
    %v3555 = vrot.slane %v3554, 1
    %v3556 = vmax.f32 %v3554, %v3555
    %v3557 = vsel %vm2597, %v1846, -inf
    %v3558 = vrot.slane %v3557, 4
    %v3559 = vmax.f32 %v3557, %v3558
    %v3560 = vrot.slane %v3559, 2
    %v3561 = vmax.f32 %v3559, %v3560
    %v3562 = vrot.slane %v3561, 1
    %v3563 = vmax.f32 %v3561, %v3562
    %v3564 = vsel %vm2597, %v1845, -inf
    %v3565 = vrot.slane %v3564, 4
    %v3566 = vmax.f32 %v3564, %v3565
    %v3567 = vrot.slane %v3566, 2
    %v3568 = vmax.f32 %v3566, %v3567
    %v3569 = vrot.slane %v3568, 1
    %v3570 = vmax.f32 %v3568, %v3569
    %v3571 = vsel %vm2597, %v1847, -inf
    %v3572 = vrot.slane %v3571, 4
    %v3573 = vmax.f32 %v3571, %v3572
    %v3574 = vrot.slane %v3573, 2
    %v3575 = vmax.f32 %v3573, %v3574
    %v3576 = vrot.slane %v3575, 1
    %v3577 = vmax.f32 %v3575, %v3576
    %v3578 = vsel %vm2597, %v1855, -inf
    %v3579 = vrot.slane %v3578, 4
    %v3580 = vmax.f32 %v3578, %v3579
    %v3581 = vrot.slane %v3580, 2
    %v3582 = vmax.f32 %v3580, %v3581
    %v3583 = vrot.slane %v3582, 1
    %v3584 = vmax.f32 %v3582, %v3583
    %v3585 = vsel %vm2597, %v1863, -inf
    %v3586 = vrot.slane %v3585, 4
    %v3587 = vmax.f32 %v3585, %v3586
    %v3588 = vrot.slane %v3587, 2
    %v3589 = vmax.f32 %v3587, %v3588
    %v3590 = vrot.slane %v3589, 1
    %v3591 = vmax.f32 %v3589, %v3590
    %v3592 = vsel %vm2597, %v1862, -inf
    %v3593 = vrot.slane %v3592, 4
    %v3594 = vmax.f32 %v3592, %v3593
    %v3595 = vrot.slane %v3594, 2
    %v3596 = vmax.f32 %v3594, %v3595
    %v3597 = vrot.slane %v3596, 1
    %v3598 = vmax.f32 %v3596, %v3597
    %v3599 = vsel %vm2597, %v1864, -inf
    %v3600 = vrot.slane %v3599, 4
    %v3601 = vmax.f32 %v3599, %v3600
    %v3602 = vrot.slane %v3601, 2
    %v3603 = vmax.f32 %v3601, %v3602
    %v3604 = vrot.slane %v3603, 1
    %v3605 = vmax.f32 %v3603, %v3604
    %v3606 = vsel %vm2597, %v1872, -inf
    %v3607 = vrot.slane %v3606, 4
    %v3608 = vmax.f32 %v3606, %v3607
    %v3609 = vrot.slane %v3608, 2
    %v3610 = vmax.f32 %v3608, %v3609
    %v3611 = vrot.slane %v3610, 1
    %v3612 = vmax.f32 %v3610, %v3611
    %v3613 = vsel %vm2597, %v1880, -inf
    %v3614 = vrot.slane %v3613, 4
    %v3615 = vmax.f32 %v3613, %v3614
    %v3616 = vrot.slane %v3615, 2
    %v3617 = vmax.f32 %v3615, %v3616
    %v3618 = vrot.slane %v3617, 1
    %v3619 = vmax.f32 %v3617, %v3618
    %v3620 = vsel %vm2597, %v1879, -inf
    %v3621 = vrot.slane %v3620, 4
    %v3622 = vmax.f32 %v3620, %v3621
    %v3623 = vrot.slane %v3622, 2
    %v3624 = vmax.f32 %v3622, %v3623
    %v3625 = vrot.slane %v3624, 1
    %v3626 = vmax.f32 %v3624, %v3625
    %v3627 = vsel %vm2597, %v1881, -inf
    %v3628 = vrot.slane %v3627, 4
    %v3629 = vmax.f32 %v3627, %v3628
    %v3630 = vrot.slane %v3629, 2
    %v3631 = vmax.f32 %v3629, %v3630
    %v3632 = vrot.slane %v3631, 1
    %v3633 = vmax.f32 %v3631, %v3632
    %v3634 = vsel %vm2597, %v1889, -inf
    %v3635 = vrot.slane %v3634, 4
    %v3636 = vmax.f32 %v3634, %v3635
    %v3637 = vrot.slane %v3636, 2
    %v3638 = vmax.f32 %v3636, %v3637
    %v3639 = vrot.slane %v3638, 1
    %v3640 = vmax.f32 %v3638, %v3639
    %v3641 = vsel %vm2597, %v1897, -inf
    %v3642 = vrot.slane %v3641, 4
    %v3643 = vmax.f32 %v3641, %v3642
    %v3644 = vrot.slane %v3643, 2
    %v3645 = vmax.f32 %v3643, %v3644
    %v3646 = vrot.slane %v3645, 1
    %v3647 = vmax.f32 %v3645, %v3646
    %v3648 = vsel %vm2597, %v1896, -inf
    %v3649 = vrot.slane %v3648, 4
    %v3650 = vmax.f32 %v3648, %v3649
    %v3651 = vrot.slane %v3650, 2
    %v3652 = vmax.f32 %v3650, %v3651
    %v3653 = vrot.slane %v3652, 1
    %v3654 = vmax.f32 %v3652, %v3653
    %v3655 = vsel %vm2597, %v1898, -inf
    %v3656 = vrot.slane %v3655, 4
    %v3657 = vmax.f32 %v3655, %v3656
    %v3658 = vrot.slane %v3657, 2
    %v3659 = vmax.f32 %v3657, %v3658
    %v3660 = vrot.slane %v3659, 1
    %v3661 = vmax.f32 %v3659, %v3660
    %v3662 = vsel %vm2597, %v1906, -inf
    %v3663 = vrot.slane %v3662, 4
    %v3664 = vmax.f32 %v3662, %v3663
    %v3665 = vrot.slane %v3664, 2
    %v3666 = vmax.f32 %v3664, %v3665
    %v3667 = vrot.slane %v3666, 1
    %v3668 = vmax.f32 %v3666, %v3667
    %v3669 = vsel %vm2597, %v1914, -inf
    %v3670 = vrot.slane %v3669, 4
    %v3671 = vmax.f32 %v3669, %v3670
    %v3672 = vrot.slane %v3671, 2
    %v3673 = vmax.f32 %v3671, %v3672
    %v3674 = vrot.slane %v3673, 1
    %v3675 = vmax.f32 %v3673, %v3674
    %v3676 = vsel %vm2597, %v1913, -inf
    %v3677 = vrot.slane %v3676, 4
    %v3678 = vmax.f32 %v3676, %v3677
    %v3679 = vrot.slane %v3678, 2
    %v3680 = vmax.f32 %v3678, %v3679
    %v3681 = vrot.slane %v3680, 1
    %v3682 = vmax.f32 %v3680, %v3681
    %v3683 = vsel %vm2597, %v1915, -inf
    %v3684 = vrot.slane %v3683, 4
    %v3685 = vmax.f32 %v3683, %v3684
    %v3686 = vrot.slane %v3685, 2
    %v3687 = vmax.f32 %v3685, %v3686
    %v3688 = vrot.slane %v3687, 1
    %v3689 = vmax.f32 %v3687, %v3688
    %v3690 = vsel %vm2597, %v1923, -inf
    %v3691 = vrot.slane %v3690, 4
    %v3692 = vmax.f32 %v3690, %v3691
    %v3693 = vrot.slane %v3692, 2
    %v3694 = vmax.f32 %v3692, %v3693
    %v3695 = vrot.slane %v3694, 1
    %v3696 = vmax.f32 %v3694, %v3695
    %v3697 = vsel %vm2597, %v1931, -inf
    %v3698 = vrot.slane %v3697, 4
    %v3699 = vmax.f32 %v3697, %v3698
    %v3700 = vrot.slane %v3699, 2
    %v3701 = vmax.f32 %v3699, %v3700
    %v3702 = vrot.slane %v3701, 1
    %v3703 = vmax.f32 %v3701, %v3702
    %v3704 = vsel %vm2597, %v1930, -inf
    %v3705 = vrot.slane %v3704, 4
    %v3706 = vmax.f32 %v3704, %v3705
    %v3707 = vrot.slane %v3706, 2
    %v3708 = vmax.f32 %v3706, %v3707
    %v3709 = vrot.slane %v3708, 1
    %v3710 = vmax.f32 %v3708, %v3709
    %v3711 = vsel %vm2597, %v1932, -inf
    %v3712 = vrot.slane %v3711, 4
    %v3713 = vmax.f32 %v3711, %v3712
    %v3714 = vrot.slane %v3713, 2
    %v3715 = vmax.f32 %v3713, %v3714
    %v3716 = vrot.slane %v3715, 1
    %v3717 = vmax.f32 %v3715, %v3716
    %v3718 = vsel %vm2597, %v1940, -inf
    %v3719 = vrot.slane %v3718, 4
    %v3720 = vmax.f32 %v3718, %v3719
    %v3721 = vrot.slane %v3720, 2
    %v3722 = vmax.f32 %v3720, %v3721
    %v3723 = vrot.slane %v3722, 1
    %v3724 = vmax.f32 %v3722, %v3723
    %v3725 = vsel %vm2597, %v1948, -inf
    %v3726 = vrot.slane %v3725, 4
    %v3727 = vmax.f32 %v3725, %v3726
    %v3728 = vrot.slane %v3727, 2
    %v3729 = vmax.f32 %v3727, %v3728
    %v3730 = vrot.slane %v3729, 1
    %v3731 = vmax.f32 %v3729, %v3730
    %v3732 = vsel %vm2597, %v1947, -inf
    %v3733 = vrot.slane %v3732, 4
    %v3734 = vmax.f32 %v3732, %v3733
    %v3735 = vrot.slane %v3734, 2
    %v3736 = vmax.f32 %v3734, %v3735
    %v3737 = vrot.slane %v3736, 1
    %v3738 = vmax.f32 %v3736, %v3737
    %v3739 = vsel %vm2597, %v1949, -inf
    %v3740 = vrot.slane %v3739, 4
    %v3741 = vmax.f32 %v3739, %v3740
    %v3742 = vrot.slane %v3741, 2
    %v3743 = vmax.f32 %v3741, %v3742
    %v3744 = vrot.slane %v3743, 1
    %v3745 = vmax.f32 %v3743, %v3744
    %v3746 = vsel %vm2597, %v1957, -inf
    %v3747 = vrot.slane %v3746, 4
    %v3748 = vmax.f32 %v3746, %v3747
    %v3749 = vrot.slane %v3748, 2
    %v3750 = vmax.f32 %v3748, %v3749
    %v3751 = vrot.slane %v3750, 1
    %v3752 = vmax.f32 %v3750, %v3751
    %v3753 = vsel %vm2597, %v1965, -inf
    %v3754 = vrot.slane %v3753, 4
    %v3755 = vmax.f32 %v3753, %v3754
    %v3756 = vrot.slane %v3755, 2
    %v3757 = vmax.f32 %v3755, %v3756
    %v3758 = vrot.slane %v3757, 1
    %v3759 = vmax.f32 %v3757, %v3758
    %v3760 = vsel %vm2597, %v1964, -inf
    %v3761 = vrot.slane %v3760, 4
    %v3762 = vmax.f32 %v3760, %v3761
    %v3763 = vrot.slane %v3762, 2
    %v3764 = vmax.f32 %v3762, %v3763
    %v3765 = vrot.slane %v3764, 1
    %v3766 = vmax.f32 %v3764, %v3765
    %v3767 = vsel %vm2597, %v1966, -inf
    %v3768 = vrot.slane %v3767, 4
    %v3769 = vmax.f32 %v3767, %v3768
    %v3770 = vrot.slane %v3769, 2
    %v3771 = vmax.f32 %v3769, %v3770
    %v3772 = vrot.slane %v3771, 1
    %v3773 = vmax.f32 %v3771, %v3772
    %v3774 = vsel %vm2597, %v1974, -inf
    %v3775 = vrot.slane %v3774, 4
    %v3776 = vmax.f32 %v3774, %v3775
    %v3777 = vrot.slane %v3776, 2
    %v3778 = vmax.f32 %v3776, %v3777
    %v3779 = vrot.slane %v3778, 1
    %v3780 = vmax.f32 %v3778, %v3779
    %v3781 = vsel %vm2597, %v1982, -inf
    %v3782 = vrot.slane %v3781, 4
    %v3783 = vmax.f32 %v3781, %v3782
    %v3784 = vrot.slane %v3783, 2
    %v3785 = vmax.f32 %v3783, %v3784
    %v3786 = vrot.slane %v3785, 1
    %v3787 = vmax.f32 %v3785, %v3786
    %v3788 = vsel %vm2597, %v1981, -inf
    %v3789 = vrot.slane %v3788, 4
    %v3790 = vmax.f32 %v3788, %v3789
    %v3791 = vrot.slane %v3790, 2
    %v3792 = vmax.f32 %v3790, %v3791
    %v3793 = vrot.slane %v3792, 1
    %v3794 = vmax.f32 %v3792, %v3793
    %v3795 = vsel %vm2597, %v1983, -inf
    %v3796 = vrot.slane %v3795, 4
    %v3797 = vmax.f32 %v3795, %v3796
    %v3798 = vrot.slane %v3797, 2
    %v3799 = vmax.f32 %v3797, %v3798
    %v3800 = vrot.slane %v3799, 1
    %v3801 = vmax.f32 %v3799, %v3800
    %v3802 = vsel %vm2597, %v1991, -inf
    %v3803 = vrot.slane %v3802, 4
    %v3804 = vmax.f32 %v3802, %v3803
    %v3805 = vrot.slane %v3804, 2
    %v3806 = vmax.f32 %v3804, %v3805
    %v3807 = vrot.slane %v3806, 1
    %v3808 = vmax.f32 %v3806, %v3807
    %v3809 = vsel %vm2597, %v1999, -inf
    %v3810 = vrot.slane %v3809, 4
    %v3811 = vmax.f32 %v3809, %v3810
    %v3812 = vrot.slane %v3811, 2
    %v3813 = vmax.f32 %v3811, %v3812
    %v3814 = vrot.slane %v3813, 1
    %v3815 = vmax.f32 %v3813, %v3814
    %v3816 = vsel %vm2597, %v1998, -inf
    %v3817 = vrot.slane %v3816, 4
    %v3818 = vmax.f32 %v3816, %v3817
    %v3819 = vrot.slane %v3818, 2
    %v3820 = vmax.f32 %v3818, %v3819
    %v3821 = vrot.slane %v3820, 1
    %v3822 = vmax.f32 %v3820, %v3821
    %v3823 = vsel %vm2597, %v2000, -inf
    %v3824 = vrot.slane %v3823, 4
    %v3825 = vmax.f32 %v3823, %v3824
    %v3826 = vrot.slane %v3825, 2
    %v3827 = vmax.f32 %v3825, %v3826
    %v3828 = vrot.slane %v3827, 1
    %v3829 = vmax.f32 %v3827, %v3828
    %v3830 = vsel %vm2597, %v2008, -inf
    %v3831 = vrot.slane %v3830, 4
    %v3832 = vmax.f32 %v3830, %v3831
    %v3833 = vrot.slane %v3832, 2
    %v3834 = vmax.f32 %v3832, %v3833
    %v3835 = vrot.slane %v3834, 1
    %v3836 = vmax.f32 %v3834, %v3835
    %v3837 = vsel %vm2597, %v2016, -inf
    %v3838 = vrot.slane %v3837, 4
    %v3839 = vmax.f32 %v3837, %v3838
    %v3840 = vrot.slane %v3839, 2
    %v3841 = vmax.f32 %v3839, %v3840
    %v3842 = vrot.slane %v3841, 1
    %v3843 = vmax.f32 %v3841, %v3842
    %v3844 = vsel %vm2597, %v2015, -inf
    %v3845 = vrot.slane %v3844, 4
    %v3846 = vmax.f32 %v3844, %v3845
    %v3847 = vrot.slane %v3846, 2
    %v3848 = vmax.f32 %v3846, %v3847
    %v3849 = vrot.slane %v3848, 1
    %v3850 = vmax.f32 %v3848, %v3849
    %v3851 = vsel %vm2597, %v2017, -inf
    %v3852 = vrot.slane %v3851, 4
    %v3853 = vmax.f32 %v3851, %v3852
    %v3854 = vrot.slane %v3853, 2
    %v3855 = vmax.f32 %v3853, %v3854
    %v3856 = vrot.slane %v3855, 1
    %v3857 = vmax.f32 %v3855, %v3856
    %v3858 = vsel %vm2597, %v2025, -inf
    %v3859 = vrot.slane %v3858, 4
    %v3860 = vmax.f32 %v3858, %v3859
    %v3861 = vrot.slane %v3860, 2
    %v3862 = vmax.f32 %v3860, %v3861
    %v3863 = vrot.slane %v3862, 1
    %v3864 = vmax.f32 %v3862, %v3863
    %v3865 = vsel %vm2597, %v2033, -inf
    %v3866 = vrot.slane %v3865, 4
    %v3867 = vmax.f32 %v3865, %v3866
    %v3868 = vrot.slane %v3867, 2
    %v3869 = vmax.f32 %v3867, %v3868
    %v3870 = vrot.slane %v3869, 1
    %v3871 = vmax.f32 %v3869, %v3870
    %v3872 = vsel %vm2597, %v2032, -inf
    %v3873 = vrot.slane %v3872, 4
    %v3874 = vmax.f32 %v3872, %v3873
    %v3875 = vrot.slane %v3874, 2
    %v3876 = vmax.f32 %v3874, %v3875
    %v3877 = vrot.slane %v3876, 1
    %v3878 = vmax.f32 %v3876, %v3877
    %v3879 = vsel %vm2597, %v2034, -inf
    %v3880 = vrot.slane %v3879, 4
    %v3881 = vmax.f32 %v3879, %v3880
    %v3882 = vrot.slane %v3881, 2
    %v3883 = vmax.f32 %v3881, %v3882
    %v3884 = vrot.slane %v3883, 1
    %v3885 = vmax.f32 %v3883, %v3884
    %v3886 = vsel %vm2597, %v2042, -inf
    %v3887 = vrot.slane %v3886, 4
    %v3888 = vmax.f32 %v3886, %v3887
    %v3889 = vrot.slane %v3888, 2
    %v3890 = vmax.f32 %v3888, %v3889
    %v3891 = vrot.slane %v3890, 1
    %v3892 = vmax.f32 %v3890, %v3891
    %v3893 = vsel %vm2597, %v2050, -inf
    %v3894 = vrot.slane %v3893, 4
    %v3895 = vmax.f32 %v3893, %v3894
    %v3896 = vrot.slane %v3895, 2
    %v3897 = vmax.f32 %v3895, %v3896
    %v3898 = vrot.slane %v3897, 1
    %v3899 = vmax.f32 %v3897, %v3898
    %v3900 = vsel %vm2597, %v2049, -inf
    %v3901 = vrot.slane %v3900, 4
    %v3902 = vmax.f32 %v3900, %v3901
    %v3903 = vrot.slane %v3902, 2
    %v3904 = vmax.f32 %v3902, %v3903
    %v3905 = vrot.slane %v3904, 1
    %v3906 = vmax.f32 %v3904, %v3905
    %v3907 = vsel %vm2597, %v2051, -inf
    %v3908 = vrot.slane %v3907, 4
    %v3909 = vmax.f32 %v3907, %v3908
    %v3910 = vrot.slane %v3909, 2
    %v3911 = vmax.f32 %v3909, %v3910
    %v3912 = vrot.slane %v3911, 1
    %v3913 = vmax.f32 %v3911, %v3912
    %v3914 = vsel %vm2597, %v2059, -inf
    %v3915 = vrot.slane %v3914, 4
    %v3916 = vmax.f32 %v3914, %v3915
    %v3917 = vrot.slane %v3916, 2
    %v3918 = vmax.f32 %v3916, %v3917
    %v3919 = vrot.slane %v3918, 1
    %v3920 = vmax.f32 %v3918, %v3919
    %v3921 = vsel %vm2597, %v2067, -inf
    %v3922 = vrot.slane %v3921, 4
    %v3923 = vmax.f32 %v3921, %v3922
    %v3924 = vrot.slane %v3923, 2
    %v3925 = vmax.f32 %v3923, %v3924
    %v3926 = vrot.slane %v3925, 1
    %v3927 = vmax.f32 %v3925, %v3926
    %v3928 = vsel %vm2597, %v2066, -inf
    %v3929 = vrot.slane %v3928, 4
    %v3930 = vmax.f32 %v3928, %v3929
    %v3931 = vrot.slane %v3930, 2
    %v3932 = vmax.f32 %v3930, %v3931
    %v3933 = vrot.slane %v3932, 1
    %v3934 = vmax.f32 %v3932, %v3933
    %v3935 = vsel %vm2597, %v2068, -inf
    %v3936 = vrot.slane %v3935, 4
    %v3937 = vmax.f32 %v3935, %v3936
    %v3938 = vrot.slane %v3937, 2
    %v3939 = vmax.f32 %v3937, %v3938
    %v3940 = vrot.slane %v3939, 1
    %v3941 = vmax.f32 %v3939, %v3940
    %v3942 = vsel %vm2597, %v2076, -inf
    %v3943 = vrot.slane %v3942, 4
    %v3944 = vmax.f32 %v3942, %v3943
    %v3945 = vrot.slane %v3944, 2
    %v3946 = vmax.f32 %v3944, %v3945
    %v3947 = vrot.slane %v3946, 1
    %v3948 = vmax.f32 %v3946, %v3947
    %v3949 = vsel %vm2597, %v2084, -inf
    %v3950 = vrot.slane %v3949, 4
    %v3951 = vmax.f32 %v3949, %v3950
    %v3952 = vrot.slane %v3951, 2
    %v3953 = vmax.f32 %v3951, %v3952
    %v3954 = vrot.slane %v3953, 1
    %v3955 = vmax.f32 %v3953, %v3954
    %v3956 = vsel %vm2597, %v2083, -inf
    %v3957 = vrot.slane %v3956, 4
    %v3958 = vmax.f32 %v3956, %v3957
    %v3959 = vrot.slane %v3958, 2
    %v3960 = vmax.f32 %v3958, %v3959
    %v3961 = vrot.slane %v3960, 1
    %v3962 = vmax.f32 %v3960, %v3961
    %v3963 = vsel %vm2597, %v2085, -inf
    %v3964 = vrot.slane %v3963, 4
    %v3965 = vmax.f32 %v3963, %v3964
    %v3966 = vrot.slane %v3965, 2
    %v3967 = vmax.f32 %v3965, %v3966
    %v3968 = vrot.slane %v3967, 1
    %v3969 = vmax.f32 %v3967, %v3968
    %v3970 = vsel %vm2597, %v2093, -inf
    %v3971 = vrot.slane %v3970, 4
    %v3972 = vmax.f32 %v3970, %v3971
    %v3973 = vrot.slane %v3972, 2
    %v3974 = vmax.f32 %v3972, %v3973
    %v3975 = vrot.slane %v3974, 1
    %v3976 = vmax.f32 %v3974, %v3975
    %v3977 = vsel %vm2597, %v2101, -inf
    %v3978 = vrot.slane %v3977, 4
    %v3979 = vmax.f32 %v3977, %v3978
    %v3980 = vrot.slane %v3979, 2
    %v3981 = vmax.f32 %v3979, %v3980
    %v3982 = vrot.slane %v3981, 1
    %v3983 = vmax.f32 %v3981, %v3982
    %v3984 = vsel %vm2597, %v2100, -inf
    %v3985 = vrot.slane %v3984, 4
    %v3986 = vmax.f32 %v3984, %v3985
    %v3987 = vrot.slane %v3986, 2
    %v3988 = vmax.f32 %v3986, %v3987
    %v3989 = vrot.slane %v3988, 1
    %v3990 = vmax.f32 %v3988, %v3989
    %v3991 = vsel %vm2597, %v2102, -inf
    %v3992 = vrot.slane %v3991, 4
    %v3993 = vmax.f32 %v3991, %v3992
    %v3994 = vrot.slane %v3993, 2
    %v3995 = vmax.f32 %v3993, %v3994
    %v3996 = vrot.slane %v3995, 1
    %v3997 = vmax.f32 %v3995, %v3996
    %v3998 = vsel %vm2597, %v2110, -inf
    %v3999 = vrot.slane %v3998, 4
    %v4000 = vmax.f32 %v3998, %v3999
    %v4001 = vrot.slane %v4000, 2
    %v4002 = vmax.f32 %v4000, %v4001
    %v4003 = vrot.slane %v4002, 1
    %v4004 = vmax.f32 %v4002, %v4003
    %v4005 = vsel %vm2597, %v2118, -inf
    %v4006 = vrot.slane %v4005, 4
    %v4007 = vmax.f32 %v4005, %v4006
    %v4008 = vrot.slane %v4007, 2
    %v4009 = vmax.f32 %v4007, %v4008
    %v4010 = vrot.slane %v4009, 1
    %v4011 = vmax.f32 %v4009, %v4010
    %v4012 = vsel %vm2597, %v2117, -inf
    %v4013 = vrot.slane %v4012, 4
    %v4014 = vmax.f32 %v4012, %v4013
    %v4015 = vrot.slane %v4014, 2
    %v4016 = vmax.f32 %v4014, %v4015
    %v4017 = vrot.slane %v4016, 1
    %v4018 = vmax.f32 %v4016, %v4017
    %v4019 = vsel %vm2597, %v2119, -inf
    %v4020 = vrot.slane %v4019, 4
    %v4021 = vmax.f32 %v4019, %v4020
    %v4022 = vrot.slane %v4021, 2
    %v4023 = vmax.f32 %v4021, %v4022
    %v4024 = vrot.slane %v4023, 1
    %v4025 = vmax.f32 %v4023, %v4024
    %v4026 = vsel %vm2597, %v2127, -inf
    %v4027 = vrot.slane %v4026, 4
    %v4028 = vmax.f32 %v4026, %v4027
    %v4029 = vrot.slane %v4028, 2
    %v4030 = vmax.f32 %v4028, %v4029
    %v4031 = vrot.slane %v4030, 1
    %v4032 = vmax.f32 %v4030, %v4031
    %v4033 = vsel %vm2597, %v2135, -inf
    %v4034 = vrot.slane %v4033, 4
    %v4035 = vmax.f32 %v4033, %v4034
    %v4036 = vrot.slane %v4035, 2
    %v4037 = vmax.f32 %v4035, %v4036
    %v4038 = vrot.slane %v4037, 1
    %v4039 = vmax.f32 %v4037, %v4038
    %v4040 = vsel %vm2597, %v2134, -inf
    %v4041 = vrot.slane %v4040, 4
    %v4042 = vmax.f32 %v4040, %v4041
    %v4043 = vrot.slane %v4042, 2
    %v4044 = vmax.f32 %v4042, %v4043
    %v4045 = vrot.slane %v4044, 1
    %v4046 = vmax.f32 %v4044, %v4045
    %v4047 = vsel %vm2597, %v2136, -inf
    %v4048 = vrot.slane %v4047, 4
    %v4049 = vmax.f32 %v4047, %v4048
    %v4050 = vrot.slane %v4049, 2
    %v4051 = vmax.f32 %v4049, %v4050
    %v4052 = vrot.slane %v4051, 1
    %v4053 = vmax.f32 %v4051, %v4052
    %v4054 = vsel %vm2597, %v2144, -inf
    %v4055 = vrot.slane %v4054, 4
    %v4056 = vmax.f32 %v4054, %v4055
    %v4057 = vrot.slane %v4056, 2
    %v4058 = vmax.f32 %v4056, %v4057
    %v4059 = vrot.slane %v4058, 1
    %v4060 = vmax.f32 %v4058, %v4059
    %v4061 = vsel %vm2597, %v2152, -inf
    %v4062 = vrot.slane %v4061, 4
    %v4063 = vmax.f32 %v4061, %v4062
    %v4064 = vrot.slane %v4063, 2
    %v4065 = vmax.f32 %v4063, %v4064
    %v4066 = vrot.slane %v4065, 1
    %v4067 = vmax.f32 %v4065, %v4066
    %v4068 = vsel %vm2597, %v2151, -inf
    %v4069 = vrot.slane %v4068, 4
    %v4070 = vmax.f32 %v4068, %v4069
    %v4071 = vrot.slane %v4070, 2
    %v4072 = vmax.f32 %v4070, %v4071
    %v4073 = vrot.slane %v4072, 1
    %v4074 = vmax.f32 %v4072, %v4073
    %v4075 = vsel %vm2597, %v2153, -inf
    %v4076 = vrot.slane %v4075, 4
    %v4077 = vmax.f32 %v4075, %v4076
    %v4078 = vrot.slane %v4077, 2
    %v4079 = vmax.f32 %v4077, %v4078
    %v4080 = vrot.slane %v4079, 1
    %v4081 = vmax.f32 %v4079, %v4080
    %v4082 = vsel %vm2597, %v2161, -inf
    %v4083 = vrot.slane %v4082, 4
    %v4084 = vmax.f32 %v4082, %v4083
    %v4085 = vrot.slane %v4084, 2
    %v4086 = vmax.f32 %v4084, %v4085
    %v4087 = vrot.slane %v4086, 1
    %v4088 = vmax.f32 %v4086, %v4087
    %v4089 = vsel %vm2597, %v2169, -inf
    %v4090 = vrot.slane %v4089, 4
    %v4091 = vmax.f32 %v4089, %v4090
    %v4092 = vrot.slane %v4091, 2
    %v4093 = vmax.f32 %v4091, %v4092
    %v4094 = vrot.slane %v4093, 1
    %v4095 = vmax.f32 %v4093, %v4094
    %v4096 = vsel %vm2597, %v2168, -inf
    %v4097 = vrot.slane %v4096, 4
    %v4098 = vmax.f32 %v4096, %v4097
    %v4099 = vrot.slane %v4098, 2
    %v4100 = vmax.f32 %v4098, %v4099
    %v4101 = vrot.slane %v4100, 1
    %v4102 = vmax.f32 %v4100, %v4101
    %v4103 = vsel %vm2597, %v2170, -inf
    %v4104 = vrot.slane %v4103, 4
    %v4105 = vmax.f32 %v4103, %v4104
    %v4106 = vrot.slane %v4105, 2
    %v4107 = vmax.f32 %v4105, %v4106
    %v4108 = vrot.slane %v4107, 1
    %v4109 = vmax.f32 %v4107, %v4108
    %v4110 = vsel %vm2597, %v2178, -inf
    %v4111 = vrot.slane %v4110, 4
    %v4112 = vmax.f32 %v4110, %v4111
    %v4113 = vrot.slane %v4112, 2
    %v4114 = vmax.f32 %v4112, %v4113
    %v4115 = vrot.slane %v4114, 1
    %v4116 = vmax.f32 %v4114, %v4115
    %v4117 = vsel %vm2597, %v2186, -inf
    %v4118 = vrot.slane %v4117, 4
    %v4119 = vmax.f32 %v4117, %v4118
    %v4120 = vrot.slane %v4119, 2
    %v4121 = vmax.f32 %v4119, %v4120
    %v4122 = vrot.slane %v4121, 1
    %v4123 = vmax.f32 %v4121, %v4122
    %v4124 = vsel %vm2597, %v2185, -inf
    %v4125 = vrot.slane %v4124, 4
    %v4126 = vmax.f32 %v4124, %v4125
    %v4127 = vrot.slane %v4126, 2
    %v4128 = vmax.f32 %v4126, %v4127
    %v4129 = vrot.slane %v4128, 1
    %v4130 = vmax.f32 %v4128, %v4129
    %v4131 = vsel %vm2597, %v2187, -inf
    %v4132 = vrot.slane %v4131, 4
    %v4133 = vmax.f32 %v4131, %v4132
    %v4134 = vrot.slane %v4133, 2
    %v4135 = vmax.f32 %v4133, %v4134
    %v4136 = vrot.slane %v4135, 1
    %v4137 = vmax.f32 %v4135, %v4136
    %v4138 = vsel %vm2597, %v2195, -inf
    %v4139 = vrot.slane %v4138, 4
    %v4140 = vmax.f32 %v4138, %v4139
    %v4141 = vrot.slane %v4140, 2
    %v4142 = vmax.f32 %v4140, %v4141
    %v4143 = vrot.slane %v4142, 1
    %v4144 = vmax.f32 %v4142, %v4143
    %v4145 = vsel %vm2597, %v2203, -inf
    %v4146 = vrot.slane %v4145, 4
    %v4147 = vmax.f32 %v4145, %v4146
    %v4148 = vrot.slane %v4147, 2
    %v4149 = vmax.f32 %v4147, %v4148
    %v4150 = vrot.slane %v4149, 1
    %v4151 = vmax.f32 %v4149, %v4150
    %v4152 = vsel %vm2597, %v2202, -inf
    %v4153 = vrot.slane %v4152, 4
    %v4154 = vmax.f32 %v4152, %v4153
    %v4155 = vrot.slane %v4154, 2
    %v4156 = vmax.f32 %v4154, %v4155
    %v4157 = vrot.slane %v4156, 1
    %v4158 = vmax.f32 %v4156, %v4157
    %v4159 = vsel %vm2597, %v2204, -inf
    %v4160 = vrot.slane %v4159, 4
    %v4161 = vmax.f32 %v4159, %v4160
    %v4162 = vrot.slane %v4161, 2
    %v4163 = vmax.f32 %v4161, %v4162
    %v4164 = vrot.slane %v4163, 1
    %v4165 = vmax.f32 %v4163, %v4164
    %v4166 = vsel %vm2597, %v2212, -inf
    %v4167 = vrot.slane %v4166, 4
    %v4168 = vmax.f32 %v4166, %v4167
    %v4169 = vrot.slane %v4168, 2
    %v4170 = vmax.f32 %v4168, %v4169
    %v4171 = vrot.slane %v4170, 1
    %v4172 = vmax.f32 %v4170, %v4171
    %v4173 = vsel %vm2597, %v2220, -inf
    %v4174 = vrot.slane %v4173, 4
    %v4175 = vmax.f32 %v4173, %v4174
    %v4176 = vrot.slane %v4175, 2
    %v4177 = vmax.f32 %v4175, %v4176
    %v4178 = vrot.slane %v4177, 1
    %v4179 = vmax.f32 %v4177, %v4178
    %v4180 = vsel %vm2597, %v2219, -inf
    %v4181 = vrot.slane %v4180, 4
    %v4182 = vmax.f32 %v4180, %v4181
    %v4183 = vrot.slane %v4182, 2
    %v4184 = vmax.f32 %v4182, %v4183
    %v4185 = vrot.slane %v4184, 1
    %v4186 = vmax.f32 %v4184, %v4185
    %v4187 = vsel %vm2597, %v2221, -inf
    %v4188 = vrot.slane %v4187, 4
    %v4189 = vmax.f32 %v4187, %v4188
    %v4190 = vrot.slane %v4189, 2
    %v4191 = vmax.f32 %v4189, %v4190
    %v4192 = vrot.slane %v4191, 1
    %v4193 = vmax.f32 %v4191, %v4192
    %v4194 = vsel %vm2597, %v2229, -inf
    %v4195 = vrot.slane %v4194, 4
    %v4196 = vmax.f32 %v4194, %v4195
    %v4197 = vrot.slane %v4196, 2
    %v4198 = vmax.f32 %v4196, %v4197
    %v4199 = vrot.slane %v4198, 1
    %v4200 = vmax.f32 %v4198, %v4199
    %v4201 = vsel %vm2597, %v2237, -inf
    %v4202 = vrot.slane %v4201, 4
    %v4203 = vmax.f32 %v4201, %v4202
    %v4204 = vrot.slane %v4203, 2
    %v4205 = vmax.f32 %v4203, %v4204
    %v4206 = vrot.slane %v4205, 1
    %v4207 = vmax.f32 %v4205, %v4206
    %v4208 = vsel %vm2597, %v2236, -inf
    %v4209 = vrot.slane %v4208, 4
    %v4210 = vmax.f32 %v4208, %v4209
    %v4211 = vrot.slane %v4210, 2
    %v4212 = vmax.f32 %v4210, %v4211
    %v4213 = vrot.slane %v4212, 1
    %v4214 = vmax.f32 %v4212, %v4213
    %v4215 = vsel %vm2597, %v2238, -inf
    %v4216 = vrot.slane %v4215, 4
    %v4217 = vmax.f32 %v4215, %v4216
    %v4218 = vrot.slane %v4217, 2
    %v4219 = vmax.f32 %v4217, %v4218
    %v4220 = vrot.slane %v4219, 1
    %v4221 = vmax.f32 %v4219, %v4220
    %v4222 = vsel %vm2597, %v2246, -inf
    %v4223 = vrot.slane %v4222, 4
    %v4224 = vmax.f32 %v4222, %v4223
    %v4225 = vrot.slane %v4224, 2
    %v4226 = vmax.f32 %v4224, %v4225
    %v4227 = vrot.slane %v4226, 1
    %v4228 = vmax.f32 %v4226, %v4227
    %v4229 = vsel %vm2597, %v2254, -inf
    %v4230 = vrot.slane %v4229, 4
    %v4231 = vmax.f32 %v4229, %v4230
    %v4232 = vrot.slane %v4231, 2
    %v4233 = vmax.f32 %v4231, %v4232
    %v4234 = vrot.slane %v4233, 1
    %v4235 = vmax.f32 %v4233, %v4234
    %v4236 = vsel %vm2597, %v2253, -inf
    %v4237 = vrot.slane %v4236, 4
    %v4238 = vmax.f32 %v4236, %v4237
    %v4239 = vrot.slane %v4238, 2
    %v4240 = vmax.f32 %v4238, %v4239
    %v4241 = vrot.slane %v4240, 1
    %v4242 = vmax.f32 %v4240, %v4241
    %v4243 = vsel %vm2597, %v2255, -inf
    %v4244 = vrot.slane %v4243, 4
    %v4245 = vmax.f32 %v4243, %v4244
    %v4246 = vrot.slane %v4245, 2
    %v4247 = vmax.f32 %v4245, %v4246
    %v4248 = vrot.slane %v4247, 1
    %v4249 = vmax.f32 %v4247, %v4248
    %v4250 = vsel %vm2597, %v2263, -inf
    %v4251 = vrot.slane %v4250, 4
    %v4252 = vmax.f32 %v4250, %v4251
    %v4253 = vrot.slane %v4252, 2
    %v4254 = vmax.f32 %v4252, %v4253
    %v4255 = vrot.slane %v4254, 1
    %v4256 = vmax.f32 %v4254, %v4255
    %v4257 = vsel %vm2597, %v2271, -inf
    %v4258 = vrot.slane %v4257, 4
    %v4259 = vmax.f32 %v4257, %v4258
    %v4260 = vrot.slane %v4259, 2
    %v4261 = vmax.f32 %v4259, %v4260
    %v4262 = vrot.slane %v4261, 1
    %v4263 = vmax.f32 %v4261, %v4262
    %v4264 = vsel %vm2597, %v2270, -inf
    %v4265 = vrot.slane %v4264, 4
    %v4266 = vmax.f32 %v4264, %v4265
    %v4267 = vrot.slane %v4266, 2
    %v4268 = vmax.f32 %v4266, %v4267
    %v4269 = vrot.slane %v4268, 1
    %v4270 = vmax.f32 %v4268, %v4269
    %v4271 = vsel %vm2597, %v2272, -inf
    %v4272 = vrot.slane %v4271, 4
    %v4273 = vmax.f32 %v4271, %v4272
    %v4274 = vrot.slane %v4273, 2
    %v4275 = vmax.f32 %v4273, %v4274
    %v4276 = vrot.slane %v4275, 1
    %v4277 = vmax.f32 %v4275, %v4276
    %v4278 = vsel %vm2597, %v2280, -inf
    %v4279 = vrot.slane %v4278, 4
    %v4280 = vmax.f32 %v4278, %v4279
    %v4281 = vrot.slane %v4280, 2
    %v4282 = vmax.f32 %v4280, %v4281
    %v4283 = vrot.slane %v4282, 1
    %v4284 = vmax.f32 %v4282, %v4283
    %v4285 = vsel %vm2597, %v2288, -inf
    %v4286 = vrot.slane %v4285, 4
    %v4287 = vmax.f32 %v4285, %v4286
    %v4288 = vrot.slane %v4287, 2
    %v4289 = vmax.f32 %v4287, %v4288
    %v4290 = vrot.slane %v4289, 1
    %v4291 = vmax.f32 %v4289, %v4290
    %v4292 = vsel %vm2597, %v2287, -inf
    %v4293 = vrot.slane %v4292, 4
    %v4294 = vmax.f32 %v4292, %v4293
    %v4295 = vrot.slane %v4294, 2
    %v4296 = vmax.f32 %v4294, %v4295
    %v4297 = vrot.slane %v4296, 1
    %v4298 = vmax.f32 %v4296, %v4297
    %v4299 = vsel %vm2597, %v2289, -inf
    %v4300 = vrot.slane %v4299, 4
    %v4301 = vmax.f32 %v4299, %v4300
    %v4302 = vrot.slane %v4301, 2
    %v4303 = vmax.f32 %v4301, %v4302
    %v4304 = vrot.slane %v4303, 1
    %v4305 = vmax.f32 %v4303, %v4304
    %v4306 = vsel %vm2597, %v2297, -inf
    %v4307 = vrot.slane %v4306, 4
    %v4308 = vmax.f32 %v4306, %v4307
    %v4309 = vrot.slane %v4308, 2
    %v4310 = vmax.f32 %v4308, %v4309
    %v4311 = vrot.slane %v4310, 1
    %v4312 = vmax.f32 %v4310, %v4311
    %v4313 = vsel %vm2597, %v2305, -inf
    %v4314 = vrot.slane %v4313, 4
    %v4315 = vmax.f32 %v4313, %v4314
    %v4316 = vrot.slane %v4315, 2
    %v4317 = vmax.f32 %v4315, %v4316
    %v4318 = vrot.slane %v4317, 1
    %v4319 = vmax.f32 %v4317, %v4318
    %v4320 = vsel %vm2597, %v2304, -inf
    %v4321 = vrot.slane %v4320, 4
    %v4322 = vmax.f32 %v4320, %v4321
    %v4323 = vrot.slane %v4322, 2
    %v4324 = vmax.f32 %v4322, %v4323
    %v4325 = vrot.slane %v4324, 1
    %v4326 = vmax.f32 %v4324, %v4325
    %v4327 = vsel %vm2597, %v2306, -inf
    %v4328 = vrot.slane %v4327, 4
    %v4329 = vmax.f32 %v4327, %v4328
    %v4330 = vrot.slane %v4329, 2
    %v4331 = vmax.f32 %v4329, %v4330
    %v4332 = vrot.slane %v4331, 1
    %v4333 = vmax.f32 %v4331, %v4332
    %v4334 = vsel %vm2597, %v2314, -inf
    %v4335 = vrot.slane %v4334, 4
    %v4336 = vmax.f32 %v4334, %v4335
    %v4337 = vrot.slane %v4336, 2
    %v4338 = vmax.f32 %v4336, %v4337
    %v4339 = vrot.slane %v4338, 1
    %v4340 = vmax.f32 %v4338, %v4339
    %v4341 = vsel %vm2597, %v2322, -inf
    %v4342 = vrot.slane %v4341, 4
    %v4343 = vmax.f32 %v4341, %v4342
    %v4344 = vrot.slane %v4343, 2
    %v4345 = vmax.f32 %v4343, %v4344
    %v4346 = vrot.slane %v4345, 1
    %v4347 = vmax.f32 %v4345, %v4346
    %v4348 = vsel %vm2597, %v2321, -inf
    %v4349 = vrot.slane %v4348, 4
    %v4350 = vmax.f32 %v4348, %v4349
    %v4351 = vrot.slane %v4350, 2
    %v4352 = vmax.f32 %v4350, %v4351
    %v4353 = vrot.slane %v4352, 1
    %v4354 = vmax.f32 %v4352, %v4353
    %v4355 = vsel %vm2597, %v2323, -inf
    %v4356 = vrot.slane %v4355, 4
    %v4357 = vmax.f32 %v4355, %v4356
    %v4358 = vrot.slane %v4357, 2
    %v4359 = vmax.f32 %v4357, %v4358
    %v4360 = vrot.slane %v4359, 1
    %v4361 = vmax.f32 %v4359, %v4360
    %v4362 = vsel %vm2597, %v2331, -inf
    %v4363 = vrot.slane %v4362, 4
    %v4364 = vmax.f32 %v4362, %v4363
    %v4365 = vrot.slane %v4364, 2
    %v4366 = vmax.f32 %v4364, %v4365
    %v4367 = vrot.slane %v4366, 1
    %v4368 = vmax.f32 %v4366, %v4367
    %v4369 = vsel %vm2597, %v2339, -inf
    %v4370 = vrot.slane %v4369, 4
    %v4371 = vmax.f32 %v4369, %v4370
    %v4372 = vrot.slane %v4371, 2
    %v4373 = vmax.f32 %v4371, %v4372
    %v4374 = vrot.slane %v4373, 1
    %v4375 = vmax.f32 %v4373, %v4374
    %v4376 = vsel %vm2597, %v2338, -inf
    %v4377 = vrot.slane %v4376, 4
    %v4378 = vmax.f32 %v4376, %v4377
    %v4379 = vrot.slane %v4378, 2
    %v4380 = vmax.f32 %v4378, %v4379
    %v4381 = vrot.slane %v4380, 1
    %v4382 = vmax.f32 %v4380, %v4381
    %v4383 = vsel %vm2597, %v2340, -inf
    %v4384 = vrot.slane %v4383, 4
    %v4385 = vmax.f32 %v4383, %v4384
    %v4386 = vrot.slane %v4385, 2
    %v4387 = vmax.f32 %v4385, %v4386
    %v4388 = vrot.slane %v4387, 1
    %v4389 = vmax.f32 %v4387, %v4388
    %v4390 = vmax.f32 %v2604, %v2660
    %v4391 = vmax.f32 %v2611, %v2667
    %v4392 = vmax.f32 %v2618, %v2674
    %v4393 = vmax.f32 %v2625, %v2681
    %v4394 = vmax.f32 %v2632, %v2688
    %v4395 = vmax.f32 %v2639, %v2695
    %v4396 = vmax.f32 %v2646, %v2702
    %v4397 = vmax.f32 %v2653, %v2709
    %v4398 = vmax.f32 %v2716, %v2772
    %v4399 = vmax.f32 %v2723, %v2779
    %v4400 = vmax.f32 %v2730, %v2786
    %v4401 = vmax.f32 %v2737, %v2793
    %v4402 = vmax.f32 %v2744, %v2800
    %v4403 = vmax.f32 %v2751, %v2807
    %v4404 = vmax.f32 %v2758, %v2814
    %v4405 = vmax.f32 %v2765, %v2821
    %v4406 = vmax.f32 %v2828, %v2884
    %v4407 = vmax.f32 %v2835, %v2891
    %v4408 = vmax.f32 %v2842, %v2898
    %v4409 = vmax.f32 %v2849, %v2905
    %v4410 = vmax.f32 %v2856, %v2912
    %v4411 = vmax.f32 %v2863, %v2919
    %v4412 = vmax.f32 %v2870, %v2926
    %v4413 = vmax.f32 %v2877, %v2933
    %v4414 = vmax.f32 %v2940, %v2996
    %v4415 = vmax.f32 %v2947, %v3003
    %v4416 = vmax.f32 %v2954, %v3010
    %v4417 = vmax.f32 %v2961, %v3017
    %v4418 = vmax.f32 %v2968, %v3024
    %v4419 = vmax.f32 %v2975, %v3031
    %v4420 = vmax.f32 %v2982, %v3038
    %v4421 = vmax.f32 %v2989, %v3045
    %v4422 = vmax.f32 %v3052, %v3108
    %v4423 = vmax.f32 %v3059, %v3115
    %v4424 = vmax.f32 %v3066, %v3122
    %v4425 = vmax.f32 %v3073, %v3129
    %v4426 = vmax.f32 %v3080, %v3136
    %v4427 = vmax.f32 %v3087, %v3143
    %v4428 = vmax.f32 %v3094, %v3150
    %v4429 = vmax.f32 %v3101, %v3157
    %v4430 = vmax.f32 %v3164, %v3220
    %v4431 = vmax.f32 %v3171, %v3227
    %v4432 = vmax.f32 %v3178, %v3234
    %v4433 = vmax.f32 %v3185, %v3241
    %v4434 = vmax.f32 %v3192, %v3248
    %v4435 = vmax.f32 %v3199, %v3255
    %v4436 = vmax.f32 %v3206, %v3262
    %v4437 = vmax.f32 %v3213, %v3269
    %v4438 = vmax.f32 %v3276, %v3332
    %v4439 = vmax.f32 %v3283, %v3339
    %v4440 = vmax.f32 %v3290, %v3346
    %v4441 = vmax.f32 %v3297, %v3353
    %v4442 = vmax.f32 %v3304, %v3360
    %v4443 = vmax.f32 %v3311, %v3367
    %v4444 = vmax.f32 %v3318, %v3374
    %v4445 = vmax.f32 %v3325, %v3381
    %v4446 = vmax.f32 %v3388, %v3444
    %v4447 = vmax.f32 %v3395, %v3451
    %v4448 = vmax.f32 %v3402, %v3458
    %v4449 = vmax.f32 %v3409, %v3465
    %v4450 = vmax.f32 %v3416, %v3472
    %v4451 = vmax.f32 %v3423, %v3479
    %v4452 = vmax.f32 %v3430, %v3486
    %v4453 = vmax.f32 %v3437, %v3493
    %v4454 = vmax.f32 %v3500, %v3556
    %v4455 = vmax.f32 %v3507, %v3563
    %v4456 = vmax.f32 %v3514, %v3570
    %v4457 = vmax.f32 %v3521, %v3577
    %v4458 = vmax.f32 %v3528, %v3584
    %v4459 = vmax.f32 %v3535, %v3591
    %v4460 = vmax.f32 %v3542, %v3598
    %v4461 = vmax.f32 %v3549, %v3605
    %v4462 = vmax.f32 %v3612, %v3668
    %v4463 = vmax.f32 %v3619, %v3675
    %v4464 = vmax.f32 %v3626, %v3682
    %v4465 = vmax.f32 %v3633, %v3689
    %v4466 = vmax.f32 %v3640, %v3696
    %v4467 = vmax.f32 %v3647, %v3703
    %v4468 = vmax.f32 %v3654, %v3710
    %v4469 = vmax.f32 %v3661, %v3717
    %v4470 = vmax.f32 %v3724, %v3780
    %v4471 = vmax.f32 %v3731, %v3787
    %v4472 = vmax.f32 %v3738, %v3794
    %v4473 = vmax.f32 %v3745, %v3801
    %v4474 = vmax.f32 %v3752, %v3808
    %v4475 = vmax.f32 %v3759, %v3815
    %v4476 = vmax.f32 %v3766, %v3822
    %v4477 = vmax.f32 %v3773, %v3829
    %v4478 = vmax.f32 %v3836, %v3892
    %v4479 = vmax.f32 %v3843, %v3899
    %v4480 = vmax.f32 %v3850, %v3906
    %v4481 = vmax.f32 %v3857, %v3913
    %v4482 = vmax.f32 %v3864, %v3920
    %v4483 = vmax.f32 %v3871, %v3927
    %v4484 = vmax.f32 %v3878, %v3934
    %v4485 = vmax.f32 %v3885, %v3941
    %v4486 = vmax.f32 %v3948, %v4004
    %v4487 = vmax.f32 %v3955, %v4011
    %v4488 = vmax.f32 %v3962, %v4018
    %v4489 = vmax.f32 %v3969, %v4025
    %v4490 = vmax.f32 %v3976, %v4032
    %v4491 = vmax.f32 %v3983, %v4039
    %v4492 = vmax.f32 %v3990, %v4046
    %v4493 = vmax.f32 %v3997, %v4053
    %v4494 = vmax.f32 %v4060, %v4116
    %v4495 = vmax.f32 %v4067, %v4123
    %v4496 = vmax.f32 %v4074, %v4130
    %v4497 = vmax.f32 %v4081, %v4137
    %v4498 = vmax.f32 %v4088, %v4144
    %v4499 = vmax.f32 %v4095, %v4151
    %v4500 = vmax.f32 %v4102, %v4158
    %v4501 = vmax.f32 %v4109, %v4165
    %v4502 = vmax.f32 %v4172, %v4228
    %v4503 = vmax.f32 %v4179, %v4235
    %v4504 = vmax.f32 %v4186, %v4242
    %v4505 = vmax.f32 %v4193, %v4249
    %v4506 = vmax.f32 %v4200, %v4256
    %v4507 = vmax.f32 %v4207, %v4263
    %v4508 = vmax.f32 %v4214, %v4270
    %v4509 = vmax.f32 %v4221, %v4277
    %v4510 = vmax.f32 %v4284, %v4340
    %v4511 = vmax.f32 %v4291, %v4347
    %v4512 = vmax.f32 %v4298, %v4354
    %v4513 = vmax.f32 %v4305, %v4361
    %v4514 = vmax.f32 %v4312, %v4368
    %v4515 = vmax.f32 %v4319, %v4375
    %v4516 = vmax.f32 %v4326, %v4382
    %v4517 = vmax.f32 %v4333, %v4389
    %v4646 = vsel %vm1185, %v4391, %v4390
    %vm4647 = vcmask 1042434
    %v4648 = vsel %vm4647, %v4392, %v4646
    %vm4649 = vcmask 1043459
    %v4650 = vsel %vm4649, %v4393, %v4648
    %vm4651 = vcmask 1044484
    %v4652 = vsel %vm4651, %v4394, %v4650
    %vm4653 = vcmask 1045509
    %v4654 = vsel %vm4653, %v4395, %v4652
    %vm4655 = vcmask 1046534
    %v4656 = vsel %vm4655, %v4396, %v4654
    %vm4657 = vcmask 1047559
    %v4658 = vsel %vm4657, %v4397, %v4656
    %v4659 = vsel %vm1185, %v4399, %v4398
    %v4660 = vsel %vm4647, %v4400, %v4659
    %v4661 = vsel %vm4649, %v4401, %v4660
    %v4662 = vsel %vm4651, %v4402, %v4661
    %v4663 = vsel %vm4653, %v4403, %v4662
    %v4664 = vsel %vm4655, %v4404, %v4663
    %v4665 = vsel %vm4657, %v4405, %v4664
    %v4666 = vsel %vm1185, %v4407, %v4406
    %v4667 = vsel %vm4647, %v4408, %v4666
    %v4668 = vsel %vm4649, %v4409, %v4667
    %v4669 = vsel %vm4651, %v4410, %v4668
    %v4670 = vsel %vm4653, %v4411, %v4669
    %v4671 = vsel %vm4655, %v4412, %v4670
    %v4672 = vsel %vm4657, %v4413, %v4671
    %v4673 = vsel %vm1185, %v4415, %v4414
    %v4674 = vsel %vm4647, %v4416, %v4673
    %v4675 = vsel %vm4649, %v4417, %v4674
    %v4676 = vsel %vm4651, %v4418, %v4675
    %v4677 = vsel %vm4653, %v4419, %v4676
    %v4678 = vsel %vm4655, %v4420, %v4677
    %v4679 = vsel %vm4657, %v4421, %v4678
    %v4680 = vsel %vm1185, %v4423, %v4422
    %v4681 = vsel %vm4647, %v4424, %v4680
    %v4682 = vsel %vm4649, %v4425, %v4681
    %v4683 = vsel %vm4651, %v4426, %v4682
    %v4684 = vsel %vm4653, %v4427, %v4683
    %v4685 = vsel %vm4655, %v4428, %v4684
    %v4686 = vsel %vm4657, %v4429, %v4685
    %v4687 = vsel %vm1185, %v4431, %v4430
    %v4688 = vsel %vm4647, %v4432, %v4687
    %v4689 = vsel %vm4649, %v4433, %v4688
    %v4690 = vsel %vm4651, %v4434, %v4689
    %v4691 = vsel %vm4653, %v4435, %v4690
    %v4692 = vsel %vm4655, %v4436, %v4691
    %v4693 = vsel %vm4657, %v4437, %v4692
    %v4694 = vsel %vm1185, %v4439, %v4438
    %v4695 = vsel %vm4647, %v4440, %v4694
    %v4696 = vsel %vm4649, %v4441, %v4695
    %v4697 = vsel %vm4651, %v4442, %v4696
    %v4698 = vsel %vm4653, %v4443, %v4697
    %v4699 = vsel %vm4655, %v4444, %v4698
    %v4700 = vsel %vm4657, %v4445, %v4699
    %v4701 = vsel %vm1185, %v4447, %v4446
    %v4702 = vsel %vm4647, %v4448, %v4701
    %v4703 = vsel %vm4649, %v4449, %v4702
    %v4704 = vsel %vm4651, %v4450, %v4703
    %v4705 = vsel %vm4653, %v4451, %v4704
    %v4706 = vsel %vm4655, %v4452, %v4705
    %v4707 = vsel %vm4657, %v4453, %v4706
    %v4708 = vsel %vm1185, %v4455, %v4454
    %v4709 = vsel %vm4647, %v4456, %v4708
    %v4710 = vsel %vm4649, %v4457, %v4709
    %v4711 = vsel %vm4651, %v4458, %v4710
    %v4712 = vsel %vm4653, %v4459, %v4711
    %v4713 = vsel %vm4655, %v4460, %v4712
    %v4714 = vsel %vm4657, %v4461, %v4713
    %v4715 = vsel %vm1185, %v4463, %v4462
    %v4716 = vsel %vm4647, %v4464, %v4715
    %v4717 = vsel %vm4649, %v4465, %v4716
    %v4718 = vsel %vm4651, %v4466, %v4717
    %v4719 = vsel %vm4653, %v4467, %v4718
    %v4720 = vsel %vm4655, %v4468, %v4719
    %v4721 = vsel %vm4657, %v4469, %v4720
    %v4722 = vsel %vm1185, %v4471, %v4470
    %v4723 = vsel %vm4647, %v4472, %v4722
    %v4724 = vsel %vm4649, %v4473, %v4723
    %v4725 = vsel %vm4651, %v4474, %v4724
    %v4726 = vsel %vm4653, %v4475, %v4725
    %v4727 = vsel %vm4655, %v4476, %v4726
    %v4728 = vsel %vm4657, %v4477, %v4727
    %v4729 = vsel %vm1185, %v4479, %v4478
    %v4730 = vsel %vm4647, %v4480, %v4729
    %v4731 = vsel %vm4649, %v4481, %v4730
    %v4732 = vsel %vm4651, %v4482, %v4731
    %v4733 = vsel %vm4653, %v4483, %v4732
    %v4734 = vsel %vm4655, %v4484, %v4733
    %v4735 = vsel %vm4657, %v4485, %v4734
    %v4736 = vsel %vm1185, %v4487, %v4486
    %v4737 = vsel %vm4647, %v4488, %v4736
    %v4738 = vsel %vm4649, %v4489, %v4737
    %v4739 = vsel %vm4651, %v4490, %v4738
    %v4740 = vsel %vm4653, %v4491, %v4739
    %v4741 = vsel %vm4655, %v4492, %v4740
    %v4742 = vsel %vm4657, %v4493, %v4741
    %v4743 = vsel %vm1185, %v4495, %v4494
    %v4744 = vsel %vm4647, %v4496, %v4743
    %v4745 = vsel %vm4649, %v4497, %v4744
    %v4746 = vsel %vm4651, %v4498, %v4745
    %v4747 = vsel %vm4653, %v4499, %v4746
    %v4748 = vsel %vm4655, %v4500, %v4747
    %v4749 = vsel %vm4657, %v4501, %v4748
    %v4750 = vsel %vm1185, %v4503, %v4502
    %v4751 = vsel %vm4647, %v4504, %v4750
    %v4752 = vsel %vm4649, %v4505, %v4751
    %v4753 = vsel %vm4651, %v4506, %v4752
    %v4754 = vsel %vm4653, %v4507, %v4753
    %v4755 = vsel %vm4655, %v4508, %v4754
    %v4756 = vsel %vm4657, %v4509, %v4755
    %v4757 = vsel %vm1185, %v4511, %v4510
    %v4758 = vsel %vm4647, %v4512, %v4757
    %v4759 = vsel %vm4649, %v4513, %v4758
    %v4760 = vsel %vm4651, %v4514, %v4759
    %v4761 = vsel %vm4653, %v4515, %v4760
    %v4762 = vsel %vm4655, %v4516, %v4761
    %v4763 = vsel %vm4657, %v4517, %v4762
    %4780 = vst [vmem:[%s4] sm:$0xff] %v4658
    %4781 = vst [vmem:[%s4 + $0x8] sm:$0xff] %v4665
    %4782 = vst [vmem:[%s4 + $0x10] sm:$0xff] %v4672
    %4783 = vst [vmem:[%s4 + $0x18] sm:$0xff] %v4679
    %4784 = vst [vmem:[%s4 + $0x20] sm:$0xff] %v4686
    %4785 = vst [vmem:[%s4 + $0x28] sm:$0xff] %v4693
    %4786 = vst [vmem:[%s4 + $0x30] sm:$0xff] %v4700
    %4787 = vst [vmem:[%s4 + $0x38] sm:$0xff] %v4707
    %4788 = vst [vmem:[%s4 + $0x40] sm:$0xff] %v4714
    %4789 = vst [vmem:[%s4 + $0x48] sm:$0xff] %v4721
    %4790 = vst [vmem:[%s4 + $0x50] sm:$0xff] %v4728
    %4791 = vst [vmem:[%s4 + $0x58] sm:$0xff] %v4735
    %4792 = vst [vmem:[%s4 + $0x60] sm:$0xff] %v4742
    %4793 = vst [vmem:[%s4 + $0x68] sm:$0xff] %v4749
    %4794 = vst [vmem:[%s4 + $0x70] sm:$0xff] %v4756
    %4795 = vst [vmem:[%s4 + $0x78] sm:$0xff] %v4763
    // Predicated region
    $region18: #{gp_lenet_forward.3} parent=1 // pred_check
      _
    $region19: #{gp_lenet_forward.3} parent=1 // pred_check_branch
      %4797 = sbr.rel (0) target = $region21
    $region20: #{gp_lenet_forward.3} parent=1 // pred_region
      _
    $region21: #{gp_lenet_forward.3} parent=1 // pred_fallthru
      _
    // Predicated region
    $region22: #{gp_lenet_forward.3} parent=1 // pred_check
      _
    $region23: #{gp_lenet_forward.3} parent=1 // pred_check_branch
      %4799 = sbr.rel (0) target = $region25
    $region24: #{gp_lenet_forward.3} parent=1 // pred_region
      %s4801 = ssub.s32 32, 32
      %4802 = vsyncadd [#allocation3], %s4801
      %s4804 = sshll.u32 [#allocation2], 4
      %s4805 = int_to_ptr.vmem [resolvable:$true] %s4804
      %4807 = dma.vmem_to_hbm [thread:$0]  %s4805, 32, %s5, [#allocation3]
    $region25: #{gp_lenet_forward.3} parent=1 // pred_fallthru
      _
    // Predicated region
    $region26: #{gp_lenet_forward.3} parent=1 // pred_check
      _
    $region27: #{gp_lenet_forward.3} parent=1 // pred_check_branch
      %4809 = sbr.rel (0) target = $region29
    $region28: #{gp_lenet_forward.3} parent=1 // pred_region
      _
    $region29: #{gp_lenet_forward.3} parent=1 // pred_fallthru
      _
    // Predicated region
    $region30: #{gp_lenet_forward.3} parent=1 // pred_check
      _
    $region31: #{gp_lenet_forward.3} parent=1 // pred_check_branch
      %4811 = sbr.rel (0) target = $region33
    $region32: #{gp_lenet_forward.3} parent=1 // pred_region
      %4812 = dma.done [#allocation3], 32
    $region33: #{gp_lenet_forward.3} parent=1 // pred_fallthru
      _
    %4813 = vsyncpa [#allocation3], 1

// kernel: gp_lenet_forward.4
$region0: #{gp_lenet_forward.4}
  #allocation0 [shape = 'u32[]', space=smem, size = 0x4, offset = 0x4, fixed_abs, tag = 'smem constant byte address 0x4 - core index']
  #allocation1 [shape = 'u32[144,128]{1,0:T(1,128)}', space=vmem, size = 0x12000, scoped, tag = 'internal scratch']
  %s0 = inlined_call_operand.vmem [shape: bf16[128,256], index: 0, kind: input, shape index: {}]
  %s1 = inlined_call_operand.vmem [shape: bf16[256,128], index: 1, kind: input, shape index: {}]
  %s2 = inlined_call_operand.vmem [shape: f32[1,128], index: 2, kind: input, shape index: {}]
  %s3 = inlined_call_operand.vmem [shape: f32[1,128], index: 3, kind: input, shape index: {}]
  %s4 = inlined_call_operand.vmem [shape: f32[2,4,4,128], index: 4, kind: output, shape index: {0}]
  %s5 = inlined_call_operand.hbm [shape: f32[2,128], index: 5, kind: output, shape index: {1}]
  %6 = xla_tuple %s4, %s5
  %s7 = sld [smem:[#allocation0]]
  $region34: #{gp_lenet_forward.4} parent=0
    _
  %s9 = ssub.s32 1, %s7
  %s10 = scalar_select 0, %s9, %s7
  $region1: #{gp_lenet_forward.4} parent=0
    #allocation2 [shape = 'u8[1024]{0}', space=vmem, size = 0x400, scoped, tag = 'output window, operand 1, single buffered']
    #allocation3 [shape = 's32[1]{0}', space=sflag, size = 0x4, scoped, tag = 'scoped memory for gp_lenet_forward.4']
    %11 = vsyncpa [#allocation3], 0
    // Predicated region
    $region2: #{gp_lenet_forward.4} parent=1 // pred_check
      _
    $region3: #{gp_lenet_forward.4} parent=1 // pred_check_branch
      %13 = sbr.rel (0) target = $region5
    $region4: #{gp_lenet_forward.4} parent=1 // pred_region
      _
    $region5: #{gp_lenet_forward.4} parent=1 // pred_fallthru
      _
    // Predicated region
    $region6: #{gp_lenet_forward.4} parent=1 // pred_check
      _
    $region7: #{gp_lenet_forward.4} parent=1 // pred_check_branch
      %15 = sbr.rel (0) target = $region9
    $region8: #{gp_lenet_forward.4} parent=1 // pred_region
      _
    $region9: #{gp_lenet_forward.4} parent=1 // pred_fallthru
      _
    // Predicated region
    $region10: #{gp_lenet_forward.4} parent=1 // pred_check
      _
    $region11: #{gp_lenet_forward.4} parent=1 // pred_check_branch
      %17 = sbr.rel (0) target = $region13
    $region12: #{gp_lenet_forward.4} parent=1 // pred_region
      _
    $region13: #{gp_lenet_forward.4} parent=1 // pred_fallthru
      _
    // Predicated region
    $region14: #{gp_lenet_forward.4} parent=1 // pred_check
      _
    $region15: #{gp_lenet_forward.4} parent=1 // pred_check_branch
      %19 = sbr.rel (0) target = $region17
    $region16: #{gp_lenet_forward.4} parent=1 // pred_region
      _
    $region17: #{gp_lenet_forward.4} parent=1 // pred_fallthru
      _
    %v21 = vld [vmem:[%s0] sm:$0xff]
    %v22 = vld [vmem:[%s0 + $0x8] sm:$0xff]
    %v23 = vld [vmem:[%s0 + $0x10] sm:$0xff]
    %v24 = vld [vmem:[%s0 + $0x18] sm:$0xff]
    %v25 = vld [vmem:[%s0 + $0x20] sm:$0xff]
    %v26 = vld [vmem:[%s0 + $0x28] sm:$0xff]
    %v27 = vld [vmem:[%s0 + $0x30] sm:$0xff]
    %v28 = vld [vmem:[%s0 + $0x38] sm:$0xff]
    %v29 = vld [vmem:[%s0 + $0x40] sm:$0xff]
    %v30 = vld [vmem:[%s0 + $0x48] sm:$0xff]
    %v31 = vld [vmem:[%s0 + $0x50] sm:$0xff]
    %v32 = vld [vmem:[%s0 + $0x58] sm:$0xff]
    %v33 = vld [vmem:[%s0 + $0x60] sm:$0xff]
    %v34 = vld [vmem:[%s0 + $0x68] sm:$0xff]
    %v35 = vld [vmem:[%s0 + $0x70] sm:$0xff]
    %v36 = vld [vmem:[%s0 + $0x78] sm:$0xff]
    %v37 = vld [vmem:[%s1] sm:$0xf]
    %v38 = vld [vmem:[%s1 + $0x4] sm:$0xf]
    %v39 = vld [vmem:[%s1 + $0x8] sm:$0xf]
    %v40 = vld [vmem:[%s1 + $0xc] sm:$0xf]
    %v41 = vld [vmem:[%s1 + $0x10] sm:$0xf]
    %v42 = vld [vmem:[%s1 + $0x14] sm:$0xf]
    %v43 = vld [vmem:[%s1 + $0x18] sm:$0xf]
    %v44 = vld [vmem:[%s1 + $0x1c] sm:$0xf]
    %v45 = vld [vmem:[%s1 + $0x20] sm:$0xf]
    %v46 = vld [vmem:[%s1 + $0x24] sm:$0xf]
    %v47 = vld [vmem:[%s1 + $0x28] sm:$0xf]
    %v48 = vld [vmem:[%s1 + $0x2c] sm:$0xf]
    %v49 = vld [vmem:[%s1 + $0x30] sm:$0xf]
    %v50 = vld [vmem:[%s1 + $0x34] sm:$0xf]
    %v51 = vld [vmem:[%s1 + $0x38] sm:$0xf]
    %v52 = vld [vmem:[%s1 + $0x3c] sm:$0xf]
    %v53 = vld [vmem:[%s1 + $0x40] sm:$0xf]
    %v54 = vld [vmem:[%s1 + $0x44] sm:$0xf]
    %v55 = vld [vmem:[%s1 + $0x48] sm:$0xf]
    %v56 = vld [vmem:[%s1 + $0x4c] sm:$0xf]
    %v57 = vld [vmem:[%s1 + $0x50] sm:$0xf]
    %v58 = vld [vmem:[%s1 + $0x54] sm:$0xf]
    %v59 = vld [vmem:[%s1 + $0x58] sm:$0xf]
    %v60 = vld [vmem:[%s1 + $0x5c] sm:$0xf]
    %v61 = vld [vmem:[%s1 + $0x60] sm:$0xf]
    %v62 = vld [vmem:[%s1 + $0x64] sm:$0xf]
    %v63 = vld [vmem:[%s1 + $0x68] sm:$0xf]
    %v64 = vld [vmem:[%s1 + $0x6c] sm:$0xf]
    %v65 = vld [vmem:[%s1 + $0x70] sm:$0xf]
    %v66 = vld [vmem:[%s1 + $0x74] sm:$0xf]
    %v67 = vld [vmem:[%s1 + $0x78] sm:$0xf]
    %v68 = vld [vmem:[%s1 + $0x7c] sm:$0xf]
    %v85 = vunpack.c.l.b16 %v21
    %v86 = vunpack.c.h.b16 %v21
    %v87 = vunpack.c.l.b16 %v22
    %v88 = vunpack.c.h.b16 %v22
    %v89 = vunpack.c.l.b16 %v23
    %v90 = vunpack.c.h.b16 %v23
    %v91 = vunpack.c.l.b16 %v24
    %v92 = vunpack.c.h.b16 %v24
    %v93 = vunpack.c.l.b16 %v25
    %v94 = vunpack.c.h.b16 %v25
    %v95 = vunpack.c.l.b16 %v26
    %v96 = vunpack.c.h.b16 %v26
    %v97 = vunpack.c.l.b16 %v27
    %v98 = vunpack.c.h.b16 %v27
    %v99 = vunpack.c.l.b16 %v28
    %v100 = vunpack.c.h.b16 %v28
    %v101 = vunpack.c.l.b16 %v29
    %v102 = vunpack.c.h.b16 %v29
    %v103 = vunpack.c.l.b16 %v30
    %v104 = vunpack.c.h.b16 %v30
    %v105 = vunpack.c.l.b16 %v31
    %v106 = vunpack.c.h.b16 %v31
    %v107 = vunpack.c.l.b16 %v32
    %v108 = vunpack.c.h.b16 %v32
    %v109 = vunpack.c.l.b16 %v33
    %v110 = vunpack.c.h.b16 %v33
    %v111 = vunpack.c.l.b16 %v34
    %v112 = vunpack.c.h.b16 %v34
    %v113 = vunpack.c.l.b16 %v35
    %v114 = vunpack.c.h.b16 %v35
    %v115 = vunpack.c.l.b16 %v36
    %v116 = vunpack.c.h.b16 %v36
    %v117 = vpack.c.b16 %v87, %v85
    %v118 = vpack.c.b16 %v88, %v86
    %v119 = vpack.c.b16 %v91, %v89
    %v120 = vpack.c.b16 %v92, %v90
    %v121 = vpack.c.b16 %v95, %v93
    %v122 = vpack.c.b16 %v96, %v94
    %v123 = vpack.c.b16 %v99, %v97
    %v124 = vpack.c.b16 %v100, %v98
    %v125 = vpack.c.b16 %v103, %v101
    %v126 = vpack.c.b16 %v104, %v102
    %v127 = vpack.c.b16 %v107, %v105
    %v128 = vpack.c.b16 %v108, %v106
    %v129 = vpack.c.b16 %v111, %v109
    %v130 = vpack.c.b16 %v112, %v110
    %v131 = vpack.c.b16 %v115, %v113
    %v132 = vpack.c.b16 %v116, %v114
    %v181 = vunpack.c.l.b16 %v37
    %v182 = vunpack.c.l.b16 %v38
    %v183 = vunpack.c.l.b16 %v39
    %v184 = vunpack.c.l.b16 %v40
    %v185 = vunpack.c.l.b16 %v41
    %v186 = vunpack.c.l.b16 %v42
    %v187 = vunpack.c.l.b16 %v43
    %v188 = vunpack.c.l.b16 %v44
    %v189 = vunpack.c.l.b16 %v45
    %v190 = vunpack.c.l.b16 %v46
    %v191 = vunpack.c.l.b16 %v47
    %v192 = vunpack.c.l.b16 %v48
    %v193 = vunpack.c.l.b16 %v49
    %v194 = vunpack.c.l.b16 %v50
    %v195 = vunpack.c.l.b16 %v51
    %v196 = vunpack.c.l.b16 %v52
    %v197 = vunpack.c.l.b16 %v53
    %v198 = vunpack.c.l.b16 %v54
    %v199 = vunpack.c.l.b16 %v55
    %v200 = vunpack.c.l.b16 %v56
    %v201 = vunpack.c.l.b16 %v57
    %v202 = vunpack.c.l.b16 %v58
    %v203 = vunpack.c.l.b16 %v59
    %v204 = vunpack.c.l.b16 %v60
    %v205 = vunpack.c.l.b16 %v61
    %v206 = vunpack.c.l.b16 %v62
    %v207 = vunpack.c.l.b16 %v63
    %v208 = vunpack.c.l.b16 %v64
    %v209 = vunpack.c.l.b16 %v65
    %v210 = vunpack.c.l.b16 %v66
    %v211 = vunpack.c.l.b16 %v67
    %v212 = vunpack.c.l.b16 %v68
    %v213 = vpack.c.b16 %v182, %v181
    %v214 = vpack.c.b16 %v184, %v183
    %v215 = vpack.c.b16 %v186, %v185
    %v216 = vpack.c.b16 %v188, %v187
    %v217 = vpack.c.b16 %v190, %v189
    %v218 = vpack.c.b16 %v192, %v191
    %v219 = vpack.c.b16 %v194, %v193
    %v220 = vpack.c.b16 %v196, %v195
    %v221 = vpack.c.b16 %v198, %v197
    %v222 = vpack.c.b16 %v200, %v199
    %v223 = vpack.c.b16 %v202, %v201
    %v224 = vpack.c.b16 %v204, %v203
    %v225 = vpack.c.b16 %v206, %v205
    %v226 = vpack.c.b16 %v208, %v207
    %v227 = vpack.c.b16 %v210, %v209
    %v228 = vpack.c.b16 %v212, %v211
    %245 = vmatprep.subr.bf16.mxu0 0
    %246 = vmatpush1.bf16.msra.mxu0 %v213
    %247 = vmatprep.subr.bf16.mxu0 0
    %248 = vmatpush1.bf16.msra.mxu0 %v214
    %249 = vmatprep.subr.bf16.mxu0 0
    %250 = vmatpush1.bf16.msra.mxu0 %v215
    %251 = vmatprep.subr.bf16.mxu0 0
    %252 = vmatpush1.bf16.msra.mxu0 %v216
    %253 = vmatprep.subr.bf16.mxu0 0
    %254 = vmatpush1.bf16.msra.mxu0 %v217
    %255 = vmatprep.subr.bf16.mxu0 0
    %256 = vmatpush1.bf16.msra.mxu0 %v218
    %257 = vmatprep.subr.bf16.mxu0 0
    %258 = vmatpush1.bf16.msra.mxu0 %v219
    %259 = vmatprep.subr.bf16.mxu0 0
    %260 = vmatpush1.bf16.msra.mxu0 %v220
    %261 = vmatprep.subr.bf16.mxu0 0
    %262 = vmatpush1.bf16.msra.mxu0 %v221
    %263 = vmatprep.subr.bf16.mxu0 0
    %264 = vmatpush1.bf16.msra.mxu0 %v222
    %265 = vmatprep.subr.bf16.mxu0 0
    %266 = vmatpush1.bf16.msra.mxu0 %v223
    %267 = vmatprep.subr.bf16.mxu0 0
    %268 = vmatpush1.bf16.msra.mxu0 %v224
    %269 = vmatprep.subr.bf16.mxu0 0
    %270 = vmatpush1.bf16.msra.mxu0 %v225
    %271 = vmatprep.subr.bf16.mxu0 0
    %272 = vmatpush1.bf16.msra.mxu0 %v226
    %273 = vmatprep.subr.bf16.mxu0 0
    %274 = vmatpush1.bf16.msra.mxu0 %v227
    %275 = vmatprep.subr.bf16.mxu0 0
    %276 = vmatpush1.bf16.msra.mxu0 %v228
    %277 = vmatprep.mubr.bf16.mxu0 %v118
    %278 = vmatmul.mubr.bf16.gmra.mrb[0].mxu0 %v117
    %v279 = vpop.f32.mrb[0].mxu0
    %v280 = vadd.f32 0.0, %v279
    %v281 = vpop.f32.mrb[0].mxu0
    %v282 = vpop.f32.mrb[0].mxu0
    %v283 = vadd.f32 0.0, %v282
    %v284 = vpop.f32.mrb[0].mxu0
    %285 = vmatprep.mubr.bf16.mxu0 %v120
    %286 = vmatmul.mubr.bf16.gmra.mrb[0].mxu0 %v119
    %v287 = vpop.f32.mrb[0].mxu0
    %v288 = vadd.f32 0.0, %v287
    %v289 = vpop.f32.mrb[0].mxu0
    %v290 = vpop.f32.mrb[0].mxu0
    %v291 = vadd.f32 0.0, %v290
    %v292 = vpop.f32.mrb[0].mxu0
    %293 = vmatprep.mubr.bf16.mxu0 %v122
    %294 = vmatmul.mubr.bf16.gmra.mrb[0].mxu0 %v121
    %v295 = vpop.f32.mrb[0].mxu0
    %v296 = vadd.f32 0.0, %v295
    %v297 = vpop.f32.mrb[0].mxu0
    %v298 = vpop.f32.mrb[0].mxu0
    %v299 = vadd.f32 0.0, %v298
    %v300 = vpop.f32.mrb[0].mxu0
    %301 = vmatprep.mubr.bf16.mxu0 %v124
    %302 = vmatmul.mubr.bf16.gmra.mrb[0].mxu0 %v123
    %v303 = vpop.f32.mrb[0].mxu0
    %v304 = vadd.f32 0.0, %v303
    %v305 = vpop.f32.mrb[0].mxu0
    %v306 = vpop.f32.mrb[0].mxu0
    %v307 = vadd.f32 0.0, %v306
    %v308 = vpop.f32.mrb[0].mxu0
    %309 = vmatprep.mubr.bf16.mxu0 %v126
    %310 = vmatmul.mubr.bf16.gmra.mrb[0].mxu0 %v125
    %v311 = vpop.f32.mrb[0].mxu0
    %v312 = vadd.f32 0.0, %v311
    %v313 = vpop.f32.mrb[0].mxu0
    %v314 = vpop.f32.mrb[0].mxu0
    %v315 = vadd.f32 0.0, %v314
    %v316 = vpop.f32.mrb[0].mxu0
    %317 = vmatprep.mubr.bf16.mxu0 %v128
    %318 = vmatmul.mubr.bf16.gmra.mrb[0].mxu0 %v127
    %v319 = vpop.f32.mrb[0].mxu0
    %v320 = vadd.f32 0.0, %v319
    %v321 = vpop.f32.mrb[0].mxu0
    %v322 = vpop.f32.mrb[0].mxu0
    %v323 = vadd.f32 0.0, %v322
    %v324 = vpop.f32.mrb[0].mxu0
    %325 = vmatprep.mubr.bf16.mxu0 %v130
    %326 = vmatmul.mubr.bf16.gmra.mrb[0].mxu0 %v129
    %v327 = vpop.f32.mrb[0].mxu0
    %v328 = vadd.f32 0.0, %v327
    %v329 = vpop.f32.mrb[0].mxu0
    %v330 = vpop.f32.mrb[0].mxu0
    %v331 = vadd.f32 0.0, %v330
    %v332 = vpop.f32.mrb[0].mxu0
    %333 = vmatprep.mubr.bf16.mxu0 %v132
    %334 = vmatmul.mubr.bf16.gmra.mrb[0].mxu0 %v131
    %v335 = vpop.f32.mrb[0].mxu0
    %v336 = vadd.f32 0.0, %v335
    %v337 = vpop.f32.mrb[0].mxu0
    %v338 = vpop.f32.mrb[0].mxu0
    %v339 = vadd.f32 0.0, %v338
    %v340 = vpop.f32.mrb[0].mxu0
    %341 = vdwg.mxu0
    %v342 = vadd.f32 %v280, %v283
    %v343 = vadd.f32 %v342, %v288
    %v344 = vadd.f32 %v343, %v291
    %v345 = vadd.f32 %v344, %v296
    %v346 = vadd.f32 %v345, %v299
    %v347 = vadd.f32 %v346, %v304
    %v348 = vadd.f32 %v347, %v307
    %v349 = vadd.f32 %v348, %v312
    %v350 = vadd.f32 %v349, %v315
    %v351 = vadd.f32 %v350, %v320
    %v352 = vadd.f32 %v351, %v323
    %v353 = vadd.f32 %v352, %v328
    %v354 = vadd.f32 %v353, %v331
    %v355 = vadd.f32 %v354, %v336
    %v356 = vadd.f32 %v355, %v339
    %v357 = vrot.slane %v356, 4
    %v358 = vadd.f32 %v356, %v357
    %v359 = vrot.slane %v358, 2
    %v360 = vadd.f32 %v358, %v359
    %v361 = vrot.slane %v360, 1
    %v362 = vadd.f32 %v360, %v361
    %v363 = vmul.f32 %v362, 0.0078125
    %v364 = vsub.f32 %v280, %v363
    %v365 = vsub.f32 %v283, %v363
    %v366 = vsub.f32 %v288, %v363
    %v367 = vsub.f32 %v291, %v363
    %v368 = vsub.f32 %v296, %v363
    %v369 = vsub.f32 %v299, %v363
    %v370 = vsub.f32 %v304, %v363
    %v371 = vsub.f32 %v307, %v363
    %v372 = vsub.f32 %v312, %v363
    %v373 = vsub.f32 %v315, %v363
    %v374 = vsub.f32 %v320, %v363
    %v375 = vsub.f32 %v323, %v363
    %v376 = vsub.f32 %v328, %v363
    %v377 = vsub.f32 %v331, %v363
    %v378 = vsub.f32 %v336, %v363
    %v379 = vsub.f32 %v339, %v363
    %v380 = vmul.f32 %v364, %v364
    %v381 = vmul.f32 %v365, %v365
    %v382 = vmul.f32 %v366, %v366
    %v383 = vmul.f32 %v367, %v367
    %v384 = vmul.f32 %v368, %v368
    %v385 = vmul.f32 %v369, %v369
    %v386 = vmul.f32 %v370, %v370
    %v387 = vmul.f32 %v371, %v371
    %v388 = vmul.f32 %v372, %v372
    %v389 = vmul.f32 %v373, %v373
    %v390 = vmul.f32 %v374, %v374
    %v391 = vmul.f32 %v375, %v375
    %v392 = vmul.f32 %v376, %v376
    %v393 = vmul.f32 %v377, %v377
    %v394 = vmul.f32 %v378, %v378
    %v395 = vmul.f32 %v379, %v379
    %v396 = vadd.f32 %v380, %v381
    %v397 = vadd.f32 %v396, %v382
    %v398 = vadd.f32 %v397, %v383
    %v399 = vadd.f32 %v398, %v384
    %v400 = vadd.f32 %v399, %v385
    %v401 = vadd.f32 %v400, %v386
    %v402 = vadd.f32 %v401, %v387
    %v403 = vadd.f32 %v402, %v388
    %v404 = vadd.f32 %v403, %v389
    %v405 = vadd.f32 %v404, %v390
    %v406 = vadd.f32 %v405, %v391
    %v407 = vadd.f32 %v406, %v392
    %v408 = vadd.f32 %v407, %v393
    %v409 = vadd.f32 %v408, %v394
    %v410 = vadd.f32 %v409, %v395
    %v411 = vrot.slane %v410, 4
    %v412 = vadd.f32 %v410, %v411
    %v413 = vrot.slane %v412, 2
    %v414 = vadd.f32 %v412, %v413
    %v415 = vrot.slane %v414, 1
    %v416 = vadd.f32 %v414, %v415
    %v417 = vmul.f32 %v416, 0.0078125
    %v418 = vld [vmem:[%s2] sm:$0x1]
    %v419 = vadd.f32 %v417, 1e-05
    %v420 = vrsqrt.pop %v419
    %v421 = vmul.f32 %v418, %v420
    %v423 = vlaneseq
    %v424 = vshrl.u32 %v423, 7
    %v425 = vsub.s32 0, %v424
    %v426 = vrot.slane %v421, %v425
    %v428 = vmul.f32 %v364, %v426
    %v429 = vmul.f32 %v365, %v426
    %v430 = vmul.f32 %v366, %v426
    %v431 = vmul.f32 %v367, %v426
    %v432 = vmul.f32 %v368, %v426
    %v433 = vmul.f32 %v369, %v426
    %v434 = vmul.f32 %v370, %v426
    %v435 = vmul.f32 %v371, %v426
    %v436 = vmul.f32 %v372, %v426
    %v437 = vmul.f32 %v373, %v426
    %v438 = vmul.f32 %v374, %v426
    %v439 = vmul.f32 %v375, %v426
    %v440 = vmul.f32 %v376, %v426
    %v441 = vmul.f32 %v377, %v426
    %v442 = vmul.f32 %v378, %v426
    %v443 = vmul.f32 %v379, %v426
    %v444 = vld [vmem:[%s3] sm:$0x1]
    %v446 = vlaneseq
    %v447 = vshrl.u32 %v446, 7
    %v448 = vsub.s32 0, %v447
    %v449 = vrot.slane %v444, %v448
    %v451 = vadd.f32 %v428, %v449
    %v452 = vadd.f32 %v429, %v449
    %v453 = vadd.f32 %v430, %v449
    %v454 = vadd.f32 %v431, %v449
    %v455 = vadd.f32 %v432, %v449
    %v456 = vadd.f32 %v433, %v449
    %v457 = vadd.f32 %v434, %v449
    %v458 = vadd.f32 %v435, %v449
    %v459 = vadd.f32 %v436, %v449
    %v460 = vadd.f32 %v437, %v449
    %v461 = vadd.f32 %v438, %v449
    %v462 = vadd.f32 %v439, %v449
    %v463 = vadd.f32 %v440, %v449
    %v464 = vadd.f32 %v441, %v449
    %v465 = vadd.f32 %v442, %v449
    %v466 = vadd.f32 %v443, %v449
    %v467 = vmax.f32 %v451, 0.0
    %v468 = vmax.f32 %v452, 0.0
    %v469 = vmax.f32 %v453, 0.0
    %v470 = vmax.f32 %v454, 0.0
    %v471 = vmax.f32 %v455, 0.0
    %v472 = vmax.f32 %v456, 0.0
    %v473 = vmax.f32 %v457, 0.0
    %v474 = vmax.f32 %v458, 0.0
    %v475 = vmax.f32 %v459, 0.0
    %v476 = vmax.f32 %v460, 0.0
    %v477 = vmax.f32 %v461, 0.0
    %v478 = vmax.f32 %v462, 0.0
    %v479 = vmax.f32 %v463, 0.0
    %v480 = vmax.f32 %v464, 0.0
    %v481 = vmax.f32 %v465, 0.0
    %v482 = vmax.f32 %v466, 0.0
    %v483 = vadd.f32 %v467, %v468
    %v484 = vadd.f32 %v483, %v469
    %v485 = vadd.f32 %v484, %v470
    %v486 = vadd.f32 %v485, %v471
    %v487 = vadd.f32 %v486, %v472
    %v488 = vadd.f32 %v487, %v473
    %v489 = vadd.f32 %v488, %v474
    %v490 = vrot.slane %v489, 4
    %v491 = vadd.f32 %v489, %v490
    %v492 = vrot.slane %v491, 2
    %v493 = vadd.f32 %v491, %v492
    %v494 = vrot.slane %v493, 1
    %v495 = vadd.f32 %v493, %v494
    %v496 = vadd.f32 %v475, %v476
    %v497 = vadd.f32 %v496, %v477
    %v498 = vadd.f32 %v497, %v478
    %v499 = vadd.f32 %v498, %v479
    %v500 = vadd.f32 %v499, %v480
    %v501 = vadd.f32 %v500, %v481
    %v502 = vadd.f32 %v501, %v482
    %v503 = vrot.slane %v502, 4
    %v504 = vadd.f32 %v502, %v503
    %v505 = vrot.slane %v504, 2
    %v506 = vadd.f32 %v504, %v505
    %v507 = vrot.slane %v506, 1
    %v508 = vadd.f32 %v506, %v507
    %v509 = vmul.f32 %v495, 0.015625
    %v510 = vmul.f32 %v508, 0.015625
    %vm513 = vcmask 1041409
    %v514 = vsel %vm513, %v510, %v509
    %516 = vst [vmem:[#allocation2] sm:$0x3] %v514
    %v533 = vcombine.high %v467, %v467
    %v535 = vunpack.c.l.s4 1983009808
    %v536 = vunpack.c.0.s8 %v535
    %v537 = vlaneseq
    %v538 = vshrl.u32 %v537, 7
    %v539 = vsub.s32 %v536, %v538
    %v540 = vrot.slane %v467, %v539
    %v542 = vunpack.c.l.s4 1983009808
    %v543 = vunpack.c.0.s8 %v542
    %v544 = vlaneseq
    %v545 = vshrl.u32 %v544, 7
    %v546 = vsub.s32 %v543, %v545
    %v547 = vrot.slane %v533, %v546
    %v548 = vcombine.high %v540, %v540
    %v549 = vcombine.high %v547, %v547
    %v550 = vcombine.high %v468, %v468
    %v552 = vunpack.c.l.s4 1983009808
    %v553 = vunpack.c.0.s8 %v552
    %v554 = vlaneseq
    %v555 = vshrl.u32 %v554, 7
    %v556 = vsub.s32 %v553, %v555
    %v557 = vrot.slane %v468, %v556
    %v559 = vunpack.c.l.s4 1983009808
    %v560 = vunpack.c.0.s8 %v559
    %v561 = vlaneseq
    %v562 = vshrl.u32 %v561, 7
    %v563 = vsub.s32 %v560, %v562
    %v564 = vrot.slane %v550, %v563
    %v565 = vcombine.high %v557, %v557
    %v566 = vcombine.high %v564, %v564
    %v567 = vcombine.high %v469, %v469
    %v569 = vunpack.c.l.s4 1983009808
    %v570 = vunpack.c.0.s8 %v569
    %v571 = vlaneseq
    %v572 = vshrl.u32 %v571, 7
    %v573 = vsub.s32 %v570, %v572
    %v574 = vrot.slane %v469, %v573
    %v576 = vunpack.c.l.s4 1983009808
    %v577 = vunpack.c.0.s8 %v576
    %v578 = vlaneseq
    %v579 = vshrl.u32 %v578, 7
    %v580 = vsub.s32 %v577, %v579
    %v581 = vrot.slane %v567, %v580
    %v582 = vcombine.high %v574, %v574
    %v583 = vcombine.high %v581, %v581
    %v584 = vcombine.high %v470, %v470
    %v586 = vunpack.c.l.s4 1983009808
    %v587 = vunpack.c.0.s8 %v586
    %v588 = vlaneseq
    %v589 = vshrl.u32 %v588, 7
    %v590 = vsub.s32 %v587, %v589
    %v591 = vrot.slane %v470, %v590
    %v593 = vunpack.c.l.s4 1983009808
    %v594 = vunpack.c.0.s8 %v593
    %v595 = vlaneseq
    %v596 = vshrl.u32 %v595, 7
    %v597 = vsub.s32 %v594, %v596
    %v598 = vrot.slane %v584, %v597
    %v599 = vcombine.high %v591, %v591
    %v600 = vcombine.high %v598, %v598
    %v601 = vcombine.high %v471, %v471
    %v603 = vunpack.c.l.s4 1983009808
    %v604 = vunpack.c.0.s8 %v603
    %v605 = vlaneseq
    %v606 = vshrl.u32 %v605, 7
    %v607 = vsub.s32 %v604, %v606
    %v608 = vrot.slane %v471, %v607
    %v610 = vunpack.c.l.s4 1983009808
    %v611 = vunpack.c.0.s8 %v610
    %v612 = vlaneseq
    %v613 = vshrl.u32 %v612, 7
    %v614 = vsub.s32 %v611, %v613
    %v615 = vrot.slane %v601, %v614
    %v616 = vcombine.high %v608, %v608
    %v617 = vcombine.high %v615, %v615
    %v618 = vcombine.high %v472, %v472
    %v620 = vunpack.c.l.s4 1983009808
    %v621 = vunpack.c.0.s8 %v620
    %v622 = vlaneseq
    %v623 = vshrl.u32 %v622, 7
    %v624 = vsub.s32 %v621, %v623
    %v625 = vrot.slane %v472, %v624
    %v627 = vunpack.c.l.s4 1983009808
    %v628 = vunpack.c.0.s8 %v627
    %v629 = vlaneseq
    %v630 = vshrl.u32 %v629, 7
    %v631 = vsub.s32 %v628, %v630
    %v632 = vrot.slane %v618, %v631
    %v633 = vcombine.high %v625, %v625
    %v634 = vcombine.high %v632, %v632
    %v635 = vcombine.high %v473, %v473
    %v637 = vunpack.c.l.s4 1983009808
    %v638 = vunpack.c.0.s8 %v637
    %v639 = vlaneseq
    %v640 = vshrl.u32 %v639, 7
    %v641 = vsub.s32 %v638, %v640
    %v642 = vrot.slane %v473, %v641
    %v644 = vunpack.c.l.s4 1983009808
    %v645 = vunpack.c.0.s8 %v644
    %v646 = vlaneseq
    %v647 = vshrl.u32 %v646, 7
    %v648 = vsub.s32 %v645, %v647
    %v649 = vrot.slane %v635, %v648
    %v650 = vcombine.high %v642, %v642
    %v651 = vcombine.high %v649, %v649
    %v652 = vcombine.high %v474, %v474
    %v654 = vunpack.c.l.s4 1983009808
    %v655 = vunpack.c.0.s8 %v654
    %v656 = vlaneseq
    %v657 = vshrl.u32 %v656, 7
    %v658 = vsub.s32 %v655, %v657
    %v659 = vrot.slane %v474, %v658
    %v661 = vunpack.c.l.s4 1983009808
    %v662 = vunpack.c.0.s8 %v661
    %v663 = vlaneseq
    %v664 = vshrl.u32 %v663, 7
    %v665 = vsub.s32 %v662, %v664
    %v666 = vrot.slane %v652, %v665
    %v667 = vcombine.high %v659, %v659
    %v668 = vcombine.high %v666, %v666
    %v669 = vcombine.high %v475, %v475
    %v671 = vunpack.c.l.s4 1983009808
    %v672 = vunpack.c.0.s8 %v671
    %v673 = vlaneseq
    %v674 = vshrl.u32 %v673, 7
    %v675 = vsub.s32 %v672, %v674
    %v676 = vrot.slane %v475, %v675
    %v678 = vunpack.c.l.s4 1983009808
    %v679 = vunpack.c.0.s8 %v678
    %v680 = vlaneseq
    %v681 = vshrl.u32 %v680, 7
    %v682 = vsub.s32 %v679, %v681
    %v683 = vrot.slane %v669, %v682
    %v684 = vcombine.high %v676, %v676
    %v685 = vcombine.high %v683, %v683
    %v686 = vcombine.high %v476, %v476
    %v688 = vunpack.c.l.s4 1983009808
    %v689 = vunpack.c.0.s8 %v688
    %v690 = vlaneseq
    %v691 = vshrl.u32 %v690, 7
    %v692 = vsub.s32 %v689, %v691
    %v693 = vrot.slane %v476, %v692
    %v695 = vunpack.c.l.s4 1983009808
    %v696 = vunpack.c.0.s8 %v695
    %v697 = vlaneseq
    %v698 = vshrl.u32 %v697, 7
    %v699 = vsub.s32 %v696, %v698
    %v700 = vrot.slane %v686, %v699
    %v701 = vcombine.high %v693, %v693
    %v702 = vcombine.high %v700, %v700
    %v703 = vcombine.high %v477, %v477
    %v705 = vunpack.c.l.s4 1983009808
    %v706 = vunpack.c.0.s8 %v705
    %v707 = vlaneseq
    %v708 = vshrl.u32 %v707, 7
    %v709 = vsub.s32 %v706, %v708
    %v710 = vrot.slane %v477, %v709
    %v712 = vunpack.c.l.s4 1983009808
    %v713 = vunpack.c.0.s8 %v712
    %v714 = vlaneseq
    %v715 = vshrl.u32 %v714, 7
    %v716 = vsub.s32 %v713, %v715
    %v717 = vrot.slane %v703, %v716
    %v718 = vcombine.high %v710, %v710
    %v719 = vcombine.high %v717, %v717
    %v720 = vcombine.high %v478, %v478
    %v722 = vunpack.c.l.s4 1983009808
    %v723 = vunpack.c.0.s8 %v722
    %v724 = vlaneseq
    %v725 = vshrl.u32 %v724, 7
    %v726 = vsub.s32 %v723, %v725
    %v727 = vrot.slane %v478, %v726
    %v729 = vunpack.c.l.s4 1983009808
    %v730 = vunpack.c.0.s8 %v729
    %v731 = vlaneseq
    %v732 = vshrl.u32 %v731, 7
    %v733 = vsub.s32 %v730, %v732
    %v734 = vrot.slane %v720, %v733
    %v735 = vcombine.high %v727, %v727
    %v736 = vcombine.high %v734, %v734
    %v737 = vcombine.high %v479, %v479
    %v739 = vunpack.c.l.s4 1983009808
    %v740 = vunpack.c.0.s8 %v739
    %v741 = vlaneseq
    %v742 = vshrl.u32 %v741, 7
    %v743 = vsub.s32 %v740, %v742
    %v744 = vrot.slane %v479, %v743
    %v746 = vunpack.c.l.s4 1983009808
    %v747 = vunpack.c.0.s8 %v746
    %v748 = vlaneseq
    %v749 = vshrl.u32 %v748, 7
    %v750 = vsub.s32 %v747, %v749
    %v751 = vrot.slane %v737, %v750
    %v752 = vcombine.high %v744, %v744
    %v753 = vcombine.high %v751, %v751
    %v754 = vcombine.high %v480, %v480
    %v756 = vunpack.c.l.s4 1983009808
    %v757 = vunpack.c.0.s8 %v756
    %v758 = vlaneseq
    %v759 = vshrl.u32 %v758, 7
    %v760 = vsub.s32 %v757, %v759
    %v761 = vrot.slane %v480, %v760
    %v763 = vunpack.c.l.s4 1983009808
    %v764 = vunpack.c.0.s8 %v763
    %v765 = vlaneseq
    %v766 = vshrl.u32 %v765, 7
    %v767 = vsub.s32 %v764, %v766
    %v768 = vrot.slane %v754, %v767
    %v769 = vcombine.high %v761, %v761
    %v770 = vcombine.high %v768, %v768
    %v771 = vcombine.high %v481, %v481
    %v773 = vunpack.c.l.s4 1983009808
    %v774 = vunpack.c.0.s8 %v773
    %v775 = vlaneseq
    %v776 = vshrl.u32 %v775, 7
    %v777 = vsub.s32 %v774, %v776
    %v778 = vrot.slane %v481, %v777
    %v780 = vunpack.c.l.s4 1983009808
    %v781 = vunpack.c.0.s8 %v780
    %v782 = vlaneseq
    %v783 = vshrl.u32 %v782, 7
    %v784 = vsub.s32 %v781, %v783
    %v785 = vrot.slane %v771, %v784
    %v786 = vcombine.high %v778, %v778
    %v787 = vcombine.high %v785, %v785
    %v788 = vcombine.high %v482, %v482
    %v790 = vunpack.c.l.s4 1983009808
    %v791 = vunpack.c.0.s8 %v790
    %v792 = vlaneseq
    %v793 = vshrl.u32 %v792, 7
    %v794 = vsub.s32 %v791, %v793
    %v795 = vrot.slane %v482, %v794
    %v797 = vunpack.c.l.s4 1983009808
    %v798 = vunpack.c.0.s8 %v797
    %v799 = vlaneseq
    %v800 = vshrl.u32 %v799, 7
    %v801 = vsub.s32 %v798, %v800
    %v802 = vrot.slane %v788, %v801
    %v803 = vcombine.high %v795, %v795
    %v804 = vcombine.high %v802, %v802
    %vm869 = vcmask 1041408
    %v870 = vsel %vm869, %v540, -inf
    %v871 = vrot.slane %v870, 4
    %v872 = vmax.f32 %v870, %v871
    %v873 = vrot.slane %v872, 2
    %v874 = vmax.f32 %v872, %v873
    %v875 = vrot.slane %v874, 1
    %v876 = vmax.f32 %v874, %v875
    %v877 = vsel %vm869, %v548, -inf
    %v878 = vrot.slane %v877, 4
    %v879 = vmax.f32 %v877, %v878
    %v880 = vrot.slane %v879, 2
    %v881 = vmax.f32 %v879, %v880
    %v882 = vrot.slane %v881, 1
    %v883 = vmax.f32 %v881, %v882
    %v884 = vsel %vm869, %v547, -inf
    %v885 = vrot.slane %v884, 4
    %v886 = vmax.f32 %v884, %v885
    %v887 = vrot.slane %v886, 2
    %v888 = vmax.f32 %v886, %v887
    %v889 = vrot.slane %v888, 1
    %v890 = vmax.f32 %v888, %v889
    %v891 = vsel %vm869, %v549, -inf
    %v892 = vrot.slane %v891, 4
    %v893 = vmax.f32 %v891, %v892
    %v894 = vrot.slane %v893, 2
    %v895 = vmax.f32 %v893, %v894
    %v896 = vrot.slane %v895, 1
    %v897 = vmax.f32 %v895, %v896
    %v898 = vsel %vm869, %v557, -inf
    %v899 = vrot.slane %v898, 4
    %v900 = vmax.f32 %v898, %v899
    %v901 = vrot.slane %v900, 2
    %v902 = vmax.f32 %v900, %v901
    %v903 = vrot.slane %v902, 1
    %v904 = vmax.f32 %v902, %v903
    %v905 = vsel %vm869, %v565, -inf
    %v906 = vrot.slane %v905, 4
    %v907 = vmax.f32 %v905, %v906
    %v908 = vrot.slane %v907, 2
    %v909 = vmax.f32 %v907, %v908
    %v910 = vrot.slane %v909, 1
    %v911 = vmax.f32 %v909, %v910
    %v912 = vsel %vm869, %v564, -inf
    %v913 = vrot.slane %v912, 4
    %v914 = vmax.f32 %v912, %v913
    %v915 = vrot.slane %v914, 2
    %v916 = vmax.f32 %v914, %v915
    %v917 = vrot.slane %v916, 1
    %v918 = vmax.f32 %v916, %v917
    %v919 = vsel %vm869, %v566, -inf
    %v920 = vrot.slane %v919, 4
    %v921 = vmax.f32 %v919, %v920
    %v922 = vrot.slane %v921, 2
    %v923 = vmax.f32 %v921, %v922
    %v924 = vrot.slane %v923, 1
    %v925 = vmax.f32 %v923, %v924
    %v926 = vsel %vm869, %v574, -inf
    %v927 = vrot.slane %v926, 4
    %v928 = vmax.f32 %v926, %v927
    %v929 = vrot.slane %v928, 2
    %v930 = vmax.f32 %v928, %v929
    %v931 = vrot.slane %v930, 1
    %v932 = vmax.f32 %v930, %v931
    %v933 = vsel %vm869, %v582, -inf
    %v934 = vrot.slane %v933, 4
    %v935 = vmax.f32 %v933, %v934
    %v936 = vrot.slane %v935, 2
    %v937 = vmax.f32 %v935, %v936
    %v938 = vrot.slane %v937, 1
    %v939 = vmax.f32 %v937, %v938
    %v940 = vsel %vm869, %v581, -inf
    %v941 = vrot.slane %v940, 4
    %v942 = vmax.f32 %v940, %v941
    %v943 = vrot.slane %v942, 2
    %v944 = vmax.f32 %v942, %v943
    %v945 = vrot.slane %v944, 1
    %v946 = vmax.f32 %v944, %v945
    %v947 = vsel %vm869, %v583, -inf
    %v948 = vrot.slane %v947, 4
    %v949 = vmax.f32 %v947, %v948
    %v950 = vrot.slane %v949, 2
    %v951 = vmax.f32 %v949, %v950
    %v952 = vrot.slane %v951, 1
    %v953 = vmax.f32 %v951, %v952
    %v954 = vsel %vm869, %v591, -inf
    %v955 = vrot.slane %v954, 4
    %v956 = vmax.f32 %v954, %v955
    %v957 = vrot.slane %v956, 2
    %v958 = vmax.f32 %v956, %v957
    %v959 = vrot.slane %v958, 1
    %v960 = vmax.f32 %v958, %v959
    %v961 = vsel %vm869, %v599, -inf
    %v962 = vrot.slane %v961, 4
    %v963 = vmax.f32 %v961, %v962
    %v964 = vrot.slane %v963, 2
    %v965 = vmax.f32 %v963, %v964
    %v966 = vrot.slane %v965, 1
    %v967 = vmax.f32 %v965, %v966
    %v968 = vsel %vm869, %v598, -inf
    %v969 = vrot.slane %v968, 4
    %v970 = vmax.f32 %v968, %v969
    %v971 = vrot.slane %v970, 2
    %v972 = vmax.f32 %v970, %v971
    %v973 = vrot.slane %v972, 1
    %v974 = vmax.f32 %v972, %v973
    %v975 = vsel %vm869, %v600, -inf
    %v976 = vrot.slane %v975, 4
    %v977 = vmax.f32 %v975, %v976
    %v978 = vrot.slane %v977, 2
    %v979 = vmax.f32 %v977, %v978
    %v980 = vrot.slane %v979, 1
    %v981 = vmax.f32 %v979, %v980
    %v982 = vsel %vm869, %v608, -inf
    %v983 = vrot.slane %v982, 4
    %v984 = vmax.f32 %v982, %v983
    %v985 = vrot.slane %v984, 2
    %v986 = vmax.f32 %v984, %v985
    %v987 = vrot.slane %v986, 1
    %v988 = vmax.f32 %v986, %v987
    %v989 = vsel %vm869, %v616, -inf
    %v990 = vrot.slane %v989, 4
    %v991 = vmax.f32 %v989, %v990
    %v992 = vrot.slane %v991, 2
    %v993 = vmax.f32 %v991, %v992
    %v994 = vrot.slane %v993, 1
    %v995 = vmax.f32 %v993, %v994
    %v996 = vsel %vm869, %v615, -inf
    %v997 = vrot.slane %v996, 4
    %v998 = vmax.f32 %v996, %v997
    %v999 = vrot.slane %v998, 2
    %v1000 = vmax.f32 %v998, %v999
    %v1001 = vrot.slane %v1000, 1
    %v1002 = vmax.f32 %v1000, %v1001
    %v1003 = vsel %vm869, %v617, -inf
    %v1004 = vrot.slane %v1003, 4
    %v1005 = vmax.f32 %v1003, %v1004
    %v1006 = vrot.slane %v1005, 2
    %v1007 = vmax.f32 %v1005, %v1006
    %v1008 = vrot.slane %v1007, 1
    %v1009 = vmax.f32 %v1007, %v1008
    %v1010 = vsel %vm869, %v625, -inf
    %v1011 = vrot.slane %v1010, 4
    %v1012 = vmax.f32 %v1010, %v1011
    %v1013 = vrot.slane %v1012, 2
    %v1014 = vmax.f32 %v1012, %v1013
    %v1015 = vrot.slane %v1014, 1
    %v1016 = vmax.f32 %v1014, %v1015
    %v1017 = vsel %vm869, %v633, -inf
    %v1018 = vrot.slane %v1017, 4
    %v1019 = vmax.f32 %v1017, %v1018
    %v1020 = vrot.slane %v1019, 2
    %v1021 = vmax.f32 %v1019, %v1020
    %v1022 = vrot.slane %v1021, 1
    %v1023 = vmax.f32 %v1021, %v1022
    %v1024 = vsel %vm869, %v632, -inf
    %v1025 = vrot.slane %v1024, 4
    %v1026 = vmax.f32 %v1024, %v1025
    %v1027 = vrot.slane %v1026, 2
    %v1028 = vmax.f32 %v1026, %v1027
    %v1029 = vrot.slane %v1028, 1
    %v1030 = vmax.f32 %v1028, %v1029
    %v1031 = vsel %vm869, %v634, -inf
    %v1032 = vrot.slane %v1031, 4
    %v1033 = vmax.f32 %v1031, %v1032
    %v1034 = vrot.slane %v1033, 2
    %v1035 = vmax.f32 %v1033, %v1034
    %v1036 = vrot.slane %v1035, 1
    %v1037 = vmax.f32 %v1035, %v1036
    %v1038 = vsel %vm869, %v642, -inf
    %v1039 = vrot.slane %v1038, 4
    %v1040 = vmax.f32 %v1038, %v1039
    %v1041 = vrot.slane %v1040, 2
    %v1042 = vmax.f32 %v1040, %v1041
    %v1043 = vrot.slane %v1042, 1
    %v1044 = vmax.f32 %v1042, %v1043
    %v1045 = vsel %vm869, %v650, -inf
    %v1046 = vrot.slane %v1045, 4
    %v1047 = vmax.f32 %v1045, %v1046
    %v1048 = vrot.slane %v1047, 2
    %v1049 = vmax.f32 %v1047, %v1048
    %v1050 = vrot.slane %v1049, 1
    %v1051 = vmax.f32 %v1049, %v1050
    %v1052 = vsel %vm869, %v649, -inf
    %v1053 = vrot.slane %v1052, 4
    %v1054 = vmax.f32 %v1052, %v1053
    %v1055 = vrot.slane %v1054, 2
    %v1056 = vmax.f32 %v1054, %v1055
    %v1057 = vrot.slane %v1056, 1
    %v1058 = vmax.f32 %v1056, %v1057
    %v1059 = vsel %vm869, %v651, -inf
    %v1060 = vrot.slane %v1059, 4
    %v1061 = vmax.f32 %v1059, %v1060
    %v1062 = vrot.slane %v1061, 2
    %v1063 = vmax.f32 %v1061, %v1062
    %v1064 = vrot.slane %v1063, 1
    %v1065 = vmax.f32 %v1063, %v1064
    %v1066 = vsel %vm869, %v659, -inf
    %v1067 = vrot.slane %v1066, 4
    %v1068 = vmax.f32 %v1066, %v1067
    %v1069 = vrot.slane %v1068, 2
    %v1070 = vmax.f32 %v1068, %v1069
    %v1071 = vrot.slane %v1070, 1
    %v1072 = vmax.f32 %v1070, %v1071
    %v1073 = vsel %vm869, %v667, -inf
    %v1074 = vrot.slane %v1073, 4
    %v1075 = vmax.f32 %v1073, %v1074
    %v1076 = vrot.slane %v1075, 2
    %v1077 = vmax.f32 %v1075, %v1076
    %v1078 = vrot.slane %v1077, 1
    %v1079 = vmax.f32 %v1077, %v1078
    %v1080 = vsel %vm869, %v666, -inf
    %v1081 = vrot.slane %v1080, 4
    %v1082 = vmax.f32 %v1080, %v1081
    %v1083 = vrot.slane %v1082, 2
    %v1084 = vmax.f32 %v1082, %v1083
    %v1085 = vrot.slane %v1084, 1
    %v1086 = vmax.f32 %v1084, %v1085
    %v1087 = vsel %vm869, %v668, -inf
    %v1088 = vrot.slane %v1087, 4
    %v1089 = vmax.f32 %v1087, %v1088
    %v1090 = vrot.slane %v1089, 2
    %v1091 = vmax.f32 %v1089, %v1090
    %v1092 = vrot.slane %v1091, 1
    %v1093 = vmax.f32 %v1091, %v1092
    %v1094 = vsel %vm869, %v676, -inf
    %v1095 = vrot.slane %v1094, 4
    %v1096 = vmax.f32 %v1094, %v1095
    %v1097 = vrot.slane %v1096, 2
    %v1098 = vmax.f32 %v1096, %v1097
    %v1099 = vrot.slane %v1098, 1
    %v1100 = vmax.f32 %v1098, %v1099
    %v1101 = vsel %vm869, %v684, -inf
    %v1102 = vrot.slane %v1101, 4
    %v1103 = vmax.f32 %v1101, %v1102
    %v1104 = vrot.slane %v1103, 2
    %v1105 = vmax.f32 %v1103, %v1104
    %v1106 = vrot.slane %v1105, 1
    %v1107 = vmax.f32 %v1105, %v1106
    %v1108 = vsel %vm869, %v683, -inf
    %v1109 = vrot.slane %v1108, 4
    %v1110 = vmax.f32 %v1108, %v1109
    %v1111 = vrot.slane %v1110, 2
    %v1112 = vmax.f32 %v1110, %v1111
    %v1113 = vrot.slane %v1112, 1
    %v1114 = vmax.f32 %v1112, %v1113
    %v1115 = vsel %vm869, %v685, -inf
    %v1116 = vrot.slane %v1115, 4
    %v1117 = vmax.f32 %v1115, %v1116
    %v1118 = vrot.slane %v1117, 2
    %v1119 = vmax.f32 %v1117, %v1118
    %v1120 = vrot.slane %v1119, 1
    %v1121 = vmax.f32 %v1119, %v1120
    %v1122 = vsel %vm869, %v693, -inf
    %v1123 = vrot.slane %v1122, 4
    %v1124 = vmax.f32 %v1122, %v1123
    %v1125 = vrot.slane %v1124, 2
    %v1126 = vmax.f32 %v1124, %v1125
    %v1127 = vrot.slane %v1126, 1
    %v1128 = vmax.f32 %v1126, %v1127
    %v1129 = vsel %vm869, %v701, -inf
    %v1130 = vrot.slane %v1129, 4
    %v1131 = vmax.f32 %v1129, %v1130
    %v1132 = vrot.slane %v1131, 2
    %v1133 = vmax.f32 %v1131, %v1132
    %v1134 = vrot.slane %v1133, 1
    %v1135 = vmax.f32 %v1133, %v1134
    %v1136 = vsel %vm869, %v700, -inf
    %v1137 = vrot.slane %v1136, 4
    %v1138 = vmax.f32 %v1136, %v1137
    %v1139 = vrot.slane %v1138, 2
    %v1140 = vmax.f32 %v1138, %v1139
    %v1141 = vrot.slane %v1140, 1
    %v1142 = vmax.f32 %v1140, %v1141
    %v1143 = vsel %vm869, %v702, -inf
    %v1144 = vrot.slane %v1143, 4
    %v1145 = vmax.f32 %v1143, %v1144
    %v1146 = vrot.slane %v1145, 2
    %v1147 = vmax.f32 %v1145, %v1146
    %v1148 = vrot.slane %v1147, 1
    %v1149 = vmax.f32 %v1147, %v1148
    %v1150 = vsel %vm869, %v710, -inf
    %v1151 = vrot.slane %v1150, 4
    %v1152 = vmax.f32 %v1150, %v1151
    %v1153 = vrot.slane %v1152, 2
    %v1154 = vmax.f32 %v1152, %v1153
    %v1155 = vrot.slane %v1154, 1
    %v1156 = vmax.f32 %v1154, %v1155
    %v1157 = vsel %vm869, %v718, -inf
    %v1158 = vrot.slane %v1157, 4
    %v1159 = vmax.f32 %v1157, %v1158
    %v1160 = vrot.slane %v1159, 2
    %v1161 = vmax.f32 %v1159, %v1160
    %v1162 = vrot.slane %v1161, 1
    %v1163 = vmax.f32 %v1161, %v1162
    %v1164 = vsel %vm869, %v717, -inf
    %v1165 = vrot.slane %v1164, 4
    %v1166 = vmax.f32 %v1164, %v1165
    %v1167 = vrot.slane %v1166, 2
    %v1168 = vmax.f32 %v1166, %v1167
    %v1169 = vrot.slane %v1168, 1
    %v1170 = vmax.f32 %v1168, %v1169
    %v1171 = vsel %vm869, %v719, -inf
    %v1172 = vrot.slane %v1171, 4
    %v1173 = vmax.f32 %v1171, %v1172
    %v1174 = vrot.slane %v1173, 2
    %v1175 = vmax.f32 %v1173, %v1174
    %v1176 = vrot.slane %v1175, 1
    %v1177 = vmax.f32 %v1175, %v1176
    %v1178 = vsel %vm869, %v727, -inf
    %v1179 = vrot.slane %v1178, 4
    %v1180 = vmax.f32 %v1178, %v1179
    %v1181 = vrot.slane %v1180, 2
    %v1182 = vmax.f32 %v1180, %v1181
    %v1183 = vrot.slane %v1182, 1
    %v1184 = vmax.f32 %v1182, %v1183
    %v1185 = vsel %vm869, %v735, -inf
    %v1186 = vrot.slane %v1185, 4
    %v1187 = vmax.f32 %v1185, %v1186
    %v1188 = vrot.slane %v1187, 2
    %v1189 = vmax.f32 %v1187, %v1188
    %v1190 = vrot.slane %v1189, 1
    %v1191 = vmax.f32 %v1189, %v1190
    %v1192 = vsel %vm869, %v734, -inf
    %v1193 = vrot.slane %v1192, 4
    %v1194 = vmax.f32 %v1192, %v1193
    %v1195 = vrot.slane %v1194, 2
    %v1196 = vmax.f32 %v1194, %v1195
    %v1197 = vrot.slane %v1196, 1
    %v1198 = vmax.f32 %v1196, %v1197
    %v1199 = vsel %vm869, %v736, -inf
    %v1200 = vrot.slane %v1199, 4
    %v1201 = vmax.f32 %v1199, %v1200
    %v1202 = vrot.slane %v1201, 2
    %v1203 = vmax.f32 %v1201, %v1202
    %v1204 = vrot.slane %v1203, 1
    %v1205 = vmax.f32 %v1203, %v1204
    %v1206 = vsel %vm869, %v744, -inf
    %v1207 = vrot.slane %v1206, 4
    %v1208 = vmax.f32 %v1206, %v1207
    %v1209 = vrot.slane %v1208, 2
    %v1210 = vmax.f32 %v1208, %v1209
    %v1211 = vrot.slane %v1210, 1
    %v1212 = vmax.f32 %v1210, %v1211
    %v1213 = vsel %vm869, %v752, -inf
    %v1214 = vrot.slane %v1213, 4
    %v1215 = vmax.f32 %v1213, %v1214
    %v1216 = vrot.slane %v1215, 2
    %v1217 = vmax.f32 %v1215, %v1216
    %v1218 = vrot.slane %v1217, 1
    %v1219 = vmax.f32 %v1217, %v1218
    %v1220 = vsel %vm869, %v751, -inf
    %v1221 = vrot.slane %v1220, 4
    %v1222 = vmax.f32 %v1220, %v1221
    %v1223 = vrot.slane %v1222, 2
    %v1224 = vmax.f32 %v1222, %v1223
    %v1225 = vrot.slane %v1224, 1
    %v1226 = vmax.f32 %v1224, %v1225
    %v1227 = vsel %vm869, %v753, -inf
    %v1228 = vrot.slane %v1227, 4
    %v1229 = vmax.f32 %v1227, %v1228
    %v1230 = vrot.slane %v1229, 2
    %v1231 = vmax.f32 %v1229, %v1230
    %v1232 = vrot.slane %v1231, 1
    %v1233 = vmax.f32 %v1231, %v1232
    %v1234 = vsel %vm869, %v761, -inf
    %v1235 = vrot.slane %v1234, 4
    %v1236 = vmax.f32 %v1234, %v1235
    %v1237 = vrot.slane %v1236, 2
    %v1238 = vmax.f32 %v1236, %v1237
    %v1239 = vrot.slane %v1238, 1
    %v1240 = vmax.f32 %v1238, %v1239
    %v1241 = vsel %vm869, %v769, -inf
    %v1242 = vrot.slane %v1241, 4
    %v1243 = vmax.f32 %v1241, %v1242
    %v1244 = vrot.slane %v1243, 2
    %v1245 = vmax.f32 %v1243, %v1244
    %v1246 = vrot.slane %v1245, 1
    %v1247 = vmax.f32 %v1245, %v1246
    %v1248 = vsel %vm869, %v768, -inf
    %v1249 = vrot.slane %v1248, 4
    %v1250 = vmax.f32 %v1248, %v1249
    %v1251 = vrot.slane %v1250, 2
    %v1252 = vmax.f32 %v1250, %v1251
    %v1253 = vrot.slane %v1252, 1
    %v1254 = vmax.f32 %v1252, %v1253
    %v1255 = vsel %vm869, %v770, -inf
    %v1256 = vrot.slane %v1255, 4
    %v1257 = vmax.f32 %v1255, %v1256
    %v1258 = vrot.slane %v1257, 2
    %v1259 = vmax.f32 %v1257, %v1258
    %v1260 = vrot.slane %v1259, 1
    %v1261 = vmax.f32 %v1259, %v1260
    %v1262 = vsel %vm869, %v778, -inf
    %v1263 = vrot.slane %v1262, 4
    %v1264 = vmax.f32 %v1262, %v1263
    %v1265 = vrot.slane %v1264, 2
    %v1266 = vmax.f32 %v1264, %v1265
    %v1267 = vrot.slane %v1266, 1
    %v1268 = vmax.f32 %v1266, %v1267
    %v1269 = vsel %vm869, %v786, -inf
    %v1270 = vrot.slane %v1269, 4
    %v1271 = vmax.f32 %v1269, %v1270
    %v1272 = vrot.slane %v1271, 2
    %v1273 = vmax.f32 %v1271, %v1272
    %v1274 = vrot.slane %v1273, 1
    %v1275 = vmax.f32 %v1273, %v1274
    %v1276 = vsel %vm869, %v785, -inf
    %v1277 = vrot.slane %v1276, 4
    %v1278 = vmax.f32 %v1276, %v1277
    %v1279 = vrot.slane %v1278, 2
    %v1280 = vmax.f32 %v1278, %v1279
    %v1281 = vrot.slane %v1280, 1
    %v1282 = vmax.f32 %v1280, %v1281
    %v1283 = vsel %vm869, %v787, -inf
    %v1284 = vrot.slane %v1283, 4
    %v1285 = vmax.f32 %v1283, %v1284
    %v1286 = vrot.slane %v1285, 2
    %v1287 = vmax.f32 %v1285, %v1286
    %v1288 = vrot.slane %v1287, 1
    %v1289 = vmax.f32 %v1287, %v1288
    %v1290 = vsel %vm869, %v795, -inf
    %v1291 = vrot.slane %v1290, 4
    %v1292 = vmax.f32 %v1290, %v1291
    %v1293 = vrot.slane %v1292, 2
    %v1294 = vmax.f32 %v1292, %v1293
    %v1295 = vrot.slane %v1294, 1
    %v1296 = vmax.f32 %v1294, %v1295
    %v1297 = vsel %vm869, %v803, -inf
    %v1298 = vrot.slane %v1297, 4
    %v1299 = vmax.f32 %v1297, %v1298
    %v1300 = vrot.slane %v1299, 2
    %v1301 = vmax.f32 %v1299, %v1300
    %v1302 = vrot.slane %v1301, 1
    %v1303 = vmax.f32 %v1301, %v1302
    %v1304 = vsel %vm869, %v802, -inf
    %v1305 = vrot.slane %v1304, 4
    %v1306 = vmax.f32 %v1304, %v1305
    %v1307 = vrot.slane %v1306, 2
    %v1308 = vmax.f32 %v1306, %v1307
    %v1309 = vrot.slane %v1308, 1
    %v1310 = vmax.f32 %v1308, %v1309
    %v1311 = vsel %vm869, %v804, -inf
    %v1312 = vrot.slane %v1311, 4
    %v1313 = vmax.f32 %v1311, %v1312
    %v1314 = vrot.slane %v1313, 2
    %v1315 = vmax.f32 %v1313, %v1314
    %v1316 = vrot.slane %v1315, 1
    %v1317 = vmax.f32 %v1315, %v1316
    %v1318 = vmax.f32 %v876, %v904
    %v1319 = vmax.f32 %v883, %v911
    %v1320 = vmax.f32 %v890, %v918
    %v1321 = vmax.f32 %v897, %v925
    %v1322 = vmax.f32 %v932, %v960
    %v1323 = vmax.f32 %v939, %v967
    %v1324 = vmax.f32 %v946, %v974
    %v1325 = vmax.f32 %v953, %v981
    %v1326 = vmax.f32 %v988, %v1016
    %v1327 = vmax.f32 %v995, %v1023
    %v1328 = vmax.f32 %v1002, %v1030
    %v1329 = vmax.f32 %v1009, %v1037
    %v1330 = vmax.f32 %v1044, %v1072
    %v1331 = vmax.f32 %v1051, %v1079
    %v1332 = vmax.f32 %v1058, %v1086
    %v1333 = vmax.f32 %v1065, %v1093
    %v1334 = vmax.f32 %v1100, %v1128
    %v1335 = vmax.f32 %v1107, %v1135
    %v1336 = vmax.f32 %v1114, %v1142
    %v1337 = vmax.f32 %v1121, %v1149
    %v1338 = vmax.f32 %v1156, %v1184
    %v1339 = vmax.f32 %v1163, %v1191
    %v1340 = vmax.f32 %v1170, %v1198
    %v1341 = vmax.f32 %v1177, %v1205
    %v1342 = vmax.f32 %v1212, %v1240
    %v1343 = vmax.f32 %v1219, %v1247
    %v1344 = vmax.f32 %v1226, %v1254
    %v1345 = vmax.f32 %v1233, %v1261
    %v1346 = vmax.f32 %v1268, %v1296
    %v1347 = vmax.f32 %v1275, %v1303
    %v1348 = vmax.f32 %v1282, %v1310
    %v1349 = vmax.f32 %v1289, %v1317
    %v1382 = vsel %vm513, %v1319, %v1318
    %vm1383 = vcmask 1042434
    %v1384 = vsel %vm1383, %v1320, %v1382
    %vm1385 = vcmask 1043459
    %v1386 = vsel %vm1385, %v1321, %v1384
    %v1387 = vsel %vm513, %v1323, %v1322
    %v1388 = vsel %vm1383, %v1324, %v1387
    %v1389 = vsel %vm1385, %v1325, %v1388
    %v1390 = vsel %vm513, %v1327, %v1326
    %v1391 = vsel %vm1383, %v1328, %v1390
    %v1392 = vsel %vm1385, %v1329, %v1391
    %v1393 = vsel %vm513, %v1331, %v1330
    %v1394 = vsel %vm1383, %v1332, %v1393
    %v1395 = vsel %vm1385, %v1333, %v1394
    %v1396 = vsel %vm513, %v1335, %v1334
    %v1397 = vsel %vm1383, %v1336, %v1396
    %v1398 = vsel %vm1385, %v1337, %v1397
    %v1399 = vsel %vm513, %v1339, %v1338
    %v1400 = vsel %vm1383, %v1340, %v1399
    %v1401 = vsel %vm1385, %v1341, %v1400
    %v1402 = vsel %vm513, %v1343, %v1342
    %v1403 = vsel %vm1383, %v1344, %v1402
    %v1404 = vsel %vm1385, %v1345, %v1403
    %v1405 = vsel %vm513, %v1347, %v1346
    %v1406 = vsel %vm1383, %v1348, %v1405
    %v1407 = vsel %vm1385, %v1349, %v1406
    %1416 = vst [vmem:[%s4] sm:$0xf] %v1386
    %1417 = vst [vmem:[%s4 + $0x4] sm:$0xf] %v1389
    %1418 = vst [vmem:[%s4 + $0x8] sm:$0xf] %v1392
    %1419 = vst [vmem:[%s4 + $0xc] sm:$0xf] %v1395
    %1420 = vst [vmem:[%s4 + $0x10] sm:$0xf] %v1398
    %1421 = vst [vmem:[%s4 + $0x14] sm:$0xf] %v1401
    %1422 = vst [vmem:[%s4 + $0x18] sm:$0xf] %v1404
    %1423 = vst [vmem:[%s4 + $0x1c] sm:$0xf] %v1407
    // Predicated region
    $region18: #{gp_lenet_forward.4} parent=1 // pred_check
      _
    $region19: #{gp_lenet_forward.4} parent=1 // pred_check_branch
      %1425 = sbr.rel (0) target = $region21
    $region20: #{gp_lenet_forward.4} parent=1 // pred_region
      _
    $region21: #{gp_lenet_forward.4} parent=1 // pred_fallthru
      _
    // Predicated region
    $region22: #{gp_lenet_forward.4} parent=1 // pred_check
      _
    $region23: #{gp_lenet_forward.4} parent=1 // pred_check_branch
      %1427 = sbr.rel (0) target = $region25
    $region24: #{gp_lenet_forward.4} parent=1 // pred_region
      %s1429 = ssub.s32 32, 32
      %1430 = vsyncadd [#allocation3], %s1429
      %s1432 = sshll.u32 [#allocation2], 4
      %s1433 = int_to_ptr.vmem [resolvable:$true] %s1432
      %1435 = dma.vmem_to_hbm [thread:$0]  %s1433, 32, %s5, [#allocation3]
    $region25: #{gp_lenet_forward.4} parent=1 // pred_fallthru
      _
    // Predicated region
    $region26: #{gp_lenet_forward.4} parent=1 // pred_check
      _
    $region27: #{gp_lenet_forward.4} parent=1 // pred_check_branch
      %1437 = sbr.rel (0) target = $region29
    $region28: #{gp_lenet_forward.4} parent=1 // pred_region
      _
    $region29: #{gp_lenet_forward.4} parent=1 // pred_fallthru
      _
    // Predicated region
    $region30: #{gp_lenet_forward.4} parent=1 // pred_check
      _
    $region31: #{gp_lenet_forward.4} parent=1 // pred_check_branch
      %1439 = sbr.rel (0) target = $region33
    $region32: #{gp_lenet_forward.4} parent=1 // pred_region
      %1440 = dma.done [#allocation3], 32
    $region33: #{gp_lenet_forward.4} parent=1 // pred_fallthru
      _
    %1441 = vsyncpa [#allocation3], 1

// kernel: gp_lenet_forward.5
$region0: #{gp_lenet_forward.5}
  #allocation0 [shape = 'u32[]', space=smem, size = 0x4, offset = 0x4, fixed_abs, tag = 'smem constant byte address 0x4 - core index']
  #allocation1 [shape = 'u32[144,128]{1,0:T(1,128)}', space=vmem, size = 0x12000, scoped, tag = 'internal scratch']
  %s0 = inlined_call_operand.vmem [shape: bf16[32,256], index: 0, kind: input, shape index: {}]
  %s1 = inlined_call_operand.vmem [shape: bf16[256,128], index: 1, kind: input, shape index: {}]
  %s2 = inlined_call_operand.vmem [shape: f32[1,128], index: 2, kind: input, shape index: {}]
  %s3 = inlined_call_operand.vmem [shape: f32[1,128], index: 3, kind: input, shape index: {}]
  %s4 = inlined_call_operand.vmem [shape: f32[128,128], index: 4, kind: input, shape index: {}]
  %s5 = inlined_call_operand.vmem [shape: f32[1,128], index: 5, kind: input, shape index: {}]
  %s6 = inlined_call_operand.hbm [shape: f32[2,128], index: 6, kind: output, shape index: {0}]
  %s7 = inlined_call_operand.hbm [shape: f32[2,128], index: 7, kind: output, shape index: {1}]
  %8 = xla_tuple %s6, %s7
  %s9 = sld [smem:[#allocation0]]
  $region42: #{gp_lenet_forward.5} parent=0
    _
  %s11 = ssub.s32 1, %s9
  %s12 = scalar_select 0, %s11, %s9
  $region1: #{gp_lenet_forward.5} parent=0
    #allocation2 [shape = 'u8[1024]{0}', space=vmem, size = 0x400, scoped, tag = 'output window, operand 0, single buffered']
    #allocation3 [shape = 's32[1]{0}', space=sflag, size = 0x4, scoped, tag = 'scoped memory for gp_lenet_forward.5']
    #allocation4 [shape = 'u8[1024]{0}', space=vmem, size = 0x400, scoped, tag = 'output window, operand 1, single buffered']
    #allocation5 [shape = 's32[1]{0}', space=sflag, size = 0x4, scoped, tag = 'scoped memory for gp_lenet_forward.5']
    %13 = vsyncpa [#allocation3], 0
    %14 = vsyncpa [#allocation5], 0
    // Predicated region
    $region2: #{gp_lenet_forward.5} parent=1 // pred_check
      _
    $region3: #{gp_lenet_forward.5} parent=1 // pred_check_branch
      %16 = sbr.rel (0) target = $region5
    $region4: #{gp_lenet_forward.5} parent=1 // pred_region
      _
    $region5: #{gp_lenet_forward.5} parent=1 // pred_fallthru
      _
    // Predicated region
    $region6: #{gp_lenet_forward.5} parent=1 // pred_check
      _
    $region7: #{gp_lenet_forward.5} parent=1 // pred_check_branch
      %18 = sbr.rel (0) target = $region9
    $region8: #{gp_lenet_forward.5} parent=1 // pred_region
      _
    $region9: #{gp_lenet_forward.5} parent=1 // pred_fallthru
      _
    // Predicated region
    $region10: #{gp_lenet_forward.5} parent=1 // pred_check
      _
    $region11: #{gp_lenet_forward.5} parent=1 // pred_check_branch
      %20 = sbr.rel (0) target = $region13
    $region12: #{gp_lenet_forward.5} parent=1 // pred_region
      _
    $region13: #{gp_lenet_forward.5} parent=1 // pred_fallthru
      _
    // Predicated region
    $region14: #{gp_lenet_forward.5} parent=1 // pred_check
      _
    $region15: #{gp_lenet_forward.5} parent=1 // pred_check_branch
      %22 = sbr.rel (0) target = $region17
    $region16: #{gp_lenet_forward.5} parent=1 // pred_region
      _
    $region17: #{gp_lenet_forward.5} parent=1 // pred_fallthru
      _
    // Predicated region
    $region18: #{gp_lenet_forward.5} parent=1 // pred_check
      _
    $region19: #{gp_lenet_forward.5} parent=1 // pred_check_branch
      %24 = sbr.rel (0) target = $region21
    $region20: #{gp_lenet_forward.5} parent=1 // pred_region
      _
    $region21: #{gp_lenet_forward.5} parent=1 // pred_fallthru
      _
    // Predicated region
    $region22: #{gp_lenet_forward.5} parent=1 // pred_check
      _
    $region23: #{gp_lenet_forward.5} parent=1 // pred_check_branch
      %26 = sbr.rel (0) target = $region25
    $region24: #{gp_lenet_forward.5} parent=1 // pred_region
      _
    $region25: #{gp_lenet_forward.5} parent=1 // pred_fallthru
      _
    %v28 = vld [vmem:[%s0] sm:$0xff]
    %v29 = vld [vmem:[%s0 + $0x8] sm:$0xff]
    %v30 = vld [vmem:[%s0 + $0x10] sm:$0xff]
    %v31 = vld [vmem:[%s0 + $0x18] sm:$0xff]
    %v32 = vld [vmem:[%s1] sm:$0xf]
    %v33 = vld [vmem:[%s1 + $0x4] sm:$0xf]
    %v34 = vld [vmem:[%s1 + $0x8] sm:$0xf]
    %v35 = vld [vmem:[%s1 + $0xc] sm:$0xf]
    %v36 = vld [vmem:[%s1 + $0x10] sm:$0xf]
    %v37 = vld [vmem:[%s1 + $0x14] sm:$0xf]
    %v38 = vld [vmem:[%s1 + $0x18] sm:$0xf]
    %v39 = vld [vmem:[%s1 + $0x1c] sm:$0xf]
    %v40 = vld [vmem:[%s1 + $0x20] sm:$0xf]
    %v41 = vld [vmem:[%s1 + $0x24] sm:$0xf]
    %v42 = vld [vmem:[%s1 + $0x28] sm:$0xf]
    %v43 = vld [vmem:[%s1 + $0x2c] sm:$0xf]
    %v44 = vld [vmem:[%s1 + $0x30] sm:$0xf]
    %v45 = vld [vmem:[%s1 + $0x34] sm:$0xf]
    %v46 = vld [vmem:[%s1 + $0x38] sm:$0xf]
    %v47 = vld [vmem:[%s1 + $0x3c] sm:$0xf]
    %v48 = vld [vmem:[%s1 + $0x40] sm:$0xf]
    %v49 = vld [vmem:[%s1 + $0x44] sm:$0xf]
    %v50 = vld [vmem:[%s1 + $0x48] sm:$0xf]
    %v51 = vld [vmem:[%s1 + $0x4c] sm:$0xf]
    %v52 = vld [vmem:[%s1 + $0x50] sm:$0xf]
    %v53 = vld [vmem:[%s1 + $0x54] sm:$0xf]
    %v54 = vld [vmem:[%s1 + $0x58] sm:$0xf]
    %v55 = vld [vmem:[%s1 + $0x5c] sm:$0xf]
    %v56 = vld [vmem:[%s1 + $0x60] sm:$0xf]
    %v57 = vld [vmem:[%s1 + $0x64] sm:$0xf]
    %v58 = vld [vmem:[%s1 + $0x68] sm:$0xf]
    %v59 = vld [vmem:[%s1 + $0x6c] sm:$0xf]
    %v60 = vld [vmem:[%s1 + $0x70] sm:$0xf]
    %v61 = vld [vmem:[%s1 + $0x74] sm:$0xf]
    %v62 = vld [vmem:[%s1 + $0x78] sm:$0xf]
    %v63 = vld [vmem:[%s1 + $0x7c] sm:$0xf]
    %v68 = vunpack.c.l.b16 %v28
    %v69 = vunpack.c.h.b16 %v28
    %v70 = vunpack.c.l.b16 %v29
    %v71 = vunpack.c.h.b16 %v29
    %v72 = vunpack.c.l.b16 %v30
    %v73 = vunpack.c.h.b16 %v30
    %v74 = vunpack.c.l.b16 %v31
    %v75 = vunpack.c.h.b16 %v31
    %v76 = vpack.c.b16 %v70, %v68
    %v77 = vpack.c.b16 %v71, %v69
    %v78 = vpack.c.b16 %v74, %v72
    %v79 = vpack.c.b16 %v75, %v73
    %v116 = vunpack.c.l.b16 %v32
    %v117 = vunpack.c.l.b16 %v33
    %v118 = vunpack.c.l.b16 %v34
    %v119 = vunpack.c.l.b16 %v35
    %v120 = vunpack.c.l.b16 %v36
    %v121 = vunpack.c.l.b16 %v37
    %v122 = vunpack.c.l.b16 %v38
    %v123 = vunpack.c.l.b16 %v39
    %v124 = vunpack.c.l.b16 %v40
    %v125 = vunpack.c.l.b16 %v41
    %v126 = vunpack.c.l.b16 %v42
    %v127 = vunpack.c.l.b16 %v43
    %v128 = vunpack.c.l.b16 %v44
    %v129 = vunpack.c.l.b16 %v45
    %v130 = vunpack.c.l.b16 %v46
    %v131 = vunpack.c.l.b16 %v47
    %v132 = vunpack.c.l.b16 %v48
    %v133 = vunpack.c.l.b16 %v49
    %v134 = vunpack.c.l.b16 %v50
    %v135 = vunpack.c.l.b16 %v51
    %v136 = vunpack.c.l.b16 %v52
    %v137 = vunpack.c.l.b16 %v53
    %v138 = vunpack.c.l.b16 %v54
    %v139 = vunpack.c.l.b16 %v55
    %v140 = vunpack.c.l.b16 %v56
    %v141 = vunpack.c.l.b16 %v57
    %v142 = vunpack.c.l.b16 %v58
    %v143 = vunpack.c.l.b16 %v59
    %v144 = vunpack.c.l.b16 %v60
    %v145 = vunpack.c.l.b16 %v61
    %v146 = vunpack.c.l.b16 %v62
    %v147 = vunpack.c.l.b16 %v63
    %v148 = vpack.c.b16 %v117, %v116
    %v149 = vpack.c.b16 %v119, %v118
    %v150 = vpack.c.b16 %v121, %v120
    %v151 = vpack.c.b16 %v123, %v122
    %v152 = vpack.c.b16 %v125, %v124
    %v153 = vpack.c.b16 %v127, %v126
    %v154 = vpack.c.b16 %v129, %v128
    %v155 = vpack.c.b16 %v131, %v130
    %v156 = vpack.c.b16 %v133, %v132
    %v157 = vpack.c.b16 %v135, %v134
    %v158 = vpack.c.b16 %v137, %v136
    %v159 = vpack.c.b16 %v139, %v138
    %v160 = vpack.c.b16 %v141, %v140
    %v161 = vpack.c.b16 %v143, %v142
    %v162 = vpack.c.b16 %v145, %v144
    %v163 = vpack.c.b16 %v147, %v146
    %180 = vmatprep.subr.bf16.mxu0 0
    %181 = vmatpush1.bf16.msra.mxu0 %v148
    %182 = vmatprep.subr.bf16.mxu0 0
    %183 = vmatpush1.bf16.msra.mxu0 %v149
    %184 = vmatprep.subr.bf16.mxu0 0
    %185 = vmatpush1.bf16.msra.mxu0 %v150
    %186 = vmatprep.subr.bf16.mxu0 0
    %187 = vmatpush1.bf16.msra.mxu0 %v151
    %188 = vmatprep.subr.bf16.mxu0 0
    %189 = vmatpush1.bf16.msra.mxu0 %v152
    %190 = vmatprep.subr.bf16.mxu0 0
    %191 = vmatpush1.bf16.msra.mxu0 %v153
    %192 = vmatprep.subr.bf16.mxu0 0
    %193 = vmatpush1.bf16.msra.mxu0 %v154
    %194 = vmatprep.subr.bf16.mxu0 0
    %195 = vmatpush1.bf16.msra.mxu0 %v155
    %196 = vmatprep.subr.bf16.mxu0 0
    %197 = vmatpush1.bf16.msra.mxu0 %v156
    %198 = vmatprep.subr.bf16.mxu0 0
    %199 = vmatpush1.bf16.msra.mxu0 %v157
    %200 = vmatprep.subr.bf16.mxu0 0
    %201 = vmatpush1.bf16.msra.mxu0 %v158
    %202 = vmatprep.subr.bf16.mxu0 0
    %203 = vmatpush1.bf16.msra.mxu0 %v159
    %204 = vmatprep.subr.bf16.mxu0 0
    %205 = vmatpush1.bf16.msra.mxu0 %v160
    %206 = vmatprep.subr.bf16.mxu0 0
    %207 = vmatpush1.bf16.msra.mxu0 %v161
    %208 = vmatprep.subr.bf16.mxu0 0
    %209 = vmatpush1.bf16.msra.mxu0 %v162
    %210 = vmatprep.subr.bf16.mxu0 0
    %211 = vmatpush1.bf16.msra.mxu0 %v163
    %212 = vmatprep.mubr.bf16.mxu0 %v77
    %213 = vmatmul.mubr.bf16.gmra.mrb[0].mxu0 %v76
    %v214 = vpop.f32.mrb[0].mxu0
    %v215 = vadd.f32 0.0, %v214
    %v216 = vpop.f32.mrb[0].mxu0
    %v217 = vpop.f32.mrb[0].mxu0
    %v218 = vadd.f32 0.0, %v217
    %v219 = vpop.f32.mrb[0].mxu0
    %220 = vmatprep.mubr.bf16.mxu0 %v79
    %221 = vmatmul.mubr.bf16.gmra.mrb[0].mxu0 %v78
    %v222 = vpop.f32.mrb[0].mxu0
    %v223 = vadd.f32 0.0, %v222
    %v224 = vpop.f32.mrb[0].mxu0
    %v225 = vpop.f32.mrb[0].mxu0
    %v226 = vadd.f32 0.0, %v225
    %v227 = vpop.f32.mrb[0].mxu0
    %228 = vdwg.mxu0
    %v229 = vadd.f32 %v215, %v218
    %v230 = vadd.f32 %v229, %v223
    %v231 = vadd.f32 %v230, %v226
    %v232 = vrot.slane %v231, 4
    %v233 = vadd.f32 %v231, %v232
    %v234 = vrot.slane %v233, 2
    %v235 = vadd.f32 %v233, %v234
    %v236 = vrot.slane %v235, 1
    %v237 = vadd.f32 %v235, %v236
    %v238 = vmul.f32 %v237, 0.03125
    %v239 = vsub.f32 %v215, %v238
    %v240 = vsub.f32 %v218, %v238
    %v241 = vsub.f32 %v223, %v238
    %v242 = vsub.f32 %v226, %v238
    %v243 = vmul.f32 %v239, %v239
    %v244 = vmul.f32 %v240, %v240
    %v245 = vmul.f32 %v241, %v241
    %v246 = vmul.f32 %v242, %v242
    %v247 = vadd.f32 %v243, %v244
    %v248 = vadd.f32 %v247, %v245
    %v249 = vadd.f32 %v248, %v246
    %v250 = vrot.slane %v249, 4
    %v251 = vadd.f32 %v249, %v250
    %v252 = vrot.slane %v251, 2
    %v253 = vadd.f32 %v251, %v252
    %v254 = vrot.slane %v253, 1
    %v255 = vadd.f32 %v253, %v254
    %v256 = vmul.f32 %v255, 0.03125
    %v257 = vld [vmem:[%s2] sm:$0x1]
    %v258 = vadd.f32 %v256, 1e-05
    %v259 = vrsqrt.pop %v258
    %v260 = vmul.f32 %v257, %v259
    %v262 = vlaneseq
    %v263 = vshrl.u32 %v262, 7
    %v264 = vsub.s32 0, %v263
    %v265 = vrot.slane %v260, %v264
    %v267 = vmul.f32 %v239, %v265
    %v268 = vmul.f32 %v240, %v265
    %v269 = vmul.f32 %v241, %v265
    %v270 = vmul.f32 %v242, %v265
    %v271 = vld [vmem:[%s3] sm:$0x1]
    %v273 = vlaneseq
    %v274 = vshrl.u32 %v273, 7
    %v275 = vsub.s32 0, %v274
    %v276 = vrot.slane %v271, %v275
    %v278 = vadd.f32 %v267, %v276
    %v279 = vadd.f32 %v268, %v276
    %v280 = vadd.f32 %v269, %v276
    %v281 = vadd.f32 %v270, %v276
    %v282 = vmax.f32 %v278, 0.0
    %v283 = vmax.f32 %v279, 0.0
    %v284 = vmax.f32 %v280, 0.0
    %v285 = vmax.f32 %v281, 0.0
    %v286 = vadd.f32 %v282, %v283
    %v287 = vrot.slane %v286, 4
    %v288 = vadd.f32 %v286, %v287
    %v289 = vrot.slane %v288, 2
    %v290 = vadd.f32 %v288, %v289
    %v291 = vrot.slane %v290, 1
    %v292 = vadd.f32 %v290, %v291
    %v293 = vadd.f32 %v284, %v285
    %v294 = vrot.slane %v293, 4
    %v295 = vadd.f32 %v293, %v294
    %v296 = vrot.slane %v295, 2
    %v297 = vadd.f32 %v295, %v296
    %v298 = vrot.slane %v297, 1
    %v299 = vadd.f32 %v297, %v298
    %v300 = vmul.f32 %v292, 0.0625
    %v301 = vmul.f32 %v299, 0.0625
    %vm304 = vcmask 1041409
    %v305 = vsel %vm304, %v301, %v300
    %307 = vst [vmem:[#allocation2] sm:$0x3] %v305
    %v308 = vld [vmem:[%s4] sm:$0xff]
    %v309 = vld [vmem:[%s4 + $0x8] sm:$0xff]
    %v310 = vld [vmem:[%s4 + $0x10] sm:$0xff]
    %v311 = vld [vmem:[%s4 + $0x18] sm:$0xff]
    %v312 = vld [vmem:[%s4 + $0x20] sm:$0xff]
    %v313 = vld [vmem:[%s4 + $0x28] sm:$0xff]
    %v314 = vld [vmem:[%s4 + $0x30] sm:$0xff]
    %v315 = vld [vmem:[%s4 + $0x38] sm:$0xff]
    %v316 = vld [vmem:[%s4 + $0x40] sm:$0xff]
    %v317 = vld [vmem:[%s4 + $0x48] sm:$0xff]
    %v318 = vld [vmem:[%s4 + $0x50] sm:$0xff]
    %v319 = vld [vmem:[%s4 + $0x58] sm:$0xff]
    %v320 = vld [vmem:[%s4 + $0x60] sm:$0xff]
    %v321 = vld [vmem:[%s4 + $0x68] sm:$0xff]
    %v322 = vld [vmem:[%s4 + $0x70] sm:$0xff]
    %v323 = vld [vmem:[%s4 + $0x78] sm:$0xff]
    %v324 = vld [vmem:[%s5] sm:$0x1]
    %v326 = vlaneseq
    %v327 = vshrl.u32 %v326, 7
    %v328 = vsub.s32 0, %v327
    %v329 = vrot.slane %v324, %v328
    %331 = vmatprep.subr.mxu0 0.0
    %332 = vmatpush1.msra.mxu0 %v308
    %333 = vmatprep.subr.mxu0 0.0
    %334 = vmatpush1.msra.mxu0 %v309
    %335 = vmatprep.subr.mxu0 0.0
    %336 = vmatpush1.msra.mxu0 %v310
    %337 = vmatprep.subr.mxu0 0.0
    %338 = vmatpush1.msra.mxu0 %v311
    %339 = vmatprep.subr.mxu0 0.0
    %340 = vmatpush1.msra.mxu0 %v312
    %341 = vmatprep.subr.mxu0 0.0
    %342 = vmatpush1.msra.mxu0 %v313
    %343 = vmatprep.subr.mxu0 0.0
    %344 = vmatpush1.msra.mxu0 %v314
    %345 = vmatprep.subr.mxu0 0.0
    %346 = vmatpush1.msra.mxu0 %v315
    %347 = vmatprep.subr.mxu0 0.0
    %348 = vmatpush1.msra.mxu0 %v316
    %349 = vmatprep.subr.mxu0 0.0
    %350 = vmatpush1.msra.mxu0 %v317
    %351 = vmatprep.subr.mxu0 0.0
    %352 = vmatpush1.msra.mxu0 %v318
    %353 = vmatprep.subr.mxu0 0.0
    %354 = vmatpush1.msra.mxu0 %v319
    %355 = vmatprep.subr.mxu0 0.0
    %356 = vmatpush1.msra.mxu0 %v320
    %357 = vmatprep.subr.mxu0 0.0
    %358 = vmatpush1.msra.mxu0 %v321
    %359 = vmatprep.subr.mxu0 0.0
    %360 = vmatpush1.msra.mxu0 %v322
    %361 = vmatprep.subr.mxu0 0.0
    %362 = vmatpush1.msra.mxu0 %v323
    %363 = vmatprep.subr.mxu0 0.0
    %364 = vmatpush1.msra.mxu0 0.0
    %365 = vmatprep.subr.mxu0 0.0
    %366 = vmatpush1.msra.mxu0 0.0
    %367 = vmatprep.subr.mxu0 0.0
    %368 = vmatpush1.msra.mxu0 0.0
    %369 = vmatprep.subr.mxu0 0.0
    %370 = vmatpush1.msra.mxu0 0.0
    %371 = vmatprep.subr.mxu0 0.0
    %372 = vmatpush1.msra.mxu0 0.0
    %373 = vmatprep.subr.mxu0 0.0
    %374 = vmatpush1.msra.mxu0 0.0
    %375 = vmatprep.subr.mxu0 0.0
    %376 = vmatpush1.msra.mxu0 0.0
    %377 = vmatprep.subr.mxu0 0.0
    %378 = vmatpush1.msra.mxu0 0.0
    %379 = vmatprep.subr.mxu0 0.0
    %380 = vmatpush1.msra.mxu0 0.0
    %381 = vmatprep.subr.mxu0 0.0
    %382 = vmatpush1.msra.mxu0 0.0
    %383 = vmatprep.subr.mxu0 0.0
    %384 = vmatpush1.msra.mxu0 0.0
    %385 = vmatprep.subr.mxu0 0.0
    %386 = vmatpush1.msra.mxu0 0.0
    %387 = vmatprep.subr.mxu0 0.0
    %388 = vmatpush1.msra.mxu0 0.0
    %389 = vmatprep.subr.mxu0 0.0
    %390 = vmatpush1.msra.mxu0 0.0
    %391 = vmatprep.subr.mxu0 0.0
    %392 = vmatpush1.msra.mxu0 0.0
    %393 = vmatprep.subr.mxu0 0.0
    %394 = vmatpush1.msra.mxu0 0.0
    %395 = vmatprep.mubr.f32.mxu0 0.0
    %396 = vmatmul.mubr.f32.gmra.mrb[0].mxu0 %v305
    %v397 = vpop.f32.mrb[0].mxu0
    %v398 = vadd.f32 %v329, %v397
    %v399 = vpop.f32.mrb[0].mxu0
    %400 = vdwg.mxu0
    %401 = vst [vmem:[#allocation4] sm:$0x3] %v398
    // Predicated region
    $region26: #{gp_lenet_forward.5} parent=1 // pred_check
      _
    $region27: #{gp_lenet_forward.5} parent=1 // pred_check_branch
      %403 = sbr.rel (0) target = $region29
    $region28: #{gp_lenet_forward.5} parent=1 // pred_region
      %s405 = ssub.s32 32, 32
      %406 = vsyncadd [#allocation3], %s405
      %s408 = sshll.u32 [#allocation2], 4
      %s409 = int_to_ptr.vmem [resolvable:$true] %s408
      %411 = dma.vmem_to_hbm [thread:$0]  %s409, 32, %s6, [#allocation3]
    $region29: #{gp_lenet_forward.5} parent=1 // pred_fallthru
      _
    // Predicated region
    $region30: #{gp_lenet_forward.5} parent=1 // pred_check
      _
    $region31: #{gp_lenet_forward.5} parent=1 // pred_check_branch
      %413 = sbr.rel (0) target = $region33
    $region32: #{gp_lenet_forward.5} parent=1 // pred_region
      %s415 = ssub.s32 32, 32
      %416 = vsyncadd [#allocation5], %s415
      %s418 = sshll.u32 [#allocation4], 4
      %s419 = int_to_ptr.vmem [resolvable:$true] %s418
      %421 = dma.vmem_to_hbm [thread:$0]  %s419, 32, %s7, [#allocation5]
    $region33: #{gp_lenet_forward.5} parent=1 // pred_fallthru
      _
    // Predicated region
    $region34: #{gp_lenet_forward.5} parent=1 // pred_check
      _
    $region35: #{gp_lenet_forward.5} parent=1 // pred_check_branch
      %423 = sbr.rel (0) target = $region37
    $region36: #{gp_lenet_forward.5} parent=1 // pred_region
      %424 = dma.done [#allocation3], 32
    $region37: #{gp_lenet_forward.5} parent=1 // pred_fallthru
      _
    // Predicated region
    $region38: #{gp_lenet_forward.5} parent=1 // pred_check
      _
    $region39: #{gp_lenet_forward.5} parent=1 // pred_check_branch
      %426 = sbr.rel (0) target = $region41
    $region40: #{gp_lenet_forward.5} parent=1 // pred_region
      %427 = dma.done [#allocation5], 32
    $region41: #{gp_lenet_forward.5} parent=1 // pred_fallthru
      _
    %428 = vsyncpa [#allocation3], 1
    %429 = vsyncpa [#allocation5], 1

</llo_original>
